<compile_context>
chip_gen: v7x
topology: tpu7x:2x2x1
jax: 0.10.0
libtpu: 0.0.40
codegen_flags: <defaults>
</compile_context>

<pallas_src>
import functools
import math

import jax
import jax.numpy as jnp
from jax.experimental import pallas as pl
from jax.experimental.pallas import tpu as pltpu


MATMUL_DTYPE = jnp.bfloat16   # native MXU rate; accumulation stays f32
LN_EPS = 1e-5                 # torch.nn.LayerNorm default (matches the PyTorch module)


def _mm(a, b):
    return jnp.dot(a.astype(MATMUL_DTYPE), b.astype(MATMUL_DTYPE),
                   preferred_element_type=jnp.float32)


def _layernorm(x, gamma, beta, eps=LN_EPS):
    mu = jnp.mean(x, axis=-1, keepdims=True)
    var = jnp.mean((x - mu) ** 2, axis=-1, keepdims=True)
    return (x - mu) * jax.lax.rsqrt(var + eps) * gamma + beta


def _gelu_exact(x):
    # nn.GELU() default = exact erf formulation (kept exact to match module semantics)
    return 0.5 * x * (1.0 + jax.lax.erf(x * (1.0 / math.sqrt(2.0))))


# ----------------------------- fused kernel -------------------------------- #

def encoder_kernel(x_ref, pos_ref,
                   g1_ref, b1_ref, wqkv_ref, bqkv_ref, wo_ref, bo_ref,
                   g2_ref, b2_ref, w1_ref, bb1_ref, w2_ref, bb2_ref,
                   gf_ref, bf_ref,
                   o_ref, act_ref,
                   *, heads, head_dim, inv_scale):
    """Grid = (batch_tile, layer).  Weights for layer `l` are streamed in; the
    (Bt*N, D) activation lives in VMEM scratch across the layer axis."""
    l = pl.program_id(1)
    Bt, N, D = x_ref.shape

    # ---- layer 0: fuse position-embedding add, initialise resident activation ----
    @pl.when(l == 0)
    def _():
        act_ref[...] = (x_ref[...] + pos_ref[...]).reshape(Bt * N, D)

    x = act_ref[...]                                          # (Bt*N, D) f32

    # ---- LayerNorm 1 + fused-QKV multi-head self-attention ----
    h = _layernorm(x, g1_ref[0], b1_ref[0])                   # (Bt*N, D)
    qkv = _mm(h, wqkv_ref[0]) + bqkv_ref[0]                   # (Bt*N, 3*D), one MXU pass

    heads_out = []
    for hh in range(heads):
        lo = hh * head_dim
        # TODO(synk): for large head_dim/H configs, keep a padded per-head QKV layout so
        # these lane slices start on 128-lane boundaries (avoids relayout copies).
        qh = qkv[:, lo:lo + head_dim].reshape(Bt, N, head_dim)
        kh = qkv[:, D + lo:D + lo + head_dim].reshape(Bt, N, head_dim)
        vh = qkv[:, 2 * D + lo:2 * D + lo + head_dim].reshape(Bt, N, head_dim)
        s = jnp.einsum("bqd,bkd->bqk", qh.astype(MATMUL_DTYPE), kh.astype(MATMUL_DTYPE),
                       preferred_element_type=jnp.float32) * inv_scale
        s = s - jnp.max(s, axis=-1, keepdims=True)
        p = jnp.exp(s)
        p = p * pl.reciprocal(jnp.sum(p, axis=-1, keepdims=True), approx=True)
        oh = jnp.einsum("bqk,bkd->bqd", p.astype(MATMUL_DTYPE), vh.astype(MATMUL_DTYPE),
                        preferred_element_type=jnp.float32)   # (Bt, N, hd)
        heads_out.append(oh.reshape(Bt * N, head_dim))

    # concat(heads) then ONE full-depth (K = D) out-projection matmul
    attn_cat = jnp.concatenate(heads_out, axis=-1)            # (Bt*N, D)
    x = x + _mm(attn_cat, wo_ref[0]) + bo_ref[0]              # residual 1

    # ---- LayerNorm 2 + MLP (fc1 -> GELU -> fc2) ----
    h2 = _layernorm(x, g2_ref[0], b2_ref[0])
    m = _mm(h2, w1_ref[0]) + bb1_ref[0]
    m = _gelu_exact(m)
    m = _mm(m, w2_ref[0]) + bb2_ref[0]
    x = x + m                                                 # residual 2

    act_ref[...] = x

    # ---- final LayerNorm, write output once per batch tile ----
    @pl.when(l == pl.num_programs(1) - 1)
    def _():
        o_ref[...] = _layernorm(x, gf_ref[...], bf_ref[...]).reshape(Bt, N, D).astype(o_ref.dtype)


# ----------------------------- wrapper -------------------------------------- #

_PARAM_ORDER = ("pos", "g1", "b1", "wqkv", "bqkv", "wo", "bo",
                "g2", "b2", "w1", "bb1", "w2", "bb2", "gf", "bf")
_LAYER_PARAMS = {"g1", "b1", "wqkv", "bqkv", "wo", "bo",
                 "g2", "b2", "w1", "bb1", "w2", "bb2"}


def _layer_spec(a):
    # Stacked (L, ...) weights: stream one layer slice per grid step (double-buffered).
    n = a.ndim
    block = (1,) + a.shape[1:]
    return pl.BlockSpec(block, lambda bt, l: (l,) + (0,) * (n - 1))


def _const_spec(a):
    # Constant-index blocks (pos embed, final LN): fetched once, stays resident.
    n = a.ndim
    return pl.BlockSpec(a.shape, lambda bt, l: (0,) * n)


def encoder_forward(x, params, *, num_heads, batch_tile=None):
    B, N, D = x.shape
    L = params["wqkv"].shape[0]
    head_dim = D // num_heads
    inv_scale = 1.0 / (float(head_dim) ** 0.5)

    Bt = batch_tile or min(B, 2)
    assert B % Bt == 0, "batch must be divisible by the batch tile"
    # TODO(synk): pad N to a multiple of 8 and D to a multiple of 128 for arbitrary
    # ViT configs (e.g. 197 tokens); the demo config is already (8,128)-dense.

    in_specs = [pl.BlockSpec((Bt, N, D), lambda bt, l: (bt, 0, 0))]
    for k in _PARAM_ORDER:
        a = params[k]
        in_specs.append(_layer_spec(a) if k in _LAYER_PARAMS else _const_spec(a))

    # Explicit VMEM budget: double-buffered per-step blocks + resident activation scratch.
    def _nbytes(shape, dtype):
        n = 1
        for s in shape:
            n *= s
        return n * jnp.dtype(dtype).itemsize

    step_bytes = 2 * _nbytes((Bt, N, D), x.dtype)            # x block + out block
    for k in _PARAM_ORDER:
        a = params[k]
        blk = ((1,) + a.shape[1:]) if k in _LAYER_PARAMS else a.shape
        step_bytes += _nbytes(blk, a.dtype)
    scratch_bytes = _nbytes((Bt * N, D), jnp.float32)
    vmem_limit = int(min(max(4 * step_bytes + scratch_bytes, 32 * 2 ** 20), 100 * 2 ** 20))

    kernel = functools.partial(encoder_kernel, heads=num_heads,
                               head_dim=head_dim, inv_scale=inv_scale)
    return pl.pallas_call(
        kernel,
        out_shape=jax.ShapeDtypeStruct((B, N, D), x.dtype),
        grid=(B // Bt, L),
        in_specs=in_specs,
        out_specs=pl.BlockSpec((Bt, N, D), lambda bt, l: (bt, 0, 0)),
        scratch_shapes=[pltpu.VMEM((Bt * N, D), jnp.float32)],
        compiler_params=pltpu.CompilerParams(
            dimension_semantics=("parallel", "arbitrary"),    # batch tiles parallel, layers sequential
            vmem_limit_bytes=vmem_limit),
    )(x, *[params[k] for k in _PARAM_ORDER])


# ----------------------------- parameter init ------------------------------- #

def init_params(key, *, num_patches, emb_dim, mlp_dim, num_layers, num_heads):
    D, M, L, H = emb_dim, mlp_dim, num_layers, num_heads
    assert D % H == 0
    keys = iter(jax.random.split(key, 16 * L + 4))

    def nrm(k, shape, std=0.02):
        return (std * jax.random.normal(k, shape)).astype(jnp.float32)

    pos = nrm(next(keys), (1, num_patches + 1, D))

    g1, b1, wqkv, bqkv, wo, bo = [], [], [], [], [], []
    g2, b2, w1, bb1, w2, bb2 = [], [], [], [], [], []
    for _ in range(L):
        g1.append(1.0 + nrm(next(keys), (1, D)))
        b1.append(nrm(next(keys), (1, D)))
        # LinearGeneral q/k/v weights (D, H, hd) -> (D, D); fused along the output axis
        wq = nrm(next(keys), (D, D)); wk = nrm(next(keys), (D, D)); wv = nrm(next(keys), (D, D))
        wqkv.append(jnp.concatenate([wq, wk, wv], axis=-1).astype(jnp.bfloat16))  # (D, 3D) bf16
        bqkv.append(nrm(next(keys), (1, 3 * D)))
        # LinearGeneral out: (H, hd, D) -> (D, D)
        wo.append(nrm(next(keys), (D, D)).astype(jnp.bfloat16))
        bo.append(nrm(next(keys), (1, D)))
        g2.append(1.0 + nrm(next(keys), (1, D)))
        b2.append(nrm(next(keys), (1, D)))
        # MlpBlock fc1 / fc2, stored transposed vs nn.Linear so x @ w works
        w1.append(nrm(next(keys), (D, M)).astype(jnp.bfloat16))
        bb1.append(nrm(next(keys), (1, M)))
        w2.append(nrm(next(keys), (M, D)).astype(jnp.bfloat16))
        bb2.append(nrm(next(keys), (1, D)))

    stack = lambda xs: jnp.stack(xs, axis=0)
    return dict(
        pos=pos,
        g1=stack(g1), b1=stack(b1), wqkv=stack(wqkv), bqkv=stack(bqkv),
        wo=stack(wo), bo=stack(bo), g2=stack(g2), b2=stack(b2),
        w1=stack(w1), bb1=stack(bb1), w2=stack(w2), bb2=stack(bb2),
        gf=1.0 + nrm(next(keys), (1, D)), bf=nrm(next(keys), (1, D)),
    )


# ----------------------------- pure-JAX reference --------------------------- #

def encoder_reference(x, params, *, num_heads):
    """Pure-JAX f32 reference matching the PyTorch module (eval mode)."""
    B, N, D = x.shape
    hd = D // num_heads
    scale = float(hd) ** 0.5
    L = params["wqkv"].shape[0]
    f32 = lambda a: a.astype(jnp.float32)

    def ln(z, g, b, eps=LN_EPS):
        mu = jnp.mean(z, axis=-1, keepdims=True)
        var = jnp.mean((z - mu) ** 2, axis=-1, keepdims=True)
        return (z - mu) / jnp.sqrt(var + eps) * g + b

    out = x + params["pos"]
    for l in range(L):
        h = ln(out, params["g1"][l], params["b1"][l])
        qkv = h @ f32(params["wqkv"][l]) + params["bqkv"][l]
        q, k, v = qkv[..., :D], qkv[..., D:2 * D], qkv[..., 2 * D:]
        q = q.reshape(B, N, num_heads, hd).transpose(0, 2, 1, 3)
        k = k.reshape(B, N, num_heads, hd).transpose(0, 2, 1, 3)
        v = v.reshape(B, N, num_heads, hd).transpose(0, 2, 1, 3)
        s = jnp.einsum("bhqd,bhkd->bhqk", q, k) / scale
        p = jax.nn.softmax(s, axis=-1)
        o = jnp.einsum("bhqk,bhkd->bhqd", p, v)
        o = o.transpose(0, 2, 1, 3).reshape(B, N, D)
        out = out + o @ f32(params["wo"][l]) + params["bo"][l]
        h2 = ln(out, params["g2"][l], params["b2"][l])
        m = h2 @ f32(params["w1"][l]) + params["bb1"][l]
        m = 0.5 * m * (1.0 + jax.lax.erf(m / math.sqrt(2.0)))
        m = m @ f32(params["w2"][l]) + params["bb2"][l]
        out = out + m
    return ln(out, params["gf"], params["bf"])


# ----------------------------- main ------------------------------------------ #

if __name__ == "__main__":
    # small, lane/sublane-dense config: 16 tokens (num_patches=15), D=128, MLP=256
    B, NUM_PATCHES, EMB, MLP, LAYERS, HEADS = 4, 15, 128, 256, 2, 4
    N = NUM_PATCHES + 1

    key = jax.random.PRNGKey(0)
    kx, kp = jax.random.split(key)
    x = jax.random.normal(kx, (B, N, EMB), dtype=jnp.float32)
    params = init_params(kp, num_patches=NUM_PATCHES, emb_dim=EMB, mlp_dim=MLP,
                         num_layers=LAYERS, num_heads=HEADS)

    out = encoder_forward(x, params, num_heads=HEADS, batch_tile=2)
    out = jax.block_until_ready(out)

    assert out.shape == (B, N, EMB), out.shape
    assert bool(jnp.all(jnp.isfinite(out)))

    with jax.default_matmul_precision("highest"):
        ref = encoder_reference(x, params, num_heads=HEADS)
    err = float(jnp.max(jnp.abs(out - ref)))
    # bf16 matmul operands (f32 accumulation) + approx softmax reciprocal -> ~1e-2 drift
    assert err < 3e-2, f"max abs error vs reference = {err}"
    print("KERNEL_OK")
</pallas_src>

<mosaic_0001>
module attributes {stable_mosaic.version = 11 : i64} {
  func.func @encoder_kernel(%arg0: i32, %arg1: i32, %arg2: memref<2x16x128xf32, #tpu.memory_space<vmem>>, %arg3: memref<1x16x128xf32, #tpu.memory_space<vmem>>, %arg4: memref<1x1x128xf32, #tpu.memory_space<vmem>>, %arg5: memref<1x1x128xf32, #tpu.memory_space<vmem>>, %arg6: memref<1x128x384xbf16, #tpu.memory_space<vmem>>, %arg7: memref<1x1x384xf32, #tpu.memory_space<vmem>>, %arg8: memref<1x128x128xbf16, #tpu.memory_space<vmem>>, %arg9: memref<1x1x128xf32, #tpu.memory_space<vmem>>, %arg10: memref<1x1x128xf32, #tpu.memory_space<vmem>>, %arg11: memref<1x1x128xf32, #tpu.memory_space<vmem>>, %arg12: memref<1x128x256xbf16, #tpu.memory_space<vmem>>, %arg13: memref<1x1x256xf32, #tpu.memory_space<vmem>>, %arg14: memref<1x256x128xbf16, #tpu.memory_space<vmem>>, %arg15: memref<1x1x128xf32, #tpu.memory_space<vmem>>, %arg16: memref<1x128xf32, #tpu.memory_space<vmem>>, %arg17: memref<1x128xf32, #tpu.memory_space<vmem>>, %arg18: memref<2x16x128xf32, #tpu.memory_space<vmem>>, %arg19: memref<32x128xf32, #tpu.memory_space<vmem>>) attributes {dimension_semantics = [#tpu.dimension_semantics<parallel>, #tpu.dimension_semantics<arbitrary>], iteration_bounds = array<i64: 2, 2>, scalar_prefetch = 0 : i64, scratch_operands = 1 : i64, tpu.core_type = #tpu.core_type<tc>, window_params = [{transform_indices = @transform_0, window_bounds = array<i64: 2, 16, 128>}, {pipeline_mode = #tpu.pipeline_mode<synchronous>, transform_indices = @transform_1, window_bounds = array<i64: 1, 16, 128>}, {transform_indices = @transform_2, window_bounds = array<i64: 1, 1, 128>}, {transform_indices = @transform_3, window_bounds = array<i64: 1, 1, 128>}, {transform_indices = @transform_4, window_bounds = array<i64: 1, 128, 384>}, {transform_indices = @transform_5, window_bounds = array<i64: 1, 1, 384>}, {transform_indices = @transform_6, window_bounds = array<i64: 1, 128, 128>}, {transform_indices = @transform_7, window_bounds = array<i64: 1, 1, 128>}, {transform_indices = @transform_8, window_bounds = array<i64: 1, 1, 128>}, {transform_indices = @transform_9, window_bounds = array<i64: 1, 1, 128>}, {transform_indices = @transform_10, window_bounds = array<i64: 1, 128, 256>}, {transform_indices = @transform_11, window_bounds = array<i64: 1, 1, 256>}, {transform_indices = @transform_12, window_bounds = array<i64: 1, 256, 128>}, {transform_indices = @transform_13, window_bounds = array<i64: 1, 1, 128>}, {pipeline_mode = #tpu.pipeline_mode<synchronous>, transform_indices = @transform_14, window_bounds = array<i64: 1, 128>}, {pipeline_mode = #tpu.pipeline_mode<synchronous>, transform_indices = @transform_15, window_bounds = array<i64: 1, 128>}, {transform_indices = @transform_16, window_bounds = array<i64: 2, 16, 128>}]} {
    %c0_i32 = arith.constant 0 : i32
    %0 = arith.cmpi eq, %arg1, %c0_i32 : i32
    %1 = arith.extui %0 : i1 to i32
    %c0_i32_0 = arith.constant 0 : i32
    %2 = arith.cmpi ne, %1, %c0_i32_0 : i32
    scf.if %2 {
      %c0_77 = arith.constant 0 : index
      %c0_78 = arith.constant 0 : index
      %c0_79 = arith.constant 0 : index
      %203 = vector.load %arg2[%c0_77, %c0_78, %c0_79] : memref<2x16x128xf32, #tpu.memory_space<vmem>>, vector<2x16x128xf32>
      %c0_80 = arith.constant 0 : index
      %c0_81 = arith.constant 0 : index
      %c0_82 = arith.constant 0 : index
      %204 = vector.load %arg3[%c0_80, %c0_81, %c0_82] : memref<1x16x128xf32, #tpu.memory_space<vmem>>, vector<1x16x128xf32>
      %205 = vector.broadcast %204 : vector<1x16x128xf32> to vector<2x16x128xf32>
      %206 = arith.addf %203, %205 : vector<2x16x128xf32>
      %207 = vector.shape_cast %206 : vector<2x16x128xf32> to vector<32x128xf32>
      %c0_83 = arith.constant 0 : index
      %c0_84 = arith.constant 0 : index
      %208 = vector.load %arg19[%c0_83, %c0_84] : memref<32x128xf32, #tpu.memory_space<vmem>>, vector<32x128xf32>
      tpu.vector_store %arg19[%c0_83, %c0_84], %207 {strides = array<i32>} : memref<32x128xf32, #tpu.memory_space<vmem>>, vector<32x128xf32>,
    } else {
    }
    %c0 = arith.constant 0 : index
    %c0_1 = arith.constant 0 : index
    %3 = vector.load %arg19[%c0, %c0_1] : memref<32x128xf32, #tpu.memory_space<vmem>>, vector<32x128xf32>
    %c0_2 = arith.constant 0 : index
    %c0_3 = arith.constant 0 : index
    %c0_4 = arith.constant 0 : index
    %4 = vector.load %arg4[%c0_2, %c0_3, %c0_4] : memref<1x1x128xf32, #tpu.memory_space<vmem>>, vector<1x1x128xf32>
    %5 = vector.shape_cast %4 : vector<1x1x128xf32> to vector<1x128xf32>
    %c0_5 = arith.constant 0 : index
    %c0_6 = arith.constant 0 : index
    %c0_7 = arith.constant 0 : index
    %6 = vector.load %arg5[%c0_5, %c0_6, %c0_7] : memref<1x1x128xf32, #tpu.memory_space<vmem>>, vector<1x1x128xf32>
    %7 = vector.shape_cast %6 : vector<1x1x128xf32> to vector<1x128xf32>
    %cst = arith.constant dense<0.000000e+00> : vector<32xf32>
    %8 = vector.multi_reduction <add>, %3, %cst [1] : vector<32x128xf32> to vector<32xf32>
    %9 = vector.shape_cast %8 : vector<32xf32> to vector<32x1xf32>
    %cst_8 = arith.constant 1.280000e+02 : f32
    %10 = vector.broadcast %cst_8 : f32 to vector<32x1xf32>
    %11 = arith.divf %9, %10 : vector<32x1xf32>
    %12 = vector.broadcast %11 : vector<32x1xf32> to vector<32x128xf32>
    %13 = arith.subf %3, %12 : vector<32x128xf32>
    %14 = arith.mulf %13, %13 : vector<32x128xf32>
    %cst_9 = arith.constant dense<0.000000e+00> : vector<32xf32>
    %15 = vector.multi_reduction <add>, %14, %cst_9 [1] : vector<32x128xf32> to vector<32xf32>
    %16 = vector.shape_cast %15 : vector<32xf32> to vector<32x1xf32>
    %cst_10 = arith.constant 1.280000e+02 : f32
    %17 = vector.broadcast %cst_10 : f32 to vector<32x1xf32>
    %18 = arith.divf %16, %17 : vector<32x1xf32>
    %19 = vector.broadcast %11 : vector<32x1xf32> to vector<32x128xf32>
    %20 = arith.subf %3, %19 : vector<32x128xf32>
    %cst_11 = arith.constant 9.99999974E-6 : f32
    %21 = vector.broadcast %cst_11 : f32 to vector<32x1xf32>
    %22 = arith.addf %18, %21 : vector<32x1xf32>
    %23 = math.rsqrt %22 : vector<32x1xf32>
    %24 = vector.broadcast %23 : vector<32x1xf32> to vector<32x128xf32>
    %25 = arith.mulf %20, %24 : vector<32x128xf32>
    %26 = vector.broadcast %5 : vector<1x128xf32> to vector<32x128xf32>
    %27 = arith.mulf %25, %26 : vector<32x128xf32>
    %28 = vector.broadcast %7 : vector<1x128xf32> to vector<32x128xf32>
    %29 = arith.addf %27, %28 : vector<32x128xf32>
    %c0_12 = arith.constant 0 : index
    %c0_13 = arith.constant 0 : index
    %c0_14 = arith.constant 0 : index
    %30 = vector.load %arg6[%c0_12, %c0_13, %c0_14] : memref<1x128x384xbf16, #tpu.memory_space<vmem>>, vector<1x128x384xbf16>
    %31 = vector.shape_cast %30 : vector<1x128x384xbf16> to vector<128x384xbf16>
    %32 = arith.truncf %29 : vector<32x128xf32> to vector<32x128xbf16>
    %cst_15 = arith.constant dense<0.000000e+00> : vector<32x384xf32>
    %33 = tpu.matmul %32, %31, %cst_15 {dimension_numbers = #tpu.dot_dimension_numbers<[1], [0], [0], [1], [0, 0, 1, 1], [], []>} : vector<32x128xbf16>, vector<128x384xbf16>, vector<32x384xf32> -> vector<32x384xf32>
    %c0_16 = arith.constant 0 : index
    %c0_17 = arith.constant 0 : index
    %c0_18 = arith.constant 0 : index
    %34 = vector.load %arg7[%c0_16, %c0_17, %c0_18] : memref<1x1x384xf32, #tpu.memory_space<vmem>>, vector<1x1x384xf32>
    %35 = vector.shape_cast %34 : vector<1x1x384xf32> to vector<1x384xf32>
    %36 = vector.broadcast %35 : vector<1x384xf32> to vector<32x384xf32>
    %37 = arith.addf %33, %36 : vector<32x384xf32>
    %38 = vector.extract_strided_slice %37 {offsets = [0, 0], sizes = [32, 32], strides = [1, 1]} : vector<32x384xf32> to vector<32x32xf32>
    %39 = vector.shape_cast %38 : vector<32x32xf32> to vector<2x16x32xf32>
    %40 = vector.extract_strided_slice %37 {offsets = [0, 128], sizes = [32, 32], strides = [1, 1]} : vector<32x384xf32> to vector<32x32xf32>
    %41 = vector.shape_cast %40 : vector<32x32xf32> to vector<2x16x32xf32>
    %42 = vector.extract_strided_slice %37 {offsets = [0, 256], sizes = [32, 32], strides = [1, 1]} : vector<32x384xf32> to vector<32x32xf32>
    %43 = vector.shape_cast %42 : vector<32x32xf32> to vector<2x16x32xf32>
    %44 = arith.truncf %39 : vector<2x16x32xf32> to vector<2x16x32xbf16>
    %45 = arith.truncf %41 : vector<2x16x32xf32> to vector<2x16x32xbf16>
    "tpu.trace_start"() <{level = 10 : i32, message = "bqd,bkd->bqk"}> : () -> ()
    %cst_19 = arith.constant dense<0.000000e+00> : vector<2x16x16xf32>
    %46 = tpu.matmul %44, %45, %cst_19 {dimension_numbers = #tpu.dot_dimension_numbers<[2], [2], [1], [1], [0, 0, 0, 1, 1, 1], [0], [0]>} : vector<2x16x32xbf16>, vector<2x16x32xbf16>, vector<2x16x16xf32> -> vector<2x16x16xf32>
    "tpu.trace_stop"() : () -> ()
    %cst_20 = arith.constant 0.176776692 : f32
    %47 = vector.broadcast %cst_20 : f32 to vector<2x16x16xf32>
    %48 = arith.mulf %46, %47 : vector<2x16x16xf32>
    %cst_21 = arith.constant dense<0xFF800000> : vector<2x16xf32>
    %49 = vector.multi_reduction <maximumf>, %48, %cst_21 [2] : vector<2x16x16xf32> to vector<2x16xf32>
    %50 = vector.shape_cast %49 : vector<2x16xf32> to vector<2x16x1xf32>
    %51 = vector.broadcast %50 : vector<2x16x1xf32> to vector<2x16x16xf32>
    %52 = arith.subf %48, %51 : vector<2x16x16xf32>
    %53 = math.exp %52 : vector<2x16x16xf32>
    %cst_22 = arith.constant dense<0.000000e+00> : vector<2x16xf32>
    %54 = vector.multi_reduction <add>, %53, %cst_22 [2] : vector<2x16x16xf32> to vector<2x16xf32>
    %55 = vector.shape_cast %54 : vector<2x16xf32> to vector<2x16x1xf32>
    %56 = tpu.reciprocal %55 {approx = true} : vector<2x16x1xf32> -> vector<2x16x1xf32>
    %57 = vector.broadcast %56 : vector<2x16x1xf32> to vector<2x16x16xf32>
    %58 = arith.mulf %53, %57 : vector<2x16x16xf32>
    %59 = arith.truncf %58 : vector<2x16x16xf32> to vector<2x16x16xbf16>
    %60 = arith.truncf %43 : vector<2x16x32xf32> to vector<2x16x32xbf16>
    "tpu.trace_start"() <{level = 10 : i32, message = "bqk,bkd->bqd"}> : () -> ()
    %cst_23 = arith.constant dense<0.000000e+00> : vector<2x16x32xf32>
    %61 = tpu.matmul %59, %60, %cst_23 {dimension_numbers = #tpu.dot_dimension_numbers<[2], [1], [1], [2], [0, 0, 0, 1, 1, 2], [0], [0]>} : vector<2x16x16xbf16>, vector<2x16x32xbf16>, vector<2x16x32xf32> -> vector<2x16x32xf32>
    "tpu.trace_stop"() : () -> ()
    %62 = vector.shape_cast %61 : vector<2x16x32xf32> to vector<32x32xf32>
    %63 = vector.extract_strided_slice %37 {offsets = [0, 32], sizes = [32, 32], strides = [1, 1]} : vector<32x384xf32> to vector<32x32xf32>
    %64 = vector.shape_cast %63 : vector<32x32xf32> to vector<2x16x32xf32>
    %65 = vector.extract_strided_slice %37 {offsets = [0, 160], sizes = [32, 32], strides = [1, 1]} : vector<32x384xf32> to vector<32x32xf32>
    %66 = vector.shape_cast %65 : vector<32x32xf32> to vector<2x16x32xf32>
    %67 = vector.extract_strided_slice %37 {offsets = [0, 288], sizes = [32, 32], strides = [1, 1]} : vector<32x384xf32> to vector<32x32xf32>
    %68 = vector.shape_cast %67 : vector<32x32xf32> to vector<2x16x32xf32>
    %69 = arith.truncf %64 : vector<2x16x32xf32> to vector<2x16x32xbf16>
    %70 = arith.truncf %66 : vector<2x16x32xf32> to vector<2x16x32xbf16>
    "tpu.trace_start"() <{level = 10 : i32, message = "bqd,bkd->bqk"}> : () -> ()
    %cst_24 = arith.constant dense<0.000000e+00> : vector<2x16x16xf32>
    %71 = tpu.matmul %69, %70, %cst_24 {dimension_numbers = #tpu.dot_dimension_numbers<[2], [2], [1], [1], [0, 0, 0, 1, 1, 1], [0], [0]>} : vector<2x16x32xbf16>, vector<2x16x32xbf16>, vector<2x16x16xf32> -> vector<2x16x16xf32>
    "tpu.trace_stop"() : () -> ()
    %cst_25 = arith.constant 0.176776692 : f32
    %72 = vector.broadcast %cst_25 : f32 to vector<2x16x16xf32>
    %73 = arith.mulf %71, %72 : vector<2x16x16xf32>
    %cst_26 = arith.constant dense<0xFF800000> : vector<2x16xf32>
    %74 = vector.multi_reduction <maximumf>, %73, %cst_26 [2] : vector<2x16x16xf32> to vector<2x16xf32>
    %75 = vector.shape_cast %74 : vector<2x16xf32> to vector<2x16x1xf32>
    %76 = vector.broadcast %75 : vector<2x16x1xf32> to vector<2x16x16xf32>
    %77 = arith.subf %73, %76 : vector<2x16x16xf32>
    %78 = math.exp %77 : vector<2x16x16xf32>
    %cst_27 = arith.constant dense<0.000000e+00> : vector<2x16xf32>
    %79 = vector.multi_reduction <add>, %78, %cst_27 [2] : vector<2x16x16xf32> to vector<2x16xf32>
    %80 = vector.shape_cast %79 : vector<2x16xf32> to vector<2x16x1xf32>
    %81 = tpu.reciprocal %80 {approx = true} : vector<2x16x1xf32> -> vector<2x16x1xf32>
    %82 = vector.broadcast %81 : vector<2x16x1xf32> to vector<2x16x16xf32>
    %83 = arith.mulf %78, %82 : vector<2x16x16xf32>
    %84 = arith.truncf %83 : vector<2x16x16xf32> to vector<2x16x16xbf16>
    %85 = arith.truncf %68 : vector<2x16x32xf32> to vector<2x16x32xbf16>
    "tpu.trace_start"() <{level = 10 : i32, message = "bqk,bkd->bqd"}> : () -> ()
    %cst_28 = arith.constant dense<0.000000e+00> : vector<2x16x32xf32>
    %86 = tpu.matmul %84, %85, %cst_28 {dimension_numbers = #tpu.dot_dimension_numbers<[2], [1], [1], [2], [0, 0, 0, 1, 1, 2], [0], [0]>} : vector<2x16x16xbf16>, vector<2x16x32xbf16>, vector<2x16x32xf32> -> vector<2x16x32xf32>
    "tpu.trace_stop"() : () -> ()
    %87 = vector.shape_cast %86 : vector<2x16x32xf32> to vector<32x32xf32>
    %88 = vector.extract_strided_slice %37 {offsets = [0, 64], sizes = [32, 32], strides = [1, 1]} : vector<32x384xf32> to vector<32x32xf32>
    %89 = vector.shape_cast %88 : vector<32x32xf32> to vector<2x16x32xf32>
    %90 = vector.extract_strided_slice %37 {offsets = [0, 192], sizes = [32, 32], strides = [1, 1]} : vector<32x384xf32> to vector<32x32xf32>
    %91 = vector.shape_cast %90 : vector<32x32xf32> to vector<2x16x32xf32>
    %92 = vector.extract_strided_slice %37 {offsets = [0, 320], sizes = [32, 32], strides = [1, 1]} : vector<32x384xf32> to vector<32x32xf32>
    %93 = vector.shape_cast %92 : vector<32x32xf32> to vector<2x16x32xf32>
    %94 = arith.truncf %89 : vector<2x16x32xf32> to vector<2x16x32xbf16>
    %95 = arith.truncf %91 : vector<2x16x32xf32> to vector<2x16x32xbf16>
    "tpu.trace_start"() <{level = 10 : i32, message = "bqd,bkd->bqk"}> : () -> ()
    %cst_29 = arith.constant dense<0.000000e+00> : vector<2x16x16xf32>
    %96 = tpu.matmul %94, %95, %cst_29 {dimension_numbers = #tpu.dot_dimension_numbers<[2], [2], [1], [1], [0, 0, 0, 1, 1, 1], [0], [0]>} : vector<2x16x32xbf16>, vector<2x16x32xbf16>, vector<2x16x16xf32> -> vector<2x16x16xf32>
    "tpu.trace_stop"() : () -> ()
    %cst_30 = arith.constant 0.176776692 : f32
    %97 = vector.broadcast %cst_30 : f32 to vector<2x16x16xf32>
    %98 = arith.mulf %96, %97 : vector<2x16x16xf32>
    %cst_31 = arith.constant dense<0xFF800000> : vector<2x16xf32>
    %99 = vector.multi_reduction <maximumf>, %98, %cst_31 [2] : vector<2x16x16xf32> to vector<2x16xf32>
    %100 = vector.shape_cast %99 : vector<2x16xf32> to vector<2x16x1xf32>
    %101 = vector.broadcast %100 : vector<2x16x1xf32> to vector<2x16x16xf32>
    %102 = arith.subf %98, %101 : vector<2x16x16xf32>
    %103 = math.exp %102 : vector<2x16x16xf32>
    %cst_32 = arith.constant dense<0.000000e+00> : vector<2x16xf32>
    %104 = vector.multi_reduction <add>, %103, %cst_32 [2] : vector<2x16x16xf32> to vector<2x16xf32>
    %105 = vector.shape_cast %104 : vector<2x16xf32> to vector<2x16x1xf32>
    %106 = tpu.reciprocal %105 {approx = true} : vector<2x16x1xf32> -> vector<2x16x1xf32>
    %107 = vector.broadcast %106 : vector<2x16x1xf32> to vector<2x16x16xf32>
    %108 = arith.mulf %103, %107 : vector<2x16x16xf32>
    %109 = arith.truncf %108 : vector<2x16x16xf32> to vector<2x16x16xbf16>
    %110 = arith.truncf %93 : vector<2x16x32xf32> to vector<2x16x32xbf16>
    "tpu.trace_start"() <{level = 10 : i32, message = "bqk,bkd->bqd"}> : () -> ()
    %cst_33 = arith.constant dense<0.000000e+00> : vector<2x16x32xf32>
    %111 = tpu.matmul %109, %110, %cst_33 {dimension_numbers = #tpu.dot_dimension_numbers<[2], [1], [1], [2], [0, 0, 0, 1, 1, 2], [0], [0]>} : vector<2x16x16xbf16>, vector<2x16x32xbf16>, vector<2x16x32xf32> -> vector<2x16x32xf32>
    "tpu.trace_stop"() : () -> ()
    %112 = vector.shape_cast %111 : vector<2x16x32xf32> to vector<32x32xf32>
    %113 = vector.extract_strided_slice %37 {offsets = [0, 96], sizes = [32, 32], strides = [1, 1]} : vector<32x384xf32> to vector<32x32xf32>
    %114 = vector.shape_cast %113 : vector<32x32xf32> to vector<2x16x32xf32>
    %115 = vector.extract_strided_slice %37 {offsets = [0, 224], sizes = [32, 32], strides = [1, 1]} : vector<32x384xf32> to vector<32x32xf32>
    %116 = vector.shape_cast %115 : vector<32x32xf32> to vector<2x16x32xf32>
    %117 = vector.extract_strided_slice %37 {offsets = [0, 352], sizes = [32, 32], strides = [1, 1]} : vector<32x384xf32> to vector<32x32xf32>
    %118 = vector.shape_cast %117 : vector<32x32xf32> to vector<2x16x32xf32>
    %119 = arith.truncf %114 : vector<2x16x32xf32> to vector<2x16x32xbf16>
    %120 = arith.truncf %116 : vector<2x16x32xf32> to vector<2x16x32xbf16>
    "tpu.trace_start"() <{level = 10 : i32, message = "bqd,bkd->bqk"}> : () -> ()
    %cst_34 = arith.constant dense<0.000000e+00> : vector<2x16x16xf32>
    %121 = tpu.matmul %119, %120, %cst_34 {dimension_numbers = #tpu.dot_dimension_numbers<[2], [2], [1], [1], [0, 0, 0, 1, 1, 1], [0], [0]>} : vector<2x16x32xbf16>, vector<2x16x32xbf16>, vector<2x16x16xf32> -> vector<2x16x16xf32>
    "tpu.trace_stop"() : () -> ()
    %cst_35 = arith.constant 0.176776692 : f32
    %122 = vector.broadcast %cst_35 : f32 to vector<2x16x16xf32>
    %123 = arith.mulf %121, %122 : vector<2x16x16xf32>
    %cst_36 = arith.constant dense<0xFF800000> : vector<2x16xf32>
    %124 = vector.multi_reduction <maximumf>, %123, %cst_36 [2] : vector<2x16x16xf32> to vector<2x16xf32>
    %125 = vector.shape_cast %124 : vector<2x16xf32> to vector<2x16x1xf32>
    %126 = vector.broadcast %125 : vector<2x16x1xf32> to vector<2x16x16xf32>
    %127 = arith.subf %123, %126 : vector<2x16x16xf32>
    %128 = math.exp %127 : vector<2x16x16xf32>
    %cst_37 = arith.constant dense<0.000000e+00> : vector<2x16xf32>
    %129 = vector.multi_reduction <add>, %128, %cst_37 [2] : vector<2x16x16xf32> to vector<2x16xf32>
    %130 = vector.shape_cast %129 : vector<2x16xf32> to vector<2x16x1xf32>
    %131 = tpu.reciprocal %130 {approx = true} : vector<2x16x1xf32> -> vector<2x16x1xf32>
    %132 = vector.broadcast %131 : vector<2x16x1xf32> to vector<2x16x16xf32>
    %133 = arith.mulf %128, %132 : vector<2x16x16xf32>
    %134 = arith.truncf %133 : vector<2x16x16xf32> to vector<2x16x16xbf16>
    %135 = arith.truncf %118 : vector<2x16x32xf32> to vector<2x16x32xbf16>
    "tpu.trace_start"() <{level = 10 : i32, message = "bqk,bkd->bqd"}> : () -> ()
    %cst_38 = arith.constant dense<0.000000e+00> : vector<2x16x32xf32>
    %136 = tpu.matmul %134, %135, %cst_38 {dimension_numbers = #tpu.dot_dimension_numbers<[2], [1], [1], [2], [0, 0, 0, 1, 1, 2], [0], [0]>} : vector<2x16x16xbf16>, vector<2x16x32xbf16>, vector<2x16x32xf32> -> vector<2x16x32xf32>
    "tpu.trace_stop"() : () -> ()
    %137 = vector.shape_cast %136 : vector<2x16x32xf32> to vector<32x32xf32>
    %138 = tpu.concatenate %62, %87, %112, %137 in 1 : vector<32x32xf32>, vector<32x32xf32>, vector<32x32xf32>, vector<32x32xf32> -> vector<32x128xf32>
    %c0_39 = arith.constant 0 : index
    %c0_40 = arith.constant 0 : index
    %c0_41 = arith.constant 0 : index
    %139 = vector.load %arg8[%c0_39, %c0_40, %c0_41] : memref<1x128x128xbf16, #tpu.memory_space<vmem>>, vector<1x128x128xbf16>
    %140 = vector.shape_cast %139 : vector<1x128x128xbf16> to vector<128x128xbf16>
    %141 = arith.truncf %138 : vector<32x128xf32> to vector<32x128xbf16>
    %cst_42 = arith.constant dense<0.000000e+00> : vector<32x128xf32>
    %142 = tpu.matmul %141, %140, %cst_42 {dimension_numbers = #tpu.dot_dimension_numbers<[1], [0], [0], [1], [0, 0, 1, 1], [], []>} : vector<32x128xbf16>, vector<128x128xbf16>, vector<32x128xf32> -> vector<32x128xf32>
    %143 = arith.addf %3, %142 : vector<32x128xf32>
    %c0_43 = arith.constant 0 : index
    %c0_44 = arith.constant 0 : index
    %c0_45 = arith.constant 0 : index
    %144 = vector.load %arg9[%c0_43, %c0_44, %c0_45] : memref<1x1x128xf32, #tpu.memory_space<vmem>>, vector<1x1x128xf32>
    %145 = vector.shape_cast %144 : vector<1x1x128xf32> to vector<1x128xf32>
    %146 = vector.broadcast %145 : vector<1x128xf32> to vector<32x128xf32>
    %147 = arith.addf %143, %146 : vector<32x128xf32>
    %c0_46 = arith.constant 0 : index
    %c0_47 = arith.constant 0 : index
    %c0_48 = arith.constant 0 : index
    %148 = vector.load %arg10[%c0_46, %c0_47, %c0_48] : memref<1x1x128xf32, #tpu.memory_space<vmem>>, vector<1x1x128xf32>
    %149 = vector.shape_cast %148 : vector<1x1x128xf32> to vector<1x128xf32>
    %c0_49 = arith.constant 0 : index
    %c0_50 = arith.constant 0 : index
    %c0_51 = arith.constant 0 : index
    %150 = vector.load %arg11[%c0_49, %c0_50, %c0_51] : memref<1x1x128xf32, #tpu.memory_space<vmem>>, vector<1x1x128xf32>
    %151 = vector.shape_cast %150 : vector<1x1x128xf32> to vector<1x128xf32>
    %cst_52 = arith.constant dense<0.000000e+00> : vector<32xf32>
    %152 = vector.multi_reduction <add>, %147, %cst_52 [1] : vector<32x128xf32> to vector<32xf32>
    %153 = vector.shape_cast %152 : vector<32xf32> to vector<32x1xf32>
    %cst_53 = arith.constant 1.280000e+02 : f32
    %154 = vector.broadcast %cst_53 : f32 to vector<32x1xf32>
    %155 = arith.divf %153, %154 : vector<32x1xf32>
    %156 = vector.broadcast %155 : vector<32x1xf32> to vector<32x128xf32>
    %157 = arith.subf %147, %156 : vector<32x128xf32>
    %158 = arith.mulf %157, %157 : vector<32x128xf32>
    %cst_54 = arith.constant dense<0.000000e+00> : vector<32xf32>
    %159 = vector.multi_reduction <add>, %158, %cst_54 [1] : vector<32x128xf32> to vector<32xf32>
    %160 = vector.shape_cast %159 : vector<32xf32> to vector<32x1xf32>
    %cst_55 = arith.constant 1.280000e+02 : f32
    %161 = vector.broadcast %cst_55 : f32 to vector<32x1xf32>
    %162 = arith.divf %160, %161 : vector<32x1xf32>
    %163 = vector.broadcast %155 : vector<32x1xf32> to vector<32x128xf32>
    %164 = arith.subf %147, %163 : vector<32x128xf32>
    %cst_56 = arith.constant 9.99999974E-6 : f32
    %165 = vector.broadcast %cst_56 : f32 to vector<32x1xf32>
    %166 = arith.addf %162, %165 : vector<32x1xf32>
    %167 = math.rsqrt %166 : vector<32x1xf32>
    %168 = vector.broadcast %167 : vector<32x1xf32> to vector<32x128xf32>
    %169 = arith.mulf %164, %168 : vector<32x128xf32>
    %170 = vector.broadcast %149 : vector<1x128xf32> to vector<32x128xf32>
    %171 = arith.mulf %169, %170 : vector<32x128xf32>
    %172 = vector.broadcast %151 : vector<1x128xf32> to vector<32x128xf32>
    %173 = arith.addf %171, %172 : vector<32x128xf32>
    %c0_57 = arith.constant 0 : index
    %c0_58 = arith.constant 0 : index
    %c0_59 = arith.constant 0 : index
    %174 = vector.load %arg12[%c0_57, %c0_58, %c0_59] : memref<1x128x256xbf16, #tpu.memory_space<vmem>>, vector<1x128x256xbf16>
    %175 = vector.shape_cast %174 : vector<1x128x256xbf16> to vector<128x256xbf16>
    %176 = arith.truncf %173 : vector<32x128xf32> to vector<32x128xbf16>
    %cst_60 = arith.constant dense<0.000000e+00> : vector<32x256xf32>
    %177 = tpu.matmul %176, %175, %cst_60 {dimension_numbers = #tpu.dot_dimension_numbers<[1], [0], [0], [1], [0, 0, 1, 1], [], []>} : vector<32x128xbf16>, vector<128x256xbf16>, vector<32x256xf32> -> vector<32x256xf32>
    %c0_61 = arith.constant 0 : index
    %c0_62 = arith.constant 0 : index
    %c0_63 = arith.constant 0 : index
    %178 = vector.load %arg13[%c0_61, %c0_62, %c0_63] : memref<1x1x256xf32, #tpu.memory_space<vmem>>, vector<1x1x256xf32>
    %179 = vector.shape_cast %178 : vector<1x1x256xf32> to vector<1x256xf32>
    %180 = vector.broadcast %179 : vector<1x256xf32> to vector<32x256xf32>
    %181 = arith.addf %177, %180 : vector<32x256xf32>
    %cst_64 = arith.constant 5.000000e-01 : f32
    %182 = vector.broadcast %cst_64 : f32 to vector<32x256xf32>
    %183 = arith.mulf %182, %181 : vector<32x256xf32>
    %cst_65 = arith.constant 0.707106769 : f32
    %184 = vector.broadcast %cst_65 : f32 to vector<32x256xf32>
    %185 = arith.mulf %181, %184 : vector<32x256xf32>
    %186 = math.erf %185 : vector<32x256xf32>
    %cst_66 = arith.constant 1.000000e+00 : f32
    %187 = vector.broadcast %cst_66 : f32 to vector<32x256xf32>
    %188 = arith.addf %187, %186 : vector<32x256xf32>
    %189 = arith.mulf %183, %188 : vector<32x256xf32>
    %c0_67 = arith.constant 0 : index
    %c0_68 = arith.constant 0 : index
    %c0_69 = arith.constant 0 : index
    %190 = vector.load %arg14[%c0_67, %c0_68, %c0_69] : memref<1x256x128xbf16, #tpu.memory_space<vmem>>, vector<1x256x128xbf16>
    %191 = vector.shape_cast %190 : vector<1x256x128xbf16> to vector<256x128xbf16>
    %192 = arith.truncf %189 : vector<32x256xf32> to vector<32x256xbf16>
    %cst_70 = arith.constant dense<0.000000e+00> : vector<32x128xf32>
    %193 = tpu.matmul %192, %191, %cst_70 {dimension_numbers = #tpu.dot_dimension_numbers<[1], [0], [0], [1], [0, 0, 1, 1], [], []>} : vector<32x256xbf16>, vector<256x128xbf16>, vector<32x128xf32> -> vector<32x128xf32>
    %c0_71 = arith.constant 0 : index
    %c0_72 = arith.constant 0 : index
    %c0_73 = arith.constant 0 : index
    %194 = vector.load %arg15[%c0_71, %c0_72, %c0_73] : memref<1x1x128xf32, #tpu.memory_space<vmem>>, vector<1x1x128xf32>
    %195 = vector.shape_cast %194 : vector<1x1x128xf32> to vector<1x128xf32>
    %196 = vector.broadcast %195 : vector<1x128xf32> to vector<32x128xf32>
    %197 = arith.addf %193, %196 : vector<32x128xf32>
    %198 = arith.addf %147, %197 : vector<32x128xf32>
    %c0_74 = arith.constant 0 : index
    %c0_75 = arith.constant 0 : index
    %199 = vector.load %arg19[%c0_74, %c0_75] : memref<32x128xf32, #tpu.memory_space<vmem>>, vector<32x128xf32>
    tpu.vector_store %arg19[%c0_74, %c0_75], %198 {strides = array<i32>} : memref<32x128xf32, #tpu.memory_space<vmem>>, vector<32x128xf32>,
    %c1_i32 = arith.constant 1 : i32
    %200 = arith.cmpi eq, %arg1, %c1_i32 : i32
    %201 = arith.extui %200 : i1 to i32
    %c0_i32_76 = arith.constant 0 : i32
    %202 = arith.cmpi ne, %201, %c0_i32_76 : i32
    scf.if %202 {
      %c0_77 = arith.constant 0 : index
      %c0_78 = arith.constant 0 : index
      %203 = vector.load %arg16[%c0_77, %c0_78] : memref<1x128xf32, #tpu.memory_space<vmem>>, vector<1x128xf32>
      %c0_79 = arith.constant 0 : index
      %c0_80 = arith.constant 0 : index
      %204 = vector.load %arg17[%c0_79, %c0_80] : memref<1x128xf32, #tpu.memory_space<vmem>>, vector<1x128xf32>
      %cst_81 = arith.constant dense<0.000000e+00> : vector<32xf32>
      %205 = vector.multi_reduction <add>, %198, %cst_81 [1] : vector<32x128xf32> to vector<32xf32>
      %206 = vector.shape_cast %205 : vector<32xf32> to vector<32x1xf32>
      %cst_82 = arith.constant 1.280000e+02 : f32
      %207 = vector.broadcast %cst_82 : f32 to vector<32x1xf32>
      %208 = arith.divf %206, %207 : vector<32x1xf32>
      %209 = vector.broadcast %208 : vector<32x1xf32> to vector<32x128xf32>
      %210 = arith.subf %198, %209 : vector<32x128xf32>
      %211 = arith.mulf %210, %210 : vector<32x128xf32>
      %cst_83 = arith.constant dense<0.000000e+00> : vector<32xf32>
      %212 = vector.multi_reduction <add>, %211, %cst_83 [1] : vector<32x128xf32> to vector<32xf32>
      %213 = vector.shape_cast %212 : vector<32xf32> to vector<32x1xf32>
      %cst_84 = arith.constant 1.280000e+02 : f32
      %214 = vector.broadcast %cst_84 : f32 to vector<32x1xf32>
      %215 = arith.divf %213, %214 : vector<32x1xf32>
      %216 = vector.broadcast %208 : vector<32x1xf32> to vector<32x128xf32>
      %217 = arith.subf %198, %216 : vector<32x128xf32>
      %cst_85 = arith.constant 9.99999974E-6 : f32
      %218 = vector.broadcast %cst_85 : f32 to vector<32x1xf32>
      %219 = arith.addf %215, %218 : vector<32x1xf32>
      %220 = math.rsqrt %219 : vector<32x1xf32>
      %221 = vector.broadcast %220 : vector<32x1xf32> to vector<32x128xf32>
      %222 = arith.mulf %217, %221 : vector<32x128xf32>
      %223 = vector.broadcast %203 : vector<1x128xf32> to vector<32x128xf32>
      %224 = arith.mulf %222, %223 : vector<32x128xf32>
      %225 = vector.broadcast %204 : vector<1x128xf32> to vector<32x128xf32>
      %226 = arith.addf %224, %225 : vector<32x128xf32>
      %227 = vector.shape_cast %226 : vector<32x128xf32> to vector<2x16x128xf32>
      %c0_86 = arith.constant 0 : index
      %c0_87 = arith.constant 0 : index
      %c0_88 = arith.constant 0 : index
      %228 = vector.load %arg18[%c0_86, %c0_87, %c0_88] : memref<2x16x128xf32, #tpu.memory_space<vmem>>, vector<2x16x128xf32>
      tpu.vector_store %arg18[%c0_86, %c0_87, %c0_88], %227 {strides = array<i32>} : memref<2x16x128xf32, #tpu.memory_space<vmem>>, vector<2x16x128xf32>,
    } else {
    }
    return
  }
  func.func @transform_0(%arg0: i32, %arg1: i32) -> (i32, i32, i32) {
    %c0_i32 = arith.constant 0 : i32
    %c0_i32_0 = arith.constant 0 : i32
    %c0_i32_1 = arith.constant 0 : i32
    return %arg0, %c0_i32, %c0_i32_0 : i32, i32, i32
  }
  func.func @transform_1(%arg0: i32, %arg1: i32) -> (i32, i32, i32) {
    %c0_i32 = arith.constant 0 : i32
    %c0_i32_0 = arith.constant 0 : i32
    %c0_i32_1 = arith.constant 0 : i32
    %c0_i32_2 = arith.constant 0 : i32
    return %c0_i32, %c0_i32_0, %c0_i32_1 : i32, i32, i32
  }
  func.func @transform_2(%arg0: i32, %arg1: i32) -> (i32, i32, i32) {
    %c0_i32 = arith.constant 0 : i32
    %c0_i32_0 = arith.constant 0 : i32
    %c0_i32_1 = arith.constant 0 : i32
    return %arg1, %c0_i32, %c0_i32_0 : i32, i32, i32
  }
  func.func @transform_3(%arg0: i32, %arg1: i32) -> (i32, i32, i32) {
    %c0_i32 = arith.constant 0 : i32
    %c0_i32_0 = arith.constant 0 : i32
    %c0_i32_1 = arith.constant 0 : i32
    return %arg1, %c0_i32, %c0_i32_0 : i32, i32, i32
  }
  func.func @transform_4(%arg0: i32, %arg1: i32) -> (i32, i32, i32) {
    %c0_i32 = arith.constant 0 : i32
    %c0_i32_0 = arith.constant 0 : i32
    %c0_i32_1 = arith.constant 0 : i32
    return %arg1, %c0_i32, %c0_i32_0 : i32, i32, i32
  }
  func.func @transform_5(%arg0: i32, %arg1: i32) -> (i32, i32, i32) {
    %c0_i32 = arith.constant 0 : i32
    %c0_i32_0 = arith.constant 0 : i32
    %c0_i32_1 = arith.constant 0 : i32
    return %arg1, %c0_i32, %c0_i32_0 : i32, i32, i32
  }
  func.func @transform_6(%arg0: i32, %arg1: i32) -> (i32, i32, i32) {
    %c0_i32 = arith.constant 0 : i32
    %c0_i32_0 = arith.constant 0 : i32
    %c0_i32_1 = arith.constant 0 : i32
    return %arg1, %c0_i32, %c0_i32_0 : i32, i32, i32
  }
  func.func @transform_7(%arg0: i32, %arg1: i32) -> (i32, i32, i32) {
    %c0_i32 = arith.constant 0 : i32
    %c0_i32_0 = arith.constant 0 : i32
    %c0_i32_1 = arith.constant 0 : i32
    return %arg1, %c0_i32, %c0_i32_0 : i32, i32, i32
  }
  func.func @transform_8(%arg0: i32, %arg1: i32) -> (i32, i32, i32) {
    %c0_i32 = arith.constant 0 : i32
    %c0_i32_0 = arith.constant 0 : i32
    %c0_i32_1 = arith.constant 0 : i32
    return %arg1, %c0_i32, %c0_i32_0 : i32, i32, i32
  }
  func.func @transform_9(%arg0: i32, %arg1: i32) -> (i32, i32, i32) {
    %c0_i32 = arith.constant 0 : i32
    %c0_i32_0 = arith.constant 0 : i32
    %c0_i32_1 = arith.constant 0 : i32
    return %arg1, %c0_i32, %c0_i32_0 : i32, i32, i32
  }
  func.func @transform_10(%arg0: i32, %arg1: i32) -> (i32, i32, i32) {
    %c0_i32 = arith.constant 0 : i32
    %c0_i32_0 = arith.constant 0 : i32
    %c0_i32_1 = arith.constant 0 : i32
    return %arg1, %c0_i32, %c0_i32_0 : i32, i32, i32
  }
  func.func @transform_11(%arg0: i32, %arg1: i32) -> (i32, i32, i32) {
    %c0_i32 = arith.constant 0 : i32
    %c0_i32_0 = arith.constant 0 : i32
    %c0_i32_1 = arith.constant 0 : i32
    return %arg1, %c0_i32, %c0_i32_0 : i32, i32, i32
  }
  func.func @transform_12(%arg0: i32, %arg1: i32) -> (i32, i32, i32) {
    %c0_i32 = arith.constant 0 : i32
    %c0_i32_0 = arith.constant 0 : i32
    %c0_i32_1 = arith.constant 0 : i32
    return %arg1, %c0_i32, %c0_i32_0 : i32, i32, i32
  }
  func.func @transform_13(%arg0: i32, %arg1: i32) -> (i32, i32, i32) {
    %c0_i32 = arith.constant 0 : i32
    %c0_i32_0 = arith.constant 0 : i32
    %c0_i32_1 = arith.constant 0 : i32
    return %arg1, %c0_i32, %c0_i32_0 : i32, i32, i32
  }
  func.func @transform_14(%arg0: i32, %arg1: i32) -> (i32, i32) {
    %c0_i32 = arith.constant 0 : i32
    %c0_i32_0 = arith.constant 0 : i32
    %c0_i32_1 = arith.constant 0 : i32
    return %c0_i32, %c0_i32_0 : i32, i32
  }
  func.func @transform_15(%arg0: i32, %arg1: i32) -> (i32, i32) {
    %c0_i32 = arith.constant 0 : i32
    %c0_i32_0 = arith.constant 0 : i32
    %c0_i32_1 = arith.constant 0 : i32
    return %c0_i32, %c0_i32_0 : i32, i32
  }
  func.func @transform_16(%arg0: i32, %arg1: i32) -> (i32, i32, i32) {
    %c0_i32 = arith.constant 0 : i32
    %c0_i32_0 = arith.constant 0 : i32
    %c0_i32_1 = arith.constant 0 : i32
    return %arg0, %c0_i32, %c0_i32_0 : i32, i32, i32
  }
}

</mosaic_0001>

<llo_original>
// kernel: tpu_custom_call.1
$region0: #{tpu_custom_call.1}
  #allocation0 [shape = 'u32[]', space=smem, size = 0x4, offset = 0x4, fixed_abs, tag = 'smem constant byte address 0x4 - core index']
  #allocation1 [shape = 'u32[144,128]{1,0:T(1,128)}', space=vmem, size = 0x12000, scoped, tag = 'internal scratch']
  #allocation2 [shape = 'f32[32,128]{1,0:T(8,128)}', space=vmem, size = 0x4000, scoped, tag = 'scratch operand']
  %s0 = inlined_call_operand.hbm [shape: f32[4,16,128], index: 0, kind: input, shape index: {}]
  %s1 = inlined_call_operand.hbm [shape: f32[1,16,128], index: 1, kind: input, shape index: {}]
  %s2 = inlined_call_operand.hbm [shape: f32[2,1,128], index: 2, kind: input, shape index: {}]
  %s3 = inlined_call_operand.hbm [shape: f32[2,1,128], index: 3, kind: input, shape index: {}]
  %s4 = inlined_call_operand.hbm [shape: bf16[2,128,384], index: 4, kind: input, shape index: {}]
  %s5 = inlined_call_operand.vmem [shape: f32[2,1,384], index: 5, kind: input, shape index: {}]
  %s6 = inlined_call_operand.hbm [shape: bf16[2,128,128], index: 6, kind: input, shape index: {}]
  %s7 = inlined_call_operand.vmem [shape: f32[2,1,128], index: 7, kind: input, shape index: {}]
  %s8 = inlined_call_operand.vmem [shape: f32[2,1,128], index: 8, kind: input, shape index: {}]
  %s9 = inlined_call_operand.vmem [shape: f32[2,1,128], index: 9, kind: input, shape index: {}]
  %s10 = inlined_call_operand.hbm [shape: bf16[2,128,256], index: 10, kind: input, shape index: {}]
  %s11 = inlined_call_operand.vmem [shape: f32[2,1,256], index: 11, kind: input, shape index: {}]
  %s12 = inlined_call_operand.hbm [shape: bf16[2,256,128], index: 12, kind: input, shape index: {}]
  %s13 = inlined_call_operand.vmem [shape: f32[2,1,128], index: 13, kind: input, shape index: {}]
  %s14 = inlined_call_operand.vmem [shape: f32[1,128], index: 14, kind: input, shape index: {}]
  %s15 = inlined_call_operand.vmem [shape: f32[1,128], index: 15, kind: input, shape index: {}]
  %s16 = inlined_call_operand.hbm [shape: f32[4,16,128], index: 16, kind: output, shape index: {}]
  %s17 = sld [smem:[#allocation0]]
  $region137: #{tpu_custom_call.1} parent=0
    _
  %s19 = ssub.s32 1, %s17
  %s20 = scalar_select 0, %s19, %s17
  $region1: #{tpu_custom_call.1} parent=0
    #allocation3 [shape = 'u8[32768]{0}', space=vmem, size = 0x8000, scoped, tag = 'input window, operand 0']
    #allocation4 [shape = 's32[2]{0}', space=sflag, size = 0x8, scoped, tag = 'scoped memory for tpu_custom_call.1']
    #allocation5 [shape = 's32[2]{0}', space=sflag, size = 0x8, scoped, tag = 'scoped memory for tpu_custom_call.1']
    #allocation6 [shape = 'u8[8192]{0}', space=vmem, size = 0x2000, scoped, tag = 'input window, operand 1, single buffered']
    #allocation7 [shape = 's32[1]{0}', space=sflag, size = 0x4, scoped, tag = 'scoped memory for tpu_custom_call.1']
    #allocation8 [shape = 'u8[1024]{0}', space=vmem, size = 0x400, scoped, tag = 'input window, operand 2']
    #allocation9 [shape = 'u8[1024]{0}', space=vmem, size = 0x400, scoped, tag = 'input window, operand 3']
    #allocation10 [shape = 'u8[196608]{0}', space=vmem, size = 0x30000, scoped, tag = 'input window, operand 4']
    #allocation11 [shape = 'u8[65536]{0}', space=vmem, size = 0x10000, scoped, tag = 'input window, operand 6']
    #allocation12 [shape = 'u8[131072]{0}', space=vmem, size = 0x20000, scoped, tag = 'input window, operand 10']
    #allocation13 [shape = 'u8[131072]{0}', space=vmem, size = 0x20000, scoped, tag = 'input window, operand 12']
    #allocation14 [shape = 'u8[32768]{0}', space=vmem, size = 0x8000, scoped, tag = 'output window, operand 0']
    %21 = vsyncpa [#allocation4], 0
    %s22 = scalar_lea.sflag [#allocation4], 1
    %23 = vsyncpa %s22, 0
    %24 = vsyncpa [#allocation7], 0
    %25 = vsyncpa [#allocation5], 0
    %s26 = scalar_lea.sflag [#allocation5], 1
    %27 = vsyncpa %s26, 0
    loop: start=0, step=1, limit=6
    $region2: #{tpu_custom_call.1} parent=1 // loop_pre_header
      _
    $region3: #{tpu_custom_call.1} parent=1 // loop_header
      %s29 = sphi 0, %s33
      %p30 = scmp.ge.s32.totalorder %s29, 6
      %s36 = sphi 0, %s48
      %s37 = sphi 0, %s44
      %s38 = sphi 0, %s36
      %s39 = sphi 0, %s37
      %s40 = sphi 0, %s38
      %s41 = sphi 0, %s39
      %s51 = sphi 0, %s53
      %s54 = sphi 0, %s51
      %s55 = sphi 0, %s54
      %s71 = sphi 0, %s55
      %s75 = sphi 0, %s75
      %s77 = sphi 0, %s75
      %s78 = sphi 0, %s77
      %s92 = sphi 0, %s78
      %s98 = sphi 0, %s100
      %s101 = sphi 0, %s98
      %s102 = sphi 0, %s101
      %s118 = sphi 0, %s102
      %s124 = sphi 0, %s126
      %s127 = sphi 0, %s124
      %s128 = sphi 0, %s127
      %s144 = sphi 0, %s128
      %s150 = sphi 0, %s152
      %s153 = sphi 0, %s150
      %s154 = sphi 0, %s153
      %s170 = sphi 0, %s154
      %s176 = sphi 0, %s178
      %s179 = sphi 0, %s176
      %s180 = sphi 0, %s179
      %s196 = sphi 0, %s180
      %s202 = sphi 0, %s204
      %s205 = sphi 0, %s202
      %s206 = sphi 0, %s205
      %s222 = sphi 0, %s206
      %s228 = sphi 0, %s230
      %s231 = sphi 0, %s228
      %s232 = sphi 0, %s231
      %s248 = sphi 0, %s232
      %s254 = sphi 0, %s256
      %s257 = sphi 0, %s254
      %s258 = sphi 0, %s257
      %s274 = sphi 0, %s258
      %s280 = sphi 0, %s282
      %s283 = sphi 0, %s280
      %s284 = sphi 0, %s283
      %s300 = sphi 0, %s284
      %s306 = sphi 0, %s308
      %s309 = sphi 0, %s306
      %s310 = sphi 0, %s309
      %s326 = sphi 0, %s310
      %s332 = sphi 0, %s334
      %s335 = sphi 0, %s332
      %s336 = sphi 0, %s335
      %s352 = sphi 0, %s336
      %s358 = sphi 0, %s360
      %s361 = sphi 0, %s358
      %s362 = sphi 0, %s361
      %s378 = sphi 0, %s362
      %s384 = sphi 0, %s386
      %s387 = sphi 0, %s384
      %s388 = sphi 0, %s387
      %s404 = sphi 0, %s388
      %s408 = sphi 0, %s408
      %s410 = sphi 0, %s408
      %s411 = sphi 0, %s410
      %s425 = sphi 0, %s411
      %s429 = sphi 0, %s429
      %s431 = sphi 0, %s429
      %s432 = sphi 0, %s431
      %s446 = sphi 0, %s432
      %s452 = sphi 0, %s454
      %s455 = sphi 0, %s452
      %s456 = sphi 0, %s455
      %s472 = sphi 0, %s456
    $region4: #{tpu_custom_call.1} parent=1 // loop_header_branch
      %32 = sbr.rel (%p30) target = $region8
    $region5: #{tpu_custom_call.1} parent=1 // loop_body
      %s34 = ssub.s32 %s29, 1
      %s35 = ssub.s32 %s29, 2
      %s42 = sadd.s32 1, %s37
      %p43 = scmp.ge.s32.totalorder %s42, 2
      %s44 = scalar_select %p43, 0, %s42
      %s45 = sadd.s32 1, %s36
      %s46 = scalar_select %p43, %s45, %s36
      %p47 = scmp.ge.s32.totalorder %s46, 2
      %s48 = scalar_select %p47, 0, %s46
      %s49 = ssub.s32 %s36, %s48
      %p50 = scmp.eq.s32.totalorder %s49, 0
      %s52 = sadd.s32 %s51, 1
      %s53 = scalar_select %p50, %s51, %s52
      %p56 = pneg %p50
      %p57 = scmp.eq.s32.totalorder %s29, 3
      %p58 = por %p56, %p57
      %p59 = scmp.ne.s32.totalorder %s51, %s54
      %p60 = scmp.eq.s32.totalorder %s29, 0
      %p61 = por %p59, %p60
      %p62 = scmp.ne.s32.totalorder %s51, %s54
      %p63 = scmp.eq.s32.totalorder %s34, 3
      %p64 = por %p62, %p63
      %p65 = scmp.ne.s32.totalorder %s54, %s55
      %p66 = scmp.eq.s32.totalorder %s34, 0
      %p67 = por %p65, %p66
      %p68 = scmp.ne.s32.totalorder %s54, %s55
      %p69 = scmp.eq.s32.totalorder %s35, 3
      %p70 = por %p68, %p69
      %p72 = scmp.ne.s32.totalorder %s55, %s71
      %p73 = scmp.eq.s32.totalorder %s35, 0
      %p74 = por %p72, %p73
      %s76 = sadd.s32 %s75, 1
      %p79 = scmp.eq.s32.totalorder %s29, 3
      %p80 = scmp.ne.s32.totalorder %s75, %s77
      %p81 = scmp.eq.s32.totalorder %s29, 0
      %p82 = por %p80, %p81
      %p83 = scmp.ne.s32.totalorder %s75, %s77
      %p84 = scmp.eq.s32.totalorder %s34, 3
      %p85 = por %p83, %p84
      %p86 = scmp.ne.s32.totalorder %s77, %s78
      %p87 = scmp.eq.s32.totalorder %s34, 0
      %p88 = por %p86, %p87
      %p89 = scmp.ne.s32.totalorder %s77, %s78
      %p90 = scmp.eq.s32.totalorder %s35, 3
      %p91 = por %p89, %p90
      %p93 = scmp.ne.s32.totalorder %s78, %s92
      %p94 = scmp.eq.s32.totalorder %s35, 0
      %p95 = por %p93, %p94
      %s96 = ssub.s32 %s37, %s44
      %p97 = scmp.eq.s32.totalorder %s96, 0
      %s99 = sadd.s32 %s98, 1
      %s100 = scalar_select %p97, %s98, %s99
      %p103 = pneg %p97
      %p104 = scmp.eq.s32.totalorder %s29, 3
      %p105 = por %p103, %p104
      %p106 = scmp.ne.s32.totalorder %s98, %s101
      %p107 = scmp.eq.s32.totalorder %s29, 0
      %p108 = por %p106, %p107
      %p109 = scmp.ne.s32.totalorder %s98, %s101
      %p110 = scmp.eq.s32.totalorder %s34, 3
      %p111 = por %p109, %p110
      %p112 = scmp.ne.s32.totalorder %s101, %s102
      %p113 = scmp.eq.s32.totalorder %s34, 0
      %p114 = por %p112, %p113
      %p115 = scmp.ne.s32.totalorder %s101, %s102
      %p116 = scmp.eq.s32.totalorder %s35, 3
      %p117 = por %p115, %p116
      %p119 = scmp.ne.s32.totalorder %s102, %s118
      %p120 = scmp.eq.s32.totalorder %s35, 0
      %p121 = por %p119, %p120
      %s122 = ssub.s32 %s37, %s44
      %p123 = scmp.eq.s32.totalorder %s122, 0
      %s125 = sadd.s32 %s124, 1
      %s126 = scalar_select %p123, %s124, %s125
      %p129 = pneg %p123
      %p130 = scmp.eq.s32.totalorder %s29, 3
      %p131 = por %p129, %p130
      %p132 = scmp.ne.s32.totalorder %s124, %s127
      %p133 = scmp.eq.s32.totalorder %s29, 0
      %p134 = por %p132, %p133
      %p135 = scmp.ne.s32.totalorder %s124, %s127
      %p136 = scmp.eq.s32.totalorder %s34, 3
      %p137 = por %p135, %p136
      %p138 = scmp.ne.s32.totalorder %s127, %s128
      %p139 = scmp.eq.s32.totalorder %s34, 0
      %p140 = por %p138, %p139
      %p141 = scmp.ne.s32.totalorder %s127, %s128
      %p142 = scmp.eq.s32.totalorder %s35, 3
      %p143 = por %p141, %p142
      %p145 = scmp.ne.s32.totalorder %s128, %s144
      %p146 = scmp.eq.s32.totalorder %s35, 0
      %p147 = por %p145, %p146
      %s148 = ssub.s32 %s37, %s44
      %p149 = scmp.eq.s32.totalorder %s148, 0
      %s151 = sadd.s32 %s150, 1
      %s152 = scalar_select %p149, %s150, %s151
      %p155 = pneg %p149
      %p156 = scmp.eq.s32.totalorder %s29, 3
      %p157 = por %p155, %p156
      %p158 = scmp.ne.s32.totalorder %s150, %s153
      %p159 = scmp.eq.s32.totalorder %s29, 0
      %p160 = por %p158, %p159
      %p161 = scmp.ne.s32.totalorder %s150, %s153
      %p162 = scmp.eq.s32.totalorder %s34, 3
      %p163 = por %p161, %p162
      %p164 = scmp.ne.s32.totalorder %s153, %s154
      %p165 = scmp.eq.s32.totalorder %s34, 0
      %p166 = por %p164, %p165
      %p167 = scmp.ne.s32.totalorder %s153, %s154
      %p168 = scmp.eq.s32.totalorder %s35, 3
      %p169 = por %p167, %p168
      %p171 = scmp.ne.s32.totalorder %s154, %s170
      %p172 = scmp.eq.s32.totalorder %s35, 0
      %p173 = por %p171, %p172
      %s174 = ssub.s32 %s37, %s44
      %p175 = scmp.eq.s32.totalorder %s174, 0
      %s177 = sadd.s32 %s176, 1
      %s178 = scalar_select %p175, %s176, %s177
      %p181 = pneg %p175
      %p182 = scmp.eq.s32.totalorder %s29, 3
      %p183 = por %p181, %p182
      %p184 = scmp.ne.s32.totalorder %s176, %s179
      %p185 = scmp.eq.s32.totalorder %s29, 0
      %p186 = por %p184, %p185
      %p187 = scmp.ne.s32.totalorder %s176, %s179
      %p188 = scmp.eq.s32.totalorder %s34, 3
      %p189 = por %p187, %p188
      %p190 = scmp.ne.s32.totalorder %s179, %s180
      %p191 = scmp.eq.s32.totalorder %s34, 0
      %p192 = por %p190, %p191
      %p193 = scmp.ne.s32.totalorder %s179, %s180
      %p194 = scmp.eq.s32.totalorder %s35, 3
      %p195 = por %p193, %p194
      %p197 = scmp.ne.s32.totalorder %s180, %s196
      %p198 = scmp.eq.s32.totalorder %s35, 0
      %p199 = por %p197, %p198
      %s200 = ssub.s32 %s37, %s44
      %p201 = scmp.eq.s32.totalorder %s200, 0
      %s203 = sadd.s32 %s202, 1
      %s204 = scalar_select %p201, %s202, %s203
      %p207 = pneg %p201
      %p208 = scmp.eq.s32.totalorder %s29, 3
      %p209 = por %p207, %p208
      %p210 = scmp.ne.s32.totalorder %s202, %s205
      %p211 = scmp.eq.s32.totalorder %s29, 0
      %p212 = por %p210, %p211
      %p213 = scmp.ne.s32.totalorder %s202, %s205
      %p214 = scmp.eq.s32.totalorder %s34, 3
      %p215 = por %p213, %p214
      %p216 = scmp.ne.s32.totalorder %s205, %s206
      %p217 = scmp.eq.s32.totalorder %s34, 0
      %p218 = por %p216, %p217
      %p219 = scmp.ne.s32.totalorder %s205, %s206
      %p220 = scmp.eq.s32.totalorder %s35, 3
      %p221 = por %p219, %p220
      %p223 = scmp.ne.s32.totalorder %s206, %s222
      %p224 = scmp.eq.s32.totalorder %s35, 0
      %p225 = por %p223, %p224
      %s226 = ssub.s32 %s37, %s44
      %p227 = scmp.eq.s32.totalorder %s226, 0
      %s229 = sadd.s32 %s228, 1
      %s230 = scalar_select %p227, %s228, %s229
      %p233 = pneg %p227
      %p234 = scmp.eq.s32.totalorder %s29, 3
      %p235 = por %p233, %p234
      %p236 = scmp.ne.s32.totalorder %s228, %s231
      %p237 = scmp.eq.s32.totalorder %s29, 0
      %p238 = por %p236, %p237
      %p239 = scmp.ne.s32.totalorder %s228, %s231
      %p240 = scmp.eq.s32.totalorder %s34, 3
      %p241 = por %p239, %p240
      %p242 = scmp.ne.s32.totalorder %s231, %s232
      %p243 = scmp.eq.s32.totalorder %s34, 0
      %p244 = por %p242, %p243
      %p245 = scmp.ne.s32.totalorder %s231, %s232
      %p246 = scmp.eq.s32.totalorder %s35, 3
      %p247 = por %p245, %p246
      %p249 = scmp.ne.s32.totalorder %s232, %s248
      %p250 = scmp.eq.s32.totalorder %s35, 0
      %p251 = por %p249, %p250
      %s252 = ssub.s32 %s37, %s44
      %p253 = scmp.eq.s32.totalorder %s252, 0
      %s255 = sadd.s32 %s254, 1
      %s256 = scalar_select %p253, %s254, %s255
      %p259 = pneg %p253
      %p260 = scmp.eq.s32.totalorder %s29, 3
      %p261 = por %p259, %p260
      %p262 = scmp.ne.s32.totalorder %s254, %s257
      %p263 = scmp.eq.s32.totalorder %s29, 0
      %p264 = por %p262, %p263
      %p265 = scmp.ne.s32.totalorder %s254, %s257
      %p266 = scmp.eq.s32.totalorder %s34, 3
      %p267 = por %p265, %p266
      %p268 = scmp.ne.s32.totalorder %s257, %s258
      %p269 = scmp.eq.s32.totalorder %s34, 0
      %p270 = por %p268, %p269
      %p271 = scmp.ne.s32.totalorder %s257, %s258
      %p272 = scmp.eq.s32.totalorder %s35, 3
      %p273 = por %p271, %p272
      %p275 = scmp.ne.s32.totalorder %s258, %s274
      %p276 = scmp.eq.s32.totalorder %s35, 0
      %p277 = por %p275, %p276
      %s278 = ssub.s32 %s37, %s44
      %p279 = scmp.eq.s32.totalorder %s278, 0
      %s281 = sadd.s32 %s280, 1
      %s282 = scalar_select %p279, %s280, %s281
      %p285 = pneg %p279
      %p286 = scmp.eq.s32.totalorder %s29, 3
      %p287 = por %p285, %p286
      %p288 = scmp.ne.s32.totalorder %s280, %s283
      %p289 = scmp.eq.s32.totalorder %s29, 0
      %p290 = por %p288, %p289
      %p291 = scmp.ne.s32.totalorder %s280, %s283
      %p292 = scmp.eq.s32.totalorder %s34, 3
      %p293 = por %p291, %p292
      %p294 = scmp.ne.s32.totalorder %s283, %s284
      %p295 = scmp.eq.s32.totalorder %s34, 0
      %p296 = por %p294, %p295
      %p297 = scmp.ne.s32.totalorder %s283, %s284
      %p298 = scmp.eq.s32.totalorder %s35, 3
      %p299 = por %p297, %p298
      %p301 = scmp.ne.s32.totalorder %s284, %s300
      %p302 = scmp.eq.s32.totalorder %s35, 0
      %p303 = por %p301, %p302
      %s304 = ssub.s32 %s37, %s44
      %p305 = scmp.eq.s32.totalorder %s304, 0
      %s307 = sadd.s32 %s306, 1
      %s308 = scalar_select %p305, %s306, %s307
      %p311 = pneg %p305
      %p312 = scmp.eq.s32.totalorder %s29, 3
      %p313 = por %p311, %p312
      %p314 = scmp.ne.s32.totalorder %s306, %s309
      %p315 = scmp.eq.s32.totalorder %s29, 0
      %p316 = por %p314, %p315
      %p317 = scmp.ne.s32.totalorder %s306, %s309
      %p318 = scmp.eq.s32.totalorder %s34, 3
      %p319 = por %p317, %p318
      %p320 = scmp.ne.s32.totalorder %s309, %s310
      %p321 = scmp.eq.s32.totalorder %s34, 0
      %p322 = por %p320, %p321
      %p323 = scmp.ne.s32.totalorder %s309, %s310
      %p324 = scmp.eq.s32.totalorder %s35, 3
      %p325 = por %p323, %p324
      %p327 = scmp.ne.s32.totalorder %s310, %s326
      %p328 = scmp.eq.s32.totalorder %s35, 0
      %p329 = por %p327, %p328
      %s330 = ssub.s32 %s37, %s44
      %p331 = scmp.eq.s32.totalorder %s330, 0
      %s333 = sadd.s32 %s332, 1
      %s334 = scalar_select %p331, %s332, %s333
      %p337 = pneg %p331
      %p338 = scmp.eq.s32.totalorder %s29, 3
      %p339 = por %p337, %p338
      %p340 = scmp.ne.s32.totalorder %s332, %s335
      %p341 = scmp.eq.s32.totalorder %s29, 0
      %p342 = por %p340, %p341
      %p343 = scmp.ne.s32.totalorder %s332, %s335
      %p344 = scmp.eq.s32.totalorder %s34, 3
      %p345 = por %p343, %p344
      %p346 = scmp.ne.s32.totalorder %s335, %s336
      %p347 = scmp.eq.s32.totalorder %s34, 0
      %p348 = por %p346, %p347
      %p349 = scmp.ne.s32.totalorder %s335, %s336
      %p350 = scmp.eq.s32.totalorder %s35, 3
      %p351 = por %p349, %p350
      %p353 = scmp.ne.s32.totalorder %s336, %s352
      %p354 = scmp.eq.s32.totalorder %s35, 0
      %p355 = por %p353, %p354
      %s356 = ssub.s32 %s37, %s44
      %p357 = scmp.eq.s32.totalorder %s356, 0
      %s359 = sadd.s32 %s358, 1
      %s360 = scalar_select %p357, %s358, %s359
      %p363 = pneg %p357
      %p364 = scmp.eq.s32.totalorder %s29, 3
      %p365 = por %p363, %p364
      %p366 = scmp.ne.s32.totalorder %s358, %s361
      %p367 = scmp.eq.s32.totalorder %s29, 0
      %p368 = por %p366, %p367
      %p369 = scmp.ne.s32.totalorder %s358, %s361
      %p370 = scmp.eq.s32.totalorder %s34, 3
      %p371 = por %p369, %p370
      %p372 = scmp.ne.s32.totalorder %s361, %s362
      %p373 = scmp.eq.s32.totalorder %s34, 0
      %p374 = por %p372, %p373
      %p375 = scmp.ne.s32.totalorder %s361, %s362
      %p376 = scmp.eq.s32.totalorder %s35, 3
      %p377 = por %p375, %p376
      %p379 = scmp.ne.s32.totalorder %s362, %s378
      %p380 = scmp.eq.s32.totalorder %s35, 0
      %p381 = por %p379, %p380
      %s382 = ssub.s32 %s37, %s44
      %p383 = scmp.eq.s32.totalorder %s382, 0
      %s385 = sadd.s32 %s384, 1
      %s386 = scalar_select %p383, %s384, %s385
      %p389 = pneg %p383
      %p390 = scmp.eq.s32.totalorder %s29, 3
      %p391 = por %p389, %p390
      %p392 = scmp.ne.s32.totalorder %s384, %s387
      %p393 = scmp.eq.s32.totalorder %s29, 0
      %p394 = por %p392, %p393
      %p395 = scmp.ne.s32.totalorder %s384, %s387
      %p396 = scmp.eq.s32.totalorder %s34, 3
      %p397 = por %p395, %p396
      %p398 = scmp.ne.s32.totalorder %s387, %s388
      %p399 = scmp.eq.s32.totalorder %s34, 0
      %p400 = por %p398, %p399
      %p401 = scmp.ne.s32.totalorder %s387, %s388
      %p402 = scmp.eq.s32.totalorder %s35, 3
      %p403 = por %p401, %p402
      %p405 = scmp.ne.s32.totalorder %s388, %s404
      %p406 = scmp.eq.s32.totalorder %s35, 0
      %p407 = por %p405, %p406
      %s409 = sadd.s32 %s408, 1
      %p412 = scmp.eq.s32.totalorder %s29, 3
      %p413 = scmp.ne.s32.totalorder %s408, %s410
      %p414 = scmp.eq.s32.totalorder %s29, 0
      %p415 = por %p413, %p414
      %p416 = scmp.ne.s32.totalorder %s408, %s410
      %p417 = scmp.eq.s32.totalorder %s34, 3
      %p418 = por %p416, %p417
      %p419 = scmp.ne.s32.totalorder %s410, %s411
      %p420 = scmp.eq.s32.totalorder %s34, 0
      %p421 = por %p419, %p420
      %p422 = scmp.ne.s32.totalorder %s410, %s411
      %p423 = scmp.eq.s32.totalorder %s35, 3
      %p424 = por %p422, %p423
      %p426 = scmp.ne.s32.totalorder %s411, %s425
      %p427 = scmp.eq.s32.totalorder %s35, 0
      %p428 = por %p426, %p427
      %s430 = sadd.s32 %s429, 1
      %p433 = scmp.eq.s32.totalorder %s29, 3
      %p434 = scmp.ne.s32.totalorder %s429, %s431
      %p435 = scmp.eq.s32.totalorder %s29, 0
      %p436 = por %p434, %p435
      %p437 = scmp.ne.s32.totalorder %s429, %s431
      %p438 = scmp.eq.s32.totalorder %s34, 3
      %p439 = por %p437, %p438
      %p440 = scmp.ne.s32.totalorder %s431, %s432
      %p441 = scmp.eq.s32.totalorder %s34, 0
      %p442 = por %p440, %p441
      %p443 = scmp.ne.s32.totalorder %s431, %s432
      %p444 = scmp.eq.s32.totalorder %s35, 3
      %p445 = por %p443, %p444
      %p447 = scmp.ne.s32.totalorder %s432, %s446
      %p448 = scmp.eq.s32.totalorder %s35, 0
      %p449 = por %p447, %p448
      %s450 = ssub.s32 %s36, %s48
      %p451 = scmp.eq.s32.totalorder %s450, 0
      %s453 = sadd.s32 %s452, 1
      %s454 = scalar_select %p451, %s452, %s453
      %p457 = pneg %p451
      %p458 = scmp.eq.s32.totalorder %s29, 3
      %p459 = por %p457, %p458
      %p460 = scmp.ne.s32.totalorder %s452, %s455
      %p461 = scmp.eq.s32.totalorder %s29, 0
      %p462 = por %p460, %p461
      %p463 = scmp.ne.s32.totalorder %s452, %s455
      %p464 = scmp.eq.s32.totalorder %s34, 3
      %p465 = por %p463, %p464
      %p466 = scmp.ne.s32.totalorder %s455, %s456
      %p467 = scmp.eq.s32.totalorder %s34, 0
      %p468 = por %p466, %p467
      %p469 = scmp.ne.s32.totalorder %s455, %s456
      %p470 = scmp.eq.s32.totalorder %s35, 3
      %p471 = por %p469, %p470
      %p473 = scmp.ne.s32.totalorder %s456, %s472
      %p474 = scmp.eq.s32.totalorder %s35, 0
      %p475 = por %p473, %p474
      %p476 = scmp.le.s32.totalorder 1, %s29
      %p477 = scmp.lt.s32.totalorder %s29, 5
      %p478 = pnand %p476, %p477
      %p479 = pneg %p478
      // Predicated region
      $region9: #{tpu_custom_call.1} parent=5 // pred_check
        _
      $region10: #{tpu_custom_call.1} parent=5 // pred_check_branch
        %481 = sbr.rel (%p478) target = $region12
      $region11: #{tpu_custom_call.1} parent=5 // pred_region
        %s482 = ssub.s32 %s29, 1
        // Predicated region
        $region13: #{tpu_custom_call.1} parent=11 // pred_check
          %p483 = pneg %p88
        $region14: #{tpu_custom_call.1} parent=11 // pred_check_branch
          %485 = sbr.rel (%p483) target = $region16
        $region15: #{tpu_custom_call.1} parent=11 // pred_region
          %s487 = ssub.s32 256, 256
          %488 = vsyncadd [#allocation7], %s487
          %s489 = sshll.u32 [#allocation6], 4
          %s490 = int_to_ptr.vmem [resolvable:$true] %s489
          %495 = dma.hbm_to_vmem [thread:$0]  %s1, 256, %s490, [#allocation7], 128, 128, 8
        $region16: #{tpu_custom_call.1} parent=11 // pred_fallthru
          _
        // Predicated region
        $region17: #{tpu_custom_call.1} parent=11 // pred_check
          %p496 = pneg %p421
        $region18: #{tpu_custom_call.1} parent=11 // pred_check_branch
          %498 = sbr.rel (%p496) target = $region20
        $region19: #{tpu_custom_call.1} parent=11 // pred_region
          _
        $region20: #{tpu_custom_call.1} parent=11 // pred_fallthru
          _
        // Predicated region
        $region21: #{tpu_custom_call.1} parent=11 // pred_check
          %p499 = pneg %p442
        $region22: #{tpu_custom_call.1} parent=11 // pred_check_branch
          %501 = sbr.rel (%p499) target = $region24
        $region23: #{tpu_custom_call.1} parent=11 // pred_region
          _
        $region24: #{tpu_custom_call.1} parent=11 // pred_fallthru
          _
      $region12: #{tpu_custom_call.1} parent=5 // pred_fallthru
        _
      %p502 = scmp.lt.s32.totalorder %s29, 4
      // Predicated region
      $region25: #{tpu_custom_call.1} parent=5 // pred_check
        %p503 = pneg %p502
      $region26: #{tpu_custom_call.1} parent=5 // pred_check_branch
        %505 = sbr.rel (%p503) target = $region28
      $region27: #{tpu_custom_call.1} parent=5 // pred_region
        // Predicated region
        $region29: #{tpu_custom_call.1} parent=27 // pred_check
          %p506 = pneg %p61
        $region30: #{tpu_custom_call.1} parent=27 // pred_check_branch
          %508 = sbr.rel (%p506) target = $region32
        $region31: #{tpu_custom_call.1} parent=27 // pred_region
          %s509 = sand.u32 %s29, 1
          %s510 = scalar_lea.sflag [#allocation4], %s509
          %s511 = sand.u32 %s51, 1
          %s512 = smul.addr %s511, 32
          %s513 = scalar_lea.vmem [#allocation3], %s512
          %s514 = smul.u32 2, %s36
          %s516 = ssub.s32 512, 512
          %517 = vsyncadd %s510, %s516
          %s518 = smul.addr %s514, 2
          %s519 = smul.addr %s518, 128
          %s520 = scalar_lea.hbm %s0, %s519
          %s521 = sshll.u32 %s513, 4
          %s522 = int_to_ptr.vmem [resolvable:$true] %s521
          %527 = dma.hbm_to_vmem [thread:$0]  %s520, 512, %s522, %s510, 128, 128, 8
        $region32: #{tpu_custom_call.1} parent=27 // pred_fallthru
          _
        // Predicated region
        $region33: #{tpu_custom_call.1} parent=27 // pred_check
          %p528 = pneg %p108
        $region34: #{tpu_custom_call.1} parent=27 // pred_check_branch
          %530 = sbr.rel (%p528) target = $region36
        $region35: #{tpu_custom_call.1} parent=27 // pred_region
          %s531 = sand.u32 %s29, 1
          %s532 = scalar_lea.sflag [#allocation4], %s531
          %s533 = sand.u32 %s98, 1
          %s534 = scalar_lea.vmem [#allocation8], %s533
          %s536 = ssub.s32 16, 16
          %537 = vsyncadd %s532, %s536
          %s538 = smul.addr %s37, 16
          %s539 = scalar_lea.hbm %s2, %s538
          %s541 = sshll.u32 %s534, 4
          %s542 = int_to_ptr.vmem [resolvable:$true] %s541
          %544 = dma.hbm_to_vmem [thread:$0]  %s539, 16, %s542, %s532
        $region36: #{tpu_custom_call.1} parent=27 // pred_fallthru
          _
        // Predicated region
        $region37: #{tpu_custom_call.1} parent=27 // pred_check
          %p545 = pneg %p134
        $region38: #{tpu_custom_call.1} parent=27 // pred_check_branch
          %547 = sbr.rel (%p545) target = $region40
        $region39: #{tpu_custom_call.1} parent=27 // pred_region
          %s548 = sand.u32 %s29, 1
          %s549 = scalar_lea.sflag [#allocation4], %s548
          %s550 = sand.u32 %s124, 1
          %s551 = scalar_lea.vmem [#allocation9], %s550
          %s553 = ssub.s32 16, 16
          %554 = vsyncadd %s549, %s553
          %s555 = smul.addr %s37, 16
          %s556 = scalar_lea.hbm %s3, %s555
          %s558 = sshll.u32 %s551, 4
          %s559 = int_to_ptr.vmem [resolvable:$true] %s558
          %561 = dma.hbm_to_vmem [thread:$0]  %s556, 16, %s559, %s549
        $region40: #{tpu_custom_call.1} parent=27 // pred_fallthru
          _
        // Predicated region
        $region41: #{tpu_custom_call.1} parent=27 // pred_check
          %p562 = pneg %p160
        $region42: #{tpu_custom_call.1} parent=27 // pred_check_branch
          %564 = sbr.rel (%p562) target = $region44
        $region43: #{tpu_custom_call.1} parent=27 // pred_region
          %s565 = sand.u32 %s29, 1
          %s566 = scalar_lea.sflag [#allocation4], %s565
          %s567 = sand.u32 %s150, 1
          %s568 = smul.addr %s567, 192
          %s569 = scalar_lea.vmem [#allocation10], %s568
          %s571 = ssub.s32 3072, 3072
          %572 = vsyncadd %s566, %s571
          %s573 = smul.addr %s37, 48
          %s574 = smul.addr %s573, 64
          %s575 = scalar_lea.hbm %s4, %s574
          %s576 = sshll.u32 %s569, 4
          %s577 = int_to_ptr.vmem [resolvable:$true] %s576
          %582 = dma.hbm_to_vmem [thread:$0]  %s575, 3072, %s577, %s566, 192, 192, 12
        $region44: #{tpu_custom_call.1} parent=27 // pred_fallthru
          _
        // Predicated region
        $region45: #{tpu_custom_call.1} parent=27 // pred_check
          %p583 = pneg %p186
        $region46: #{tpu_custom_call.1} parent=27 // pred_check_branch
          %585 = sbr.rel (%p583) target = $region48
        $region47: #{tpu_custom_call.1} parent=27 // pred_region
          %p586 = scmp.lt.s32.totalorder %s37, 1
          %s587 = scalar_select %p586, %s37, 1
          %s588 = smul.addr %s587, 3
          %s589 = scalar_lea.vmem %s5, %s588
        $region48: #{tpu_custom_call.1} parent=27 // pred_fallthru
          _
        // Predicated region
        $region49: #{tpu_custom_call.1} parent=27 // pred_check
          %p590 = pneg %p212
        $region50: #{tpu_custom_call.1} parent=27 // pred_check_branch
          %592 = sbr.rel (%p590) target = $region52
        $region51: #{tpu_custom_call.1} parent=27 // pred_region
          %s593 = sand.u32 %s29, 1
          %s594 = scalar_lea.sflag [#allocation4], %s593
          %s595 = sand.u32 %s202, 1
          %s596 = smul.addr %s595, 64
          %s597 = scalar_lea.vmem [#allocation11], %s596
          %s599 = ssub.s32 1024, 1024
          %600 = vsyncadd %s594, %s599
          %s601 = smul.addr %s37, 16
          %s602 = smul.addr %s601, 64
          %s603 = scalar_lea.hbm %s6, %s602
          %s604 = sshll.u32 %s597, 4
          %s605 = int_to_ptr.vmem [resolvable:$true] %s604
          %610 = dma.hbm_to_vmem [thread:$0]  %s603, 1024, %s605, %s594, 64, 64, 4
        $region52: #{tpu_custom_call.1} parent=27 // pred_fallthru
          _
        // Predicated region
        $region53: #{tpu_custom_call.1} parent=27 // pred_check
          %p611 = pneg %p238
        $region54: #{tpu_custom_call.1} parent=27 // pred_check_branch
          %613 = sbr.rel (%p611) target = $region56
        $region55: #{tpu_custom_call.1} parent=27 // pred_region
          %p614 = scmp.lt.s32.totalorder %s37, 1
          %s615 = scalar_select %p614, %s37, 1
          %s616 = scalar_lea.vmem %s7, %s615
        $region56: #{tpu_custom_call.1} parent=27 // pred_fallthru
          _
        // Predicated region
        $region57: #{tpu_custom_call.1} parent=27 // pred_check
          %p617 = pneg %p264
        $region58: #{tpu_custom_call.1} parent=27 // pred_check_branch
          %619 = sbr.rel (%p617) target = $region60
        $region59: #{tpu_custom_call.1} parent=27 // pred_region
          %p620 = scmp.lt.s32.totalorder %s37, 1
          %s621 = scalar_select %p620, %s37, 1
          %s622 = scalar_lea.vmem %s8, %s621
        $region60: #{tpu_custom_call.1} parent=27 // pred_fallthru
          _
        // Predicated region
        $region61: #{tpu_custom_call.1} parent=27 // pred_check
          %p623 = pneg %p290
        $region62: #{tpu_custom_call.1} parent=27 // pred_check_branch
          %625 = sbr.rel (%p623) target = $region64
        $region63: #{tpu_custom_call.1} parent=27 // pred_region
          %p626 = scmp.lt.s32.totalorder %s37, 1
          %s627 = scalar_select %p626, %s37, 1
          %s628 = scalar_lea.vmem %s9, %s627
        $region64: #{tpu_custom_call.1} parent=27 // pred_fallthru
          _
        // Predicated region
        $region65: #{tpu_custom_call.1} parent=27 // pred_check
          %p629 = pneg %p316
        $region66: #{tpu_custom_call.1} parent=27 // pred_check_branch
          %631 = sbr.rel (%p629) target = $region68
        $region67: #{tpu_custom_call.1} parent=27 // pred_region
          %s632 = sand.u32 %s29, 1
          %s633 = scalar_lea.sflag [#allocation4], %s632
          %s634 = sand.u32 %s306, 1
          %s635 = smul.addr %s634, 128
          %s636 = scalar_lea.vmem [#allocation12], %s635
          %s638 = ssub.s32 2048, 2048
          %639 = vsyncadd %s633, %s638
          %s640 = smul.addr %s37, 32
          %s641 = smul.addr %s640, 64
          %s642 = scalar_lea.hbm %s10, %s641
          %s643 = sshll.u32 %s636, 4
          %s644 = int_to_ptr.vmem [resolvable:$true] %s643
          %649 = dma.hbm_to_vmem [thread:$0]  %s642, 2048, %s644, %s633, 128, 128, 8
        $region68: #{tpu_custom_call.1} parent=27 // pred_fallthru
          _
        // Predicated region
        $region69: #{tpu_custom_call.1} parent=27 // pred_check
          %p650 = pneg %p342
        $region70: #{tpu_custom_call.1} parent=27 // pred_check_branch
          %652 = sbr.rel (%p650) target = $region72
        $region71: #{tpu_custom_call.1} parent=27 // pred_region
          %p653 = scmp.lt.s32.totalorder %s37, 1
          %s654 = scalar_select %p653, %s37, 1
          %s655 = smul.addr %s654, 2
          %s656 = scalar_lea.vmem %s11, %s655
        $region72: #{tpu_custom_call.1} parent=27 // pred_fallthru
          _
        // Predicated region
        $region73: #{tpu_custom_call.1} parent=27 // pred_check
          %p657 = pneg %p368
        $region74: #{tpu_custom_call.1} parent=27 // pred_check_branch
          %659 = sbr.rel (%p657) target = $region76
        $region75: #{tpu_custom_call.1} parent=27 // pred_region
          %s660 = sand.u32 %s29, 1
          %s661 = scalar_lea.sflag [#allocation4], %s660
          %s662 = sand.u32 %s358, 1
          %s663 = smul.addr %s662, 128
          %s664 = scalar_lea.vmem [#allocation13], %s663
          %s666 = ssub.s32 2048, 2048
          %667 = vsyncadd %s661, %s666
          %s668 = smul.addr %s37, 32
          %s669 = smul.addr %s668, 64
          %s670 = scalar_lea.hbm %s12, %s669
          %s671 = sshll.u32 %s664, 4
          %s672 = int_to_ptr.vmem [resolvable:$true] %s671
          %677 = dma.hbm_to_vmem [thread:$0]  %s670, 2048, %s672, %s661, 64, 64, 4
        $region76: #{tpu_custom_call.1} parent=27 // pred_fallthru
          _
        // Predicated region
        $region77: #{tpu_custom_call.1} parent=27 // pred_check
          %p678 = pneg %p394
        $region78: #{tpu_custom_call.1} parent=27 // pred_check_branch
          %680 = sbr.rel (%p678) target = $region80
        $region79: #{tpu_custom_call.1} parent=27 // pred_region
          %p681 = scmp.lt.s32.totalorder %s37, 1
          %s682 = scalar_select %p681, %s37, 1
          %s683 = scalar_lea.vmem %s13, %s682
        $region80: #{tpu_custom_call.1} parent=27 // pred_fallthru
          _
      $region28: #{tpu_custom_call.1} parent=5 // pred_fallthru
        _
      %p684 = scmp.le.s32.totalorder 1, %s29
      %p685 = scmp.lt.s32.totalorder %s29, 5
      %p686 = pnand %p684, %p685
      %p687 = pneg %p686
      // Predicated region
      $region81: #{tpu_custom_call.1} parent=5 // pred_check
        _
      $region82: #{tpu_custom_call.1} parent=5 // pred_check_branch
        %689 = sbr.rel (%p686) target = $region84
      $region83: #{tpu_custom_call.1} parent=5 // pred_region
        %s690 = ssub.s32 %s29, 1
        %s691 = sand.u32 %s34, 1
        %s692 = scalar_lea.sflag [#allocation4], %s691
        %s693 = sand.u32 %s54, 1
        %s694 = smul.addr %s693, 32
        %s695 = scalar_lea.vmem [#allocation3], %s694
        // Predicated region
        $region85: #{tpu_custom_call.1} parent=83 // pred_check
          %p696 = pneg %p67
        $region86: #{tpu_custom_call.1} parent=83 // pred_check_branch
          %698 = sbr.rel (%p696) target = $region88
        $region87: #{tpu_custom_call.1} parent=83 // pred_region
          %699 = dma.done %s692, 512
        $region88: #{tpu_custom_call.1} parent=83 // pred_fallthru
          _
        // Predicated region
        $region89: #{tpu_custom_call.1} parent=83 // pred_check
          %p700 = pneg %p88
        $region90: #{tpu_custom_call.1} parent=83 // pred_check_branch
          %702 = sbr.rel (%p700) target = $region92
        $region91: #{tpu_custom_call.1} parent=83 // pred_region
          %703 = dma.done [#allocation7], 256
        $region92: #{tpu_custom_call.1} parent=83 // pred_fallthru
          _
        %s704 = sand.u32 %s34, 1
        %s705 = scalar_lea.sflag [#allocation4], %s704
        %s706 = sand.u32 %s101, 1
        %s707 = scalar_lea.vmem [#allocation8], %s706
        // Predicated region
        $region93: #{tpu_custom_call.1} parent=83 // pred_check
          %p708 = pneg %p114
        $region94: #{tpu_custom_call.1} parent=83 // pred_check_branch
          %710 = sbr.rel (%p708) target = $region96
        $region95: #{tpu_custom_call.1} parent=83 // pred_region
          %711 = dma.done %s705, 16
        $region96: #{tpu_custom_call.1} parent=83 // pred_fallthru
          _
        %s712 = sand.u32 %s34, 1
        %s713 = scalar_lea.sflag [#allocation4], %s712
        %s714 = sand.u32 %s127, 1
        %s715 = scalar_lea.vmem [#allocation9], %s714
        // Predicated region
        $region97: #{tpu_custom_call.1} parent=83 // pred_check
          %p716 = pneg %p140
        $region98: #{tpu_custom_call.1} parent=83 // pred_check_branch
          %718 = sbr.rel (%p716) target = $region100
        $region99: #{tpu_custom_call.1} parent=83 // pred_region
          %719 = dma.done %s713, 16
        $region100: #{tpu_custom_call.1} parent=83 // pred_fallthru
          _
        %s720 = sand.u32 %s34, 1
        %s721 = scalar_lea.sflag [#allocation4], %s720
        %s722 = sand.u32 %s153, 1
        %s723 = smul.addr %s722, 192
        %s724 = scalar_lea.vmem [#allocation10], %s723
        // Predicated region
        $region101: #{tpu_custom_call.1} parent=83 // pred_check
          %p725 = pneg %p166
        $region102: #{tpu_custom_call.1} parent=83 // pred_check_branch
          %727 = sbr.rel (%p725) target = $region104
        $region103: #{tpu_custom_call.1} parent=83 // pred_region
          %728 = dma.done %s721, 3072
        $region104: #{tpu_custom_call.1} parent=83 // pred_fallthru
          _
        %s729 = sand.u32 %s34, 1
        %s730 = scalar_lea.sflag [#allocation4], %s729
        %s731 = sand.u32 %s205, 1
        %s732 = smul.addr %s731, 64
        %s733 = scalar_lea.vmem [#allocation11], %s732
        // Predicated region
        $region105: #{tpu_custom_call.1} parent=83 // pred_check
          %p734 = pneg %p218
        $region106: #{tpu_custom_call.1} parent=83 // pred_check_branch
          %736 = sbr.rel (%p734) target = $region108
        $region107: #{tpu_custom_call.1} parent=83 // pred_region
          %737 = dma.done %s730, 1024
        $region108: #{tpu_custom_call.1} parent=83 // pred_fallthru
          _
        %s738 = sand.u32 %s34, 1
        %s739 = scalar_lea.sflag [#allocation4], %s738
        %s740 = sand.u32 %s309, 1
        %s741 = smul.addr %s740, 128
        %s742 = scalar_lea.vmem [#allocation12], %s741
        // Predicated region
        $region109: #{tpu_custom_call.1} parent=83 // pred_check
          %p743 = pneg %p322
        $region110: #{tpu_custom_call.1} parent=83 // pred_check_branch
          %745 = sbr.rel (%p743) target = $region112
        $region111: #{tpu_custom_call.1} parent=83 // pred_region
          %746 = dma.done %s739, 2048
        $region112: #{tpu_custom_call.1} parent=83 // pred_fallthru
          _
        %s747 = sand.u32 %s34, 1
        %s748 = scalar_lea.sflag [#allocation4], %s747
        %s749 = sand.u32 %s361, 1
        %s750 = smul.addr %s749, 128
        %s751 = scalar_lea.vmem [#allocation13], %s750
        // Predicated region
        $region113: #{tpu_custom_call.1} parent=83 // pred_check
          %p752 = pneg %p374
        $region114: #{tpu_custom_call.1} parent=83 // pred_check_branch
          %754 = sbr.rel (%p752) target = $region116
        $region115: #{tpu_custom_call.1} parent=83 // pred_region
          %755 = dma.done %s748, 2048
        $region116: #{tpu_custom_call.1} parent=83 // pred_fallthru
          _
        %s756 = sand.u32 %s34, 1
        %s757 = scalar_lea.sflag [#allocation4], %s756
        %s758 = sand.u32 %s54, 1
        %s759 = smul.addr %s758, 32
        %s760 = scalar_lea.vmem [#allocation3], %s759
        %p761 = pneg %p67
        %p762 = pneg %p64
        %p763 = pneg %p88
        %p764 = pneg %p85
        %s765 = sand.u32 %s34, 1
        %s766 = scalar_lea.sflag [#allocation4], %s765
        %s767 = sand.u32 %s101, 1
        %s768 = scalar_lea.vmem [#allocation8], %s767
        %p769 = pneg %p114
        %p770 = pneg %p111
        %s771 = sand.u32 %s34, 1
        %s772 = scalar_lea.sflag [#allocation4], %s771
        %s773 = sand.u32 %s127, 1
        %s774 = scalar_lea.vmem [#allocation9], %s773
        %p775 = pneg %p140
        %p776 = pneg %p137
        %s777 = sand.u32 %s34, 1
        %s778 = scalar_lea.sflag [#allocation4], %s777
        %s779 = sand.u32 %s153, 1
        %s780 = smul.addr %s779, 192
        %s781 = scalar_lea.vmem [#allocation10], %s780
        %p782 = pneg %p166
        %p783 = pneg %p163
        %p784 = scmp.lt.s32.totalorder %s39, 1
        %s785 = scalar_select %p784, %s39, 1
        %s786 = smul.addr %s785, 3
        %s787 = scalar_lea.vmem %s5, %s786
        %p788 = pneg %p192
        %p789 = pneg %p189
        %s790 = sand.u32 %s34, 1
        %s791 = scalar_lea.sflag [#allocation4], %s790
        %s792 = sand.u32 %s205, 1
        %s793 = smul.addr %s792, 64
        %s794 = scalar_lea.vmem [#allocation11], %s793
        %p795 = pneg %p218
        %p796 = pneg %p215
        %p797 = scmp.lt.s32.totalorder %s39, 1
        %s798 = scalar_select %p797, %s39, 1
        %s799 = scalar_lea.vmem %s7, %s798
        %p800 = pneg %p244
        %p801 = pneg %p241
        %p802 = scmp.lt.s32.totalorder %s39, 1
        %s803 = scalar_select %p802, %s39, 1
        %s804 = scalar_lea.vmem %s8, %s803
        %p805 = pneg %p270
        %p806 = pneg %p267
        %p807 = scmp.lt.s32.totalorder %s39, 1
        %s808 = scalar_select %p807, %s39, 1
        %s809 = scalar_lea.vmem %s9, %s808
        %p810 = pneg %p296
        %p811 = pneg %p293
        %s812 = sand.u32 %s34, 1
        %s813 = scalar_lea.sflag [#allocation4], %s812
        %s814 = sand.u32 %s309, 1
        %s815 = smul.addr %s814, 128
        %s816 = scalar_lea.vmem [#allocation12], %s815
        %p817 = pneg %p322
        %p818 = pneg %p319
        %p819 = scmp.lt.s32.totalorder %s39, 1
        %s820 = scalar_select %p819, %s39, 1
        %s821 = smul.addr %s820, 2
        %s822 = scalar_lea.vmem %s11, %s821
        %p823 = pneg %p348
        %p824 = pneg %p345
        %s825 = sand.u32 %s34, 1
        %s826 = scalar_lea.sflag [#allocation4], %s825
        %s827 = sand.u32 %s361, 1
        %s828 = smul.addr %s827, 128
        %s829 = scalar_lea.vmem [#allocation13], %s828
        %p830 = pneg %p374
        %p831 = pneg %p371
        %p832 = scmp.lt.s32.totalorder %s39, 1
        %s833 = scalar_select %p832, %s39, 1
        %s834 = scalar_lea.vmem %s13, %s833
        %p835 = pneg %p400
        %p836 = pneg %p397
        %p837 = pneg %p421
        %p838 = pneg %p418
        %p839 = pneg %p442
        %p840 = pneg %p439
        %p841 = pneg %p468
        %p842 = pneg %p465
        %s843 = sand.u32 %s455, 1
        %s844 = scalar_lea.sflag [#allocation5], %s843
        %s845 = sand.u32 %s455, 1
        %s846 = smul.addr %s845, 32
        %s847 = scalar_lea.vmem [#allocation14], %s846
        %s848 = smul.u32 2, %s38
        %p849 = scmp.lt.s32.totalorder %s39, 1
        %s850 = scalar_select %p849, %s39, 1
        %s851 = smul.addr %s850, 3
        %s852 = scalar_lea.vmem %s5, %s851
        %p853 = scmp.lt.s32.totalorder %s39, 1
        %s854 = scalar_select %p853, %s39, 1
        %s855 = scalar_lea.vmem %s7, %s854
        %p856 = scmp.lt.s32.totalorder %s39, 1
        %s857 = scalar_select %p856, %s39, 1
        %s858 = scalar_lea.vmem %s8, %s857
        %p859 = scmp.lt.s32.totalorder %s39, 1
        %s860 = scalar_select %p859, %s39, 1
        %s861 = scalar_lea.vmem %s9, %s860
        %p862 = scmp.lt.s32.totalorder %s39, 1
        %s863 = scalar_select %p862, %s39, 1
        %s864 = smul.addr %s863, 2
        %s865 = scalar_lea.vmem %s11, %s864
        %p866 = scmp.lt.s32.totalorder %s39, 1
        %s867 = scalar_select %p866, %s39, 1
        %s868 = scalar_lea.vmem %s13, %s867
        %s869 = smul.u32 2, %s38
        %p871 = scmp.eq.s32.totalorder %s39, 0
        // Predicated region
        $region117: #{tpu_custom_call.1} parent=83 // pred_check
          %p872 = pneg %p871
        $region118: #{tpu_custom_call.1} parent=83 // pred_check_branch
          %874 = sbr.rel (%p872) target = $region120
        $region119: #{tpu_custom_call.1} parent=83 // pred_region
          %v875 = vld [vmem:[%s695] sm:$0xff]
          %v876 = vld [vmem:[%s695 + $0x8] sm:$0xff]
          %v877 = vld [vmem:[%s695 + $0x10] sm:$0xff]
          %v878 = vld [vmem:[%s695 + $0x18] sm:$0xff]
          %v879 = vld [vmem:[#allocation6] sm:$0xff]
          %v880 = vld [vmem:[#allocation6 + $0x8] sm:$0xff]
          %v881 = vadd.f32 %v875, %v879
          %v882 = vadd.f32 %v876, %v880
          %v883 = vadd.f32 %v877, %v879
          %v884 = vadd.f32 %v878, %v880
          %885 = vst [vmem:[#allocation2] sm:$0xff] %v881
          %886 = vst [vmem:[#allocation2 + $0x8] sm:$0xff] %v882
          %887 = vst [vmem:[#allocation2 + $0x10] sm:$0xff] %v883
          %888 = vst [vmem:[#allocation2 + $0x18] sm:$0xff] %v884
        $region120: #{tpu_custom_call.1} parent=83 // pred_fallthru
          _
        %v889 = vld [vmem:[#allocation2] sm:$0xff]
        %v890 = vld [vmem:[#allocation2 + $0x8] sm:$0xff]
        %v891 = vld [vmem:[#allocation2 + $0x10] sm:$0xff]
        %v892 = vld [vmem:[#allocation2 + $0x18] sm:$0xff]
        %v893 = vld [vmem:[%s707] sm:$0x1]
        %v894 = vld [vmem:[%s715] sm:$0x1]
        %895 = vadd.xlane.f32.xlu0 %v889
        %v896 = vpop.xlane.xlu0 %895
        %897 = vadd.xlane.f32.xlu0 %v890
        %v898 = vpop.xlane.xlu0 %897
        %899 = vadd.xlane.f32.xlu0 %v891
        %v900 = vpop.xlane.xlu0 %899
        %901 = vadd.xlane.f32.xlu0 %v892
        %v902 = vpop.xlane.xlu0 %901
        %v903 = vrcp.pop 128.0
        %v904 = vmul.f32 %v896, %v903
        %v905 = vmul.f32 %v898, %v903
        %v906 = vmul.f32 %v900, %v903
        %v907 = vmul.f32 %v902, %v903
        %v908 = vsub.f32 %v889, %v904
        %v909 = vsub.f32 %v890, %v905
        %v910 = vsub.f32 %v891, %v906
        %v911 = vsub.f32 %v892, %v907
        %v912 = vmul.f32 %v908, %v908
        %v913 = vmul.f32 %v909, %v909
        %v914 = vmul.f32 %v910, %v910
        %v915 = vmul.f32 %v911, %v911
        %916 = vadd.xlane.f32.xlu0 %v912
        %v917 = vpop.xlane.xlu0 %916
        %918 = vadd.xlane.f32.xlu0 %v913
        %v919 = vpop.xlane.xlu0 %918
        %920 = vadd.xlane.f32.xlu0 %v914
        %v921 = vpop.xlane.xlu0 %920
        %922 = vadd.xlane.f32.xlu0 %v915
        %v923 = vpop.xlane.xlu0 %922
        %v924 = vmul.f32 %v917, %v903
        %v925 = vmul.f32 %v919, %v903
        %v926 = vmul.f32 %v921, %v903
        %v927 = vmul.f32 %v923, %v903
        %v928 = vadd.f32 %v924, 1e-05
        %v929 = vadd.f32 %v925, 1e-05
        %v930 = vadd.f32 %v926, 1e-05
        %v931 = vadd.f32 %v927, 1e-05
        %v932 = vrsqrt.pop %v928
        %v933 = vrsqrt.pop %v929
        %v934 = vrsqrt.pop %v930
        %v935 = vrsqrt.pop %v931
        %v936 = vmul.f32 %v908, %v932
        %v937 = vmul.f32 %v909, %v933
        %v938 = vmul.f32 %v910, %v934
        %v939 = vmul.f32 %v911, %v935
        %v941 = vlaneseq
        %v942 = vshrl.u32 %v941, 7
        %v943 = vsub.s32 0, %v942
        %v944 = vrot.slane %v893, %v943
        %v946 = vmul.f32 %v936, %v944
        %v947 = vmul.f32 %v937, %v944
        %v948 = vmul.f32 %v938, %v944
        %v949 = vmul.f32 %v939, %v944
        %v951 = vlaneseq
        %v952 = vshrl.u32 %v951, 7
        %v953 = vsub.s32 0, %v952
        %v954 = vrot.slane %v894, %v953
        %v956 = vadd.f32 %v946, %v954
        %v957 = vadd.f32 %v947, %v954
        %v958 = vadd.f32 %v948, %v954
        %v959 = vadd.f32 %v949, %v954
        %v960 = vld [vmem:[%s724] sm:$0xff]
        %v961 = vld [vmem:[%s724 + $0x8] sm:$0xf]
        %v962 = vld [vmem:[%s724 + $0xc] sm:$0xff]
        %v963 = vld [vmem:[%s724 + $0x14] sm:$0xf]
        %v964 = vld [vmem:[%s724 + $0x18] sm:$0xff]
        %v965 = vld [vmem:[%s724 + $0x20] sm:$0xf]
        %v966 = vld [vmem:[%s724 + $0x24] sm:$0xff]
        %v967 = vld [vmem:[%s724 + $0x2c] sm:$0xf]
        %v968 = vld [vmem:[%s724 + $0x30] sm:$0xff]
        %v969 = vld [vmem:[%s724 + $0x38] sm:$0xf]
        %v970 = vld [vmem:[%s724 + $0x3c] sm:$0xff]
        %v971 = vld [vmem:[%s724 + $0x44] sm:$0xf]
        %v972 = vld [vmem:[%s724 + $0x48] sm:$0xff]
        %v973 = vld [vmem:[%s724 + $0x50] sm:$0xf]
        %v974 = vld [vmem:[%s724 + $0x54] sm:$0xff]
        %v975 = vld [vmem:[%s724 + $0x5c] sm:$0xf]
        %v976 = vld [vmem:[%s724 + $0x60] sm:$0xff]
        %v977 = vld [vmem:[%s724 + $0x68] sm:$0xf]
        %v978 = vld [vmem:[%s724 + $0x6c] sm:$0xff]
        %v979 = vld [vmem:[%s724 + $0x74] sm:$0xf]
        %v980 = vld [vmem:[%s724 + $0x78] sm:$0xff]
        %v981 = vld [vmem:[%s724 + $0x80] sm:$0xf]
        %v982 = vld [vmem:[%s724 + $0x84] sm:$0xff]
        %v983 = vld [vmem:[%s724 + $0x8c] sm:$0xf]
        %v984 = vld [vmem:[%s724 + $0x90] sm:$0xff]
        %v985 = vld [vmem:[%s724 + $0x98] sm:$0xf]
        %v986 = vld [vmem:[%s724 + $0x9c] sm:$0xff]
        %v987 = vld [vmem:[%s724 + $0xa4] sm:$0xf]
        %v988 = vld [vmem:[%s724 + $0xa8] sm:$0xff]
        %v989 = vld [vmem:[%s724 + $0xb0] sm:$0xf]
        %v990 = vld [vmem:[%s724 + $0xb4] sm:$0xff]
        %v991 = vld [vmem:[%s724 + $0xbc] sm:$0xf]
        %v992 = vpack.c.bf16 %v957, %v956
        %v993 = vpack.c.bf16 %v959, %v958
        %v994 = vld [vmem:[%s852] sm:$0x7]
        %v996 = vlaneseq
        %v997 = vshrl.u32 %v996, 7
        %v998 = vsub.s32 0, %v997
        %v999 = vrot.slane %v994, %v998
        %v1000 = vlaneseq
        %v1001 = vshrl.u32 %v1000, 7
        %v1002 = vsub.s32 1, %v1001
        %v1003 = vrot.slane %v994, %v1002
        %v1004 = vlaneseq
        %v1005 = vshrl.u32 %v1004, 7
        %v1006 = vsub.s32 2, %v1005
        %v1007 = vrot.slane %v994, %v1006
        %v1043 = vunpack.c.l.b16 %v960
        %v1044 = vunpack.c.h.b16 %v960
        %v1045 = vunpack.c.l.b16 %v961
        %v1046 = vunpack.c.l.b16 %v962
        %v1047 = vunpack.c.h.b16 %v962
        %v1048 = vunpack.c.l.b16 %v963
        %v1049 = vunpack.c.l.b16 %v964
        %v1050 = vunpack.c.h.b16 %v964
        %v1051 = vunpack.c.l.b16 %v965
        %v1052 = vunpack.c.l.b16 %v966
        %v1053 = vunpack.c.h.b16 %v966
        %v1054 = vunpack.c.l.b16 %v967
        %v1055 = vunpack.c.l.b16 %v968
        %v1056 = vunpack.c.h.b16 %v968
        %v1057 = vunpack.c.l.b16 %v969
        %v1058 = vunpack.c.l.b16 %v970
        %v1059 = vunpack.c.h.b16 %v970
        %v1060 = vunpack.c.l.b16 %v971
        %v1061 = vunpack.c.l.b16 %v972
        %v1062 = vunpack.c.h.b16 %v972
        %v1063 = vunpack.c.l.b16 %v973
        %v1064 = vunpack.c.l.b16 %v974
        %v1065 = vunpack.c.h.b16 %v974
        %v1066 = vunpack.c.l.b16 %v975
        %v1067 = vunpack.c.l.b16 %v976
        %v1068 = vunpack.c.h.b16 %v976
        %v1069 = vunpack.c.l.b16 %v977
        %v1070 = vunpack.c.l.b16 %v978
        %v1071 = vunpack.c.h.b16 %v978
        %v1072 = vunpack.c.l.b16 %v979
        %v1073 = vunpack.c.l.b16 %v980
        %v1074 = vunpack.c.h.b16 %v980
        %v1075 = vunpack.c.l.b16 %v981
        %v1076 = vunpack.c.l.b16 %v982
        %v1077 = vunpack.c.h.b16 %v982
        %v1078 = vunpack.c.l.b16 %v983
        %v1079 = vunpack.c.l.b16 %v984
        %v1080 = vunpack.c.h.b16 %v984
        %v1081 = vunpack.c.l.b16 %v985
        %v1082 = vunpack.c.l.b16 %v986
        %v1083 = vunpack.c.h.b16 %v986
        %v1084 = vunpack.c.l.b16 %v987
        %v1085 = vunpack.c.l.b16 %v988
        %v1086 = vunpack.c.h.b16 %v988
        %v1087 = vunpack.c.l.b16 %v989
        %v1088 = vunpack.c.l.b16 %v990
        %v1089 = vunpack.c.h.b16 %v990
        %v1090 = vunpack.c.l.b16 %v991
        %v1091 = vpack.c.b16 %v1046, %v1043
        %v1092 = vpack.c.b16 %v1047, %v1044
        %v1093 = vpack.c.b16 %v1048, %v1045
        %v1094 = vpack.c.b16 %v1052, %v1049
        %v1095 = vpack.c.b16 %v1053, %v1050
        %v1096 = vpack.c.b16 %v1054, %v1051
        %v1097 = vpack.c.b16 %v1058, %v1055
        %v1098 = vpack.c.b16 %v1059, %v1056
        %v1099 = vpack.c.b16 %v1060, %v1057
        %v1100 = vpack.c.b16 %v1064, %v1061
        %v1101 = vpack.c.b16 %v1065, %v1062
        %v1102 = vpack.c.b16 %v1066, %v1063
        %v1103 = vpack.c.b16 %v1070, %v1067
        %v1104 = vpack.c.b16 %v1071, %v1068
        %v1105 = vpack.c.b16 %v1072, %v1069
        %v1106 = vpack.c.b16 %v1076, %v1073
        %v1107 = vpack.c.b16 %v1077, %v1074
        %v1108 = vpack.c.b16 %v1078, %v1075
        %v1109 = vpack.c.b16 %v1082, %v1079
        %v1110 = vpack.c.b16 %v1083, %v1080
        %v1111 = vpack.c.b16 %v1084, %v1081
        %v1112 = vpack.c.b16 %v1088, %v1085
        %v1113 = vpack.c.b16 %v1089, %v1086
        %v1114 = vpack.c.b16 %v1090, %v1087
        %1139 = vmatprep.subr.bf16.mxu0 %v1092
        %1140 = vmatpush1.bf16.msra.mxu0 %v1091
        %1141 = vmatprep.subr.bf16.mxu0 %v1095
        %1142 = vmatpush1.bf16.msra.mxu0 %v1094
        %1143 = vmatprep.subr.bf16.mxu0 %v1098
        %1144 = vmatpush1.bf16.msra.mxu0 %v1097
        %1145 = vmatprep.subr.bf16.mxu0 %v1101
        %1146 = vmatpush1.bf16.msra.mxu0 %v1100
        %1147 = vmatprep.subr.bf16.mxu0 %v1104
        %1148 = vmatpush1.bf16.msra.mxu0 %v1103
        %1149 = vmatprep.subr.bf16.mxu0 %v1107
        %1150 = vmatpush1.bf16.msra.mxu0 %v1106
        %1151 = vmatprep.subr.bf16.mxu0 %v1110
        %1152 = vmatpush1.bf16.msra.mxu0 %v1109
        %1153 = vmatprep.subr.bf16.mxu0 %v1113
        %1154 = vmatpush1.bf16.msra.mxu0 %v1112
        %1155 = vmatprep.subr.bf16.mxu0 0
        %1156 = vmatpush1.bf16.msra.mxu0 0
        %1157 = vmatprep.subr.bf16.mxu0 0
        %1158 = vmatpush1.bf16.msra.mxu0 0
        %1159 = vmatprep.subr.bf16.mxu0 0
        %1160 = vmatpush1.bf16.msra.mxu0 0
        %1161 = vmatprep.subr.bf16.mxu0 0
        %1162 = vmatpush1.bf16.msra.mxu0 0
        %1163 = vmatprep.subr.bf16.mxu0 0
        %1164 = vmatpush1.bf16.msra.mxu0 0
        %1165 = vmatprep.subr.bf16.mxu0 0
        %1166 = vmatpush1.bf16.msra.mxu0 0
        %1167 = vmatprep.subr.bf16.mxu0 0
        %1168 = vmatpush1.bf16.msra.mxu0 0
        %1169 = vmatprep.subr.bf16.mxu0 0
        %1170 = vmatpush1.bf16.msra.mxu0 0
        %1171 = vmatprep.mubr.bf16.mxu0 0
        %1172 = vmatmul.mubr.bf16.gmra.mrb[0].mxu0 %v992
        %v1173 = vpop.f32.mrb[0].mxu0
        %v1174 = vadd.f32 %v999, %v1173
        %v1175 = vpop.f32.mrb[0].mxu0
        %v1176 = vadd.f32 %v1003, %v1175
        %v1177 = vpop.f32.mrb[0].mxu0
        %v1178 = vadd.f32 %v999, %v1177
        %v1179 = vpop.f32.mrb[0].mxu0
        %v1180 = vadd.f32 %v1003, %v1179
        %1181 = vmatprep.mubr.bf16.mxu0 0
        %1182 = vmatmul.mubr.bf16.gmra.mrb[0].mxu0 %v993
        %v1183 = vpop.f32.mrb[0].mxu0
        %v1184 = vadd.f32 %v999, %v1183
        %v1185 = vpop.f32.mrb[0].mxu0
        %v1186 = vadd.f32 %v1003, %v1185
        %v1187 = vpop.f32.mrb[0].mxu0
        %v1188 = vadd.f32 %v999, %v1187
        %v1189 = vpop.f32.mrb[0].mxu0
        %v1190 = vadd.f32 %v1003, %v1189
        %1191 = vdwg.mxu0
        %1192 = vmatprep.subr.bf16.mxu0 0
        %1193 = vmatpush1.bf16.msra.mxu0 %v1093
        %1194 = vmatprep.subr.bf16.mxu0 0
        %1195 = vmatpush1.bf16.msra.mxu0 %v1096
        %1196 = vmatprep.subr.bf16.mxu0 0
        %1197 = vmatpush1.bf16.msra.mxu0 %v1099
        %1198 = vmatprep.subr.bf16.mxu0 0
        %1199 = vmatpush1.bf16.msra.mxu0 %v1102
        %1200 = vmatprep.subr.bf16.mxu0 0
        %1201 = vmatpush1.bf16.msra.mxu0 %v1105
        %1202 = vmatprep.subr.bf16.mxu0 0
        %1203 = vmatpush1.bf16.msra.mxu0 %v1108
        %1204 = vmatprep.subr.bf16.mxu0 0
        %1205 = vmatpush1.bf16.msra.mxu0 %v1111
        %1206 = vmatprep.subr.bf16.mxu0 0
        %1207 = vmatpush1.bf16.msra.mxu0 %v1114
        %1208 = vmatprep.subr.bf16.mxu0 0
        %1209 = vmatpush1.bf16.msra.mxu0 0
        %1210 = vmatprep.subr.bf16.mxu0 0
        %1211 = vmatpush1.bf16.msra.mxu0 0
        %1212 = vmatprep.subr.bf16.mxu0 0
        %1213 = vmatpush1.bf16.msra.mxu0 0
        %1214 = vmatprep.subr.bf16.mxu0 0
        %1215 = vmatpush1.bf16.msra.mxu0 0
        %1216 = vmatprep.subr.bf16.mxu0 0
        %1217 = vmatpush1.bf16.msra.mxu0 0
        %1218 = vmatprep.subr.bf16.mxu0 0
        %1219 = vmatpush1.bf16.msra.mxu0 0
        %1220 = vmatprep.subr.bf16.mxu0 0
        %1221 = vmatpush1.bf16.msra.mxu0 0
        %1222 = vmatprep.subr.bf16.mxu0 0
        %1223 = vmatpush1.bf16.msra.mxu0 0
        %1224 = vmatprep.mubr.bf16.mxu0 0
        %1225 = vmatmul.mubr.bf16.gmra.mrb[0].mxu0 %v992
        %v1226 = vpop.f32.mrb[0].mxu0
        %v1227 = vadd.f32 %v1007, %v1226
        %v1228 = vpop.f32.mrb[0].mxu0
        %v1229 = vpop.f32.mrb[0].mxu0
        %v1230 = vadd.f32 %v1007, %v1229
        %v1231 = vpop.f32.mrb[0].mxu0
        %1232 = vmatprep.mubr.bf16.mxu0 0
        %1233 = vmatmul.mubr.bf16.gmra.mrb[0].mxu0 %v993
        %v1234 = vpop.f32.mrb[0].mxu0
        %v1235 = vadd.f32 %v1007, %v1234
        %v1236 = vpop.f32.mrb[0].mxu0
        %v1237 = vpop.f32.mrb[0].mxu0
        %v1238 = vadd.f32 %v1007, %v1237
        %v1239 = vpop.f32.mrb[0].mxu0
        %1240 = vdwg.mxu0
        %v1241 = vpack.c.bf16 %v1178, %v1174
        %v1242 = vpack.c.bf16 %v1188, %v1184
        %v1243 = vpack.c.bf16 %v1180, %v1176
        %v1244 = vpack.c.bf16 %v1190, %v1186
        %vm1245 = vcmask 261120
        %v1247 = vsel %vm1245, %v1241, 0
        %v1250 = vsel %vm1245, %v1243, 0
        %1252 = vmatprep.subr.bf16.mxu0 0
        %1253 = vmatpush1.bf16.xpose.msra.mxu0 %v1250
        %1254 = vmatprep.subr.bf16.mxu0 0
        %1255 = vmatpush1.bf16.xpose.msra.mxu0 0
        %1256 = vmatprep.subr.bf16.mxu0 0
        %1257 = vmatpush1.bf16.xpose.msra.mxu0 0
        %1258 = vmatprep.subr.bf16.mxu0 0
        %1259 = vmatpush1.bf16.xpose.msra.mxu0 0
        %1260 = vmatprep.subr.bf16.mxu0 0
        %1261 = vmatpush1.bf16.xpose.msra.mxu0 0
        %1262 = vmatprep.subr.bf16.mxu0 0
        %1263 = vmatpush1.bf16.xpose.msra.mxu0 0
        %1264 = vmatprep.subr.bf16.mxu0 0
        %1265 = vmatpush1.bf16.xpose.msra.mxu0 0
        %1266 = vmatprep.subr.bf16.mxu0 0
        %1267 = vmatpush1.bf16.xpose.msra.mxu0 0
        %1268 = vmatprep.subr.bf16.mxu0 0
        %1269 = vmatpush1.bf16.xpose.msra.mxu0 0
        %1270 = vmatprep.subr.bf16.mxu0 0
        %1271 = vmatpush1.bf16.xpose.msra.mxu0 0
        %1272 = vmatprep.subr.bf16.mxu0 0
        %1273 = vmatpush1.bf16.xpose.msra.mxu0 0
        %1274 = vmatprep.subr.bf16.mxu0 0
        %1275 = vmatpush1.bf16.xpose.msra.mxu0 0
        %1276 = vmatprep.subr.bf16.mxu0 0
        %1277 = vmatpush1.bf16.xpose.msra.mxu0 0
        %1278 = vmatprep.subr.bf16.mxu0 0
        %1279 = vmatpush1.bf16.xpose.msra.mxu0 0
        %1280 = vmatprep.subr.bf16.mxu0 0
        %1281 = vmatpush1.bf16.xpose.msra.mxu0 0
        %1282 = vmatprep.subr.bf16.mxu0 0
        %1283 = vmatpush1.bf16.xpose.msra.mxu0 0
        %1284 = vmatprep.mubr.bf16.mxu0 0
        %1285 = vmatmul.mubr.bf16.gmra.mrb[0].mxu0 %v1247
        %v1286 = vpop.f32.mrb[0].mxu0
        %v1287 = vadd.f32 0.0, %v1286
        %v1288 = vpop.f32.mrb[0].mxu0
        %v1289 = vpop.f32.mrb[0].mxu0
        %v1290 = vadd.f32 0.0, %v1289
        %v1291 = vpop.f32.mrb[0].mxu0
        %1292 = vdwg.mxu0
        %v1294 = vsel %vm1245, %v1242, 0
        %v1297 = vsel %vm1245, %v1244, 0
        %1299 = vmatprep.subr.bf16.mxu0 0
        %1300 = vmatpush1.bf16.xpose.msra.mxu0 %v1297
        %1301 = vmatprep.subr.bf16.mxu0 0
        %1302 = vmatpush1.bf16.xpose.msra.mxu0 0
        %1303 = vmatprep.subr.bf16.mxu0 0
        %1304 = vmatpush1.bf16.xpose.msra.mxu0 0
        %1305 = vmatprep.subr.bf16.mxu0 0
        %1306 = vmatpush1.bf16.xpose.msra.mxu0 0
        %1307 = vmatprep.subr.bf16.mxu0 0
        %1308 = vmatpush1.bf16.xpose.msra.mxu0 0
        %1309 = vmatprep.subr.bf16.mxu0 0
        %1310 = vmatpush1.bf16.xpose.msra.mxu0 0
        %1311 = vmatprep.subr.bf16.mxu0 0
        %1312 = vmatpush1.bf16.xpose.msra.mxu0 0
        %1313 = vmatprep.subr.bf16.mxu0 0
        %1314 = vmatpush1.bf16.xpose.msra.mxu0 0
        %1315 = vmatprep.subr.bf16.mxu0 0
        %1316 = vmatpush1.bf16.xpose.msra.mxu0 0
        %1317 = vmatprep.subr.bf16.mxu0 0
        %1318 = vmatpush1.bf16.xpose.msra.mxu0 0
        %1319 = vmatprep.subr.bf16.mxu0 0
        %1320 = vmatpush1.bf16.xpose.msra.mxu0 0
        %1321 = vmatprep.subr.bf16.mxu0 0
        %1322 = vmatpush1.bf16.xpose.msra.mxu0 0
        %1323 = vmatprep.subr.bf16.mxu0 0
        %1324 = vmatpush1.bf16.xpose.msra.mxu0 0
        %1325 = vmatprep.subr.bf16.mxu0 0
        %1326 = vmatpush1.bf16.xpose.msra.mxu0 0
        %1327 = vmatprep.subr.bf16.mxu0 0
        %1328 = vmatpush1.bf16.xpose.msra.mxu0 0
        %1329 = vmatprep.subr.bf16.mxu0 0
        %1330 = vmatpush1.bf16.xpose.msra.mxu0 0
        %1331 = vmatprep.mubr.bf16.mxu0 0
        %1332 = vmatmul.mubr.bf16.gmra.mrb[0].mxu0 %v1294
        %v1333 = vpop.f32.mrb[0].mxu0
        %v1334 = vadd.f32 0.0, %v1333
        %v1335 = vpop.f32.mrb[0].mxu0
        %v1336 = vpop.f32.mrb[0].mxu0
        %v1337 = vadd.f32 0.0, %v1336
        %v1338 = vpop.f32.mrb[0].mxu0
        %1339 = vdwg.mxu0
        %v1340 = vmul.f32 %v1287, 0.17677669
        %v1341 = vmul.f32 %v1290, 0.17677669
        %v1342 = vmul.f32 %v1334, 0.17677669
        %v1343 = vmul.f32 %v1337, 0.17677669
        %vm1344 = vcmask 130048
        %v1345 = vsel %vm1344, %v1340, -inf
        %1346 = vmax.xlane.f32.xlu0 %v1345
        %v1347 = vpop.xlane.xlu0 %1346
        %v1348 = vsel %vm1344, %v1341, -inf
        %1349 = vmax.xlane.f32.xlu0 %v1348
        %v1350 = vpop.xlane.xlu0 %1349
        %v1351 = vsel %vm1344, %v1342, -inf
        %1352 = vmax.xlane.f32.xlu0 %v1351
        %v1353 = vpop.xlane.xlu0 %1352
        %v1354 = vsel %vm1344, %v1343, -inf
        %1355 = vmax.xlane.f32.xlu0 %v1354
        %v1356 = vpop.xlane.xlu0 %1355
        %v1357 = vsub.f32 %v1340, %v1347
        %v1358 = vsub.f32 %v1341, %v1350
        %v1359 = vsub.f32 %v1342, %v1353
        %v1360 = vsub.f32 %v1343, %v1356
        %v1361 = vmul.f32 %v1357, 1.442695
        %v1362 = vpow.pop %v1361
        %v1363 = vmul.f32 %v1358, 1.442695
        %v1364 = vpow.pop %v1363
        %v1365 = vmul.f32 %v1359, 1.442695
        %v1366 = vpow.pop %v1365
        %v1367 = vmul.f32 %v1360, 1.442695
        %v1368 = vpow.pop %v1367
        %v1369 = vsel %vm1344, %v1362, 0.0
        %1370 = vadd.xlane.f32.xlu0 %v1369
        %v1371 = vpop.xlane.xlu0 %1370
        %v1372 = vsel %vm1344, %v1364, 0.0
        %1373 = vadd.xlane.f32.xlu0 %v1372
        %v1374 = vpop.xlane.xlu0 %1373
        %v1375 = vsel %vm1344, %v1366, 0.0
        %1376 = vadd.xlane.f32.xlu0 %v1375
        %v1377 = vpop.xlane.xlu0 %1376
        %v1378 = vsel %vm1344, %v1368, 0.0
        %1379 = vadd.xlane.f32.xlu0 %v1378
        %v1380 = vpop.xlane.xlu0 %1379
        %v1381 = vrcp.pop %v1371
        %v1382 = vrcp.pop %v1374
        %v1383 = vrcp.pop %v1377
        %v1384 = vrcp.pop %v1380
        %v1385 = vmul.f32 %v1362, %v1381
        %v1386 = vmul.f32 %v1364, %v1382
        %v1387 = vmul.f32 %v1366, %v1383
        %v1388 = vmul.f32 %v1368, %v1384
        %v1389 = vpack.c.bf16 %v1386, %v1385
        %v1390 = vpack.c.bf16 %v1388, %v1387
        %v1391 = vpack.c.bf16 %v1230, %v1227
        %v1392 = vpack.c.bf16 %v1238, %v1235
        %v1394 = vsel %vm1344, %v1389, 0
        %1396 = vmatprep.subr.bf16.mxu0 0
        %1397 = vmatpush1.bf16.msra.mxu0 %v1391
        %1398 = vmatprep.subr.bf16.mxu0 0
        %1399 = vmatpush1.bf16.msra.mxu0 0
        %1400 = vmatprep.subr.bf16.mxu0 0
        %1401 = vmatpush1.bf16.msra.mxu0 0
        %1402 = vmatprep.subr.bf16.mxu0 0
        %1403 = vmatpush1.bf16.msra.mxu0 0
        %1404 = vmatprep.subr.bf16.mxu0 0
        %1405 = vmatpush1.bf16.msra.mxu0 0
        %1406 = vmatprep.subr.bf16.mxu0 0
        %1407 = vmatpush1.bf16.msra.mxu0 0
        %1408 = vmatprep.subr.bf16.mxu0 0
        %1409 = vmatpush1.bf16.msra.mxu0 0
        %1410 = vmatprep.subr.bf16.mxu0 0
        %1411 = vmatpush1.bf16.msra.mxu0 0
        %1412 = vmatprep.subr.bf16.mxu0 0
        %1413 = vmatpush1.bf16.msra.mxu0 0
        %1414 = vmatprep.subr.bf16.mxu0 0
        %1415 = vmatpush1.bf16.msra.mxu0 0
        %1416 = vmatprep.subr.bf16.mxu0 0
        %1417 = vmatpush1.bf16.msra.mxu0 0
        %1418 = vmatprep.subr.bf16.mxu0 0
        %1419 = vmatpush1.bf16.msra.mxu0 0
        %1420 = vmatprep.subr.bf16.mxu0 0
        %1421 = vmatpush1.bf16.msra.mxu0 0
        %1422 = vmatprep.subr.bf16.mxu0 0
        %1423 = vmatpush1.bf16.msra.mxu0 0
        %1424 = vmatprep.subr.bf16.mxu0 0
        %1425 = vmatpush1.bf16.msra.mxu0 0
        %1426 = vmatprep.subr.bf16.mxu0 0
        %1427 = vmatpush1.bf16.msra.mxu0 0
        %1428 = vmatprep.mubr.bf16.mxu0 0
        %1429 = vmatmul.mubr.bf16.gmra.mrb[0].mxu0 %v1394
        %v1430 = vpop.f32.mrb[0].mxu0
        %v1431 = vadd.f32 0.0, %v1430
        %v1432 = vpop.f32.mrb[0].mxu0
        %v1433 = vpop.f32.mrb[0].mxu0
        %v1434 = vadd.f32 0.0, %v1433
        %v1435 = vpop.f32.mrb[0].mxu0
        %1436 = vdwg.mxu0
        %v1438 = vsel %vm1344, %v1390, 0
        %1440 = vmatprep.subr.bf16.mxu0 0
        %1441 = vmatpush1.bf16.msra.mxu0 %v1392
        %1442 = vmatprep.subr.bf16.mxu0 0
        %1443 = vmatpush1.bf16.msra.mxu0 0
        %1444 = vmatprep.subr.bf16.mxu0 0
        %1445 = vmatpush1.bf16.msra.mxu0 0
        %1446 = vmatprep.subr.bf16.mxu0 0
        %1447 = vmatpush1.bf16.msra.mxu0 0
        %1448 = vmatprep.subr.bf16.mxu0 0
        %1449 = vmatpush1.bf16.msra.mxu0 0
        %1450 = vmatprep.subr.bf16.mxu0 0
        %1451 = vmatpush1.bf16.msra.mxu0 0
        %1452 = vmatprep.subr.bf16.mxu0 0
        %1453 = vmatpush1.bf16.msra.mxu0 0
        %1454 = vmatprep.subr.bf16.mxu0 0
        %1455 = vmatpush1.bf16.msra.mxu0 0
        %1456 = vmatprep.subr.bf16.mxu0 0
        %1457 = vmatpush1.bf16.msra.mxu0 0
        %1458 = vmatprep.subr.bf16.mxu0 0
        %1459 = vmatpush1.bf16.msra.mxu0 0
        %1460 = vmatprep.subr.bf16.mxu0 0
        %1461 = vmatpush1.bf16.msra.mxu0 0
        %1462 = vmatprep.subr.bf16.mxu0 0
        %1463 = vmatpush1.bf16.msra.mxu0 0
        %1464 = vmatprep.subr.bf16.mxu0 0
        %1465 = vmatpush1.bf16.msra.mxu0 0
        %1466 = vmatprep.subr.bf16.mxu0 0
        %1467 = vmatpush1.bf16.msra.mxu0 0
        %1468 = vmatprep.subr.bf16.mxu0 0
        %1469 = vmatpush1.bf16.msra.mxu0 0
        %1470 = vmatprep.subr.bf16.mxu0 0
        %1471 = vmatpush1.bf16.msra.mxu0 0
        %1472 = vmatprep.mubr.bf16.mxu0 0
        %1473 = vmatmul.mubr.bf16.gmra.mrb[0].mxu0 %v1438
        %v1474 = vpop.f32.mrb[0].mxu0
        %v1475 = vadd.f32 0.0, %v1474
        %v1476 = vpop.f32.mrb[0].mxu0
        %v1477 = vpop.f32.mrb[0].mxu0
        %v1478 = vadd.f32 0.0, %v1477
        %v1479 = vpop.f32.mrb[0].mxu0
        %1480 = vdwg.mxu0
        %1482 = vrot.lane.b32.xlu0 %v1241, 96
        %v1483 = vpop.permute.xlu0 %1482
        %1485 = vrot.lane.b32.xlu0 %v1243, 96
        %v1486 = vpop.permute.xlu0 %1485
        %v1488 = vsel %vm1245, %v1483, 0
        %v1491 = vsel %vm1245, %v1486, 0
        %1493 = vmatprep.subr.bf16.mxu0 0
        %1494 = vmatpush1.bf16.xpose.msra.mxu0 %v1491
        %1495 = vmatprep.subr.bf16.mxu0 0
        %1496 = vmatpush1.bf16.xpose.msra.mxu0 0
        %1497 = vmatprep.subr.bf16.mxu0 0
        %1498 = vmatpush1.bf16.xpose.msra.mxu0 0
        %1499 = vmatprep.subr.bf16.mxu0 0
        %1500 = vmatpush1.bf16.xpose.msra.mxu0 0
        %1501 = vmatprep.subr.bf16.mxu0 0
        %1502 = vmatpush1.bf16.xpose.msra.mxu0 0
        %1503 = vmatprep.subr.bf16.mxu0 0
        %1504 = vmatpush1.bf16.xpose.msra.mxu0 0
        %1505 = vmatprep.subr.bf16.mxu0 0
        %1506 = vmatpush1.bf16.xpose.msra.mxu0 0
        %1507 = vmatprep.subr.bf16.mxu0 0
        %1508 = vmatpush1.bf16.xpose.msra.mxu0 0
        %1509 = vmatprep.subr.bf16.mxu0 0
        %1510 = vmatpush1.bf16.xpose.msra.mxu0 0
        %1511 = vmatprep.subr.bf16.mxu0 0
        %1512 = vmatpush1.bf16.xpose.msra.mxu0 0
        %1513 = vmatprep.subr.bf16.mxu0 0
        %1514 = vmatpush1.bf16.xpose.msra.mxu0 0
        %1515 = vmatprep.subr.bf16.mxu0 0
        %1516 = vmatpush1.bf16.xpose.msra.mxu0 0
        %1517 = vmatprep.subr.bf16.mxu0 0
        %1518 = vmatpush1.bf16.xpose.msra.mxu0 0
        %1519 = vmatprep.subr.bf16.mxu0 0
        %1520 = vmatpush1.bf16.xpose.msra.mxu0 0
        %1521 = vmatprep.subr.bf16.mxu0 0
        %1522 = vmatpush1.bf16.xpose.msra.mxu0 0
        %1523 = vmatprep.subr.bf16.mxu0 0
        %1524 = vmatpush1.bf16.xpose.msra.mxu0 0
        %1525 = vmatprep.mubr.bf16.mxu0 0
        %1526 = vmatmul.mubr.bf16.gmra.mrb[0].mxu0 %v1488
        %v1527 = vpop.f32.mrb[0].mxu0
        %v1528 = vadd.f32 0.0, %v1527
        %v1529 = vpop.f32.mrb[0].mxu0
        %v1530 = vpop.f32.mrb[0].mxu0
        %v1531 = vadd.f32 0.0, %v1530
        %v1532 = vpop.f32.mrb[0].mxu0
        %1533 = vdwg.mxu0
        %1535 = vrot.lane.b32.xlu0 %v1242, 96
        %v1536 = vpop.permute.xlu0 %1535
        %1538 = vrot.lane.b32.xlu0 %v1244, 96
        %v1539 = vpop.permute.xlu0 %1538
        %v1541 = vsel %vm1245, %v1536, 0
        %v1544 = vsel %vm1245, %v1539, 0
        %1546 = vmatprep.subr.bf16.mxu0 0
        %1547 = vmatpush1.bf16.xpose.msra.mxu0 %v1544
        %1548 = vmatprep.subr.bf16.mxu0 0
        %1549 = vmatpush1.bf16.xpose.msra.mxu0 0
        %1550 = vmatprep.subr.bf16.mxu0 0
        %1551 = vmatpush1.bf16.xpose.msra.mxu0 0
        %1552 = vmatprep.subr.bf16.mxu0 0
        %1553 = vmatpush1.bf16.xpose.msra.mxu0 0
        %1554 = vmatprep.subr.bf16.mxu0 0
        %1555 = vmatpush1.bf16.xpose.msra.mxu0 0
        %1556 = vmatprep.subr.bf16.mxu0 0
        %1557 = vmatpush1.bf16.xpose.msra.mxu0 0
        %1558 = vmatprep.subr.bf16.mxu0 0
        %1559 = vmatpush1.bf16.xpose.msra.mxu0 0
        %1560 = vmatprep.subr.bf16.mxu0 0
        %1561 = vmatpush1.bf16.xpose.msra.mxu0 0
        %1562 = vmatprep.subr.bf16.mxu0 0
        %1563 = vmatpush1.bf16.xpose.msra.mxu0 0
        %1564 = vmatprep.subr.bf16.mxu0 0
        %1565 = vmatpush1.bf16.xpose.msra.mxu0 0
        %1566 = vmatprep.subr.bf16.mxu0 0
        %1567 = vmatpush1.bf16.xpose.msra.mxu0 0
        %1568 = vmatprep.subr.bf16.mxu0 0
        %1569 = vmatpush1.bf16.xpose.msra.mxu0 0
        %1570 = vmatprep.subr.bf16.mxu0 0
        %1571 = vmatpush1.bf16.xpose.msra.mxu0 0
        %1572 = vmatprep.subr.bf16.mxu0 0
        %1573 = vmatpush1.bf16.xpose.msra.mxu0 0
        %1574 = vmatprep.subr.bf16.mxu0 0
        %1575 = vmatpush1.bf16.xpose.msra.mxu0 0
        %1576 = vmatprep.subr.bf16.mxu0 0
        %1577 = vmatpush1.bf16.xpose.msra.mxu0 0
        %1578 = vmatprep.mubr.bf16.mxu0 0
        %1579 = vmatmul.mubr.bf16.gmra.mrb[0].mxu0 %v1541
        %v1580 = vpop.f32.mrb[0].mxu0
        %v1581 = vadd.f32 0.0, %v1580
        %v1582 = vpop.f32.mrb[0].mxu0
        %v1583 = vpop.f32.mrb[0].mxu0
        %v1584 = vadd.f32 0.0, %v1583
        %v1585 = vpop.f32.mrb[0].mxu0
        %1586 = vdwg.mxu0
        %v1587 = vmul.f32 %v1528, 0.17677669
        %v1588 = vmul.f32 %v1531, 0.17677669
        %v1589 = vmul.f32 %v1581, 0.17677669
        %v1590 = vmul.f32 %v1584, 0.17677669
        %v1591 = vsel %vm1344, %v1587, -inf
        %1592 = vmax.xlane.f32.xlu0 %v1591
        %v1593 = vpop.xlane.xlu0 %1592
        %v1594 = vsel %vm1344, %v1588, -inf
        %1595 = vmax.xlane.f32.xlu0 %v1594
        %v1596 = vpop.xlane.xlu0 %1595
        %v1597 = vsel %vm1344, %v1589, -inf
        %1598 = vmax.xlane.f32.xlu0 %v1597
        %v1599 = vpop.xlane.xlu0 %1598
        %v1600 = vsel %vm1344, %v1590, -inf
        %1601 = vmax.xlane.f32.xlu0 %v1600
        %v1602 = vpop.xlane.xlu0 %1601
        %v1603 = vsub.f32 %v1587, %v1593
        %v1604 = vsub.f32 %v1588, %v1596
        %v1605 = vsub.f32 %v1589, %v1599
        %v1606 = vsub.f32 %v1590, %v1602
        %v1607 = vmul.f32 %v1603, 1.442695
        %v1608 = vpow.pop %v1607
        %v1609 = vmul.f32 %v1604, 1.442695
        %v1610 = vpow.pop %v1609
        %v1611 = vmul.f32 %v1605, 1.442695
        %v1612 = vpow.pop %v1611
        %v1613 = vmul.f32 %v1606, 1.442695
        %v1614 = vpow.pop %v1613
        %v1615 = vsel %vm1344, %v1608, 0.0
        %1616 = vadd.xlane.f32.xlu0 %v1615
        %v1617 = vpop.xlane.xlu0 %1616
        %v1618 = vsel %vm1344, %v1610, 0.0
        %1619 = vadd.xlane.f32.xlu0 %v1618
        %v1620 = vpop.xlane.xlu0 %1619
        %v1621 = vsel %vm1344, %v1612, 0.0
        %1622 = vadd.xlane.f32.xlu0 %v1621
        %v1623 = vpop.xlane.xlu0 %1622
        %v1624 = vsel %vm1344, %v1614, 0.0
        %1625 = vadd.xlane.f32.xlu0 %v1624
        %v1626 = vpop.xlane.xlu0 %1625
        %v1627 = vrcp.pop %v1617
        %v1628 = vrcp.pop %v1620
        %v1629 = vrcp.pop %v1623
        %v1630 = vrcp.pop %v1626
        %v1631 = vmul.f32 %v1608, %v1627
        %v1632 = vmul.f32 %v1610, %v1628
        %v1633 = vmul.f32 %v1612, %v1629
        %v1634 = vmul.f32 %v1614, %v1630
        %v1635 = vpack.c.bf16 %v1632, %v1631
        %v1636 = vpack.c.bf16 %v1634, %v1633
        %1638 = vrot.lane.b32.xlu0 %v1391, 96
        %v1639 = vpop.permute.xlu0 %1638
        %v1642 = vsel %vm1344, %v1635, 0
        %1644 = vmatprep.subr.bf16.mxu0 0
        %1645 = vmatpush1.bf16.msra.mxu0 %v1639
        %1646 = vmatprep.subr.bf16.mxu0 0
        %1647 = vmatpush1.bf16.msra.mxu0 0
        %1648 = vmatprep.subr.bf16.mxu0 0
        %1649 = vmatpush1.bf16.msra.mxu0 0
        %1650 = vmatprep.subr.bf16.mxu0 0
        %1651 = vmatpush1.bf16.msra.mxu0 0
        %1652 = vmatprep.subr.bf16.mxu0 0
        %1653 = vmatpush1.bf16.msra.mxu0 0
        %1654 = vmatprep.subr.bf16.mxu0 0
        %1655 = vmatpush1.bf16.msra.mxu0 0
        %1656 = vmatprep.subr.bf16.mxu0 0
        %1657 = vmatpush1.bf16.msra.mxu0 0
        %1658 = vmatprep.subr.bf16.mxu0 0
        %1659 = vmatpush1.bf16.msra.mxu0 0
        %1660 = vmatprep.subr.bf16.mxu0 0
        %1661 = vmatpush1.bf16.msra.mxu0 0
        %1662 = vmatprep.subr.bf16.mxu0 0
        %1663 = vmatpush1.bf16.msra.mxu0 0
        %1664 = vmatprep.subr.bf16.mxu0 0
        %1665 = vmatpush1.bf16.msra.mxu0 0
        %1666 = vmatprep.subr.bf16.mxu0 0
        %1667 = vmatpush1.bf16.msra.mxu0 0
        %1668 = vmatprep.subr.bf16.mxu0 0
        %1669 = vmatpush1.bf16.msra.mxu0 0
        %1670 = vmatprep.subr.bf16.mxu0 0
        %1671 = vmatpush1.bf16.msra.mxu0 0
        %1672 = vmatprep.subr.bf16.mxu0 0
        %1673 = vmatpush1.bf16.msra.mxu0 0
        %1674 = vmatprep.subr.bf16.mxu0 0
        %1675 = vmatpush1.bf16.msra.mxu0 0
        %1676 = vmatprep.mubr.bf16.mxu0 0
        %1677 = vmatmul.mubr.bf16.gmra.mrb[0].mxu0 %v1642
        %v1678 = vpop.f32.mrb[0].mxu0
        %v1679 = vadd.f32 0.0, %v1678
        %v1680 = vpop.f32.mrb[0].mxu0
        %v1681 = vpop.f32.mrb[0].mxu0
        %v1682 = vadd.f32 0.0, %v1681
        %v1683 = vpop.f32.mrb[0].mxu0
        %1684 = vdwg.mxu0
        %1686 = vrot.lane.b32.xlu0 %v1392, 96
        %v1687 = vpop.permute.xlu0 %1686
        %v1690 = vsel %vm1344, %v1636, 0
        %1692 = vmatprep.subr.bf16.mxu0 0
        %1693 = vmatpush1.bf16.msra.mxu0 %v1687
        %1694 = vmatprep.subr.bf16.mxu0 0
        %1695 = vmatpush1.bf16.msra.mxu0 0
        %1696 = vmatprep.subr.bf16.mxu0 0
        %1697 = vmatpush1.bf16.msra.mxu0 0
        %1698 = vmatprep.subr.bf16.mxu0 0
        %1699 = vmatpush1.bf16.msra.mxu0 0
        %1700 = vmatprep.subr.bf16.mxu0 0
        %1701 = vmatpush1.bf16.msra.mxu0 0
        %1702 = vmatprep.subr.bf16.mxu0 0
        %1703 = vmatpush1.bf16.msra.mxu0 0
        %1704 = vmatprep.subr.bf16.mxu0 0
        %1705 = vmatpush1.bf16.msra.mxu0 0
        %1706 = vmatprep.subr.bf16.mxu0 0
        %1707 = vmatpush1.bf16.msra.mxu0 0
        %1708 = vmatprep.subr.bf16.mxu0 0
        %1709 = vmatpush1.bf16.msra.mxu0 0
        %1710 = vmatprep.subr.bf16.mxu0 0
        %1711 = vmatpush1.bf16.msra.mxu0 0
        %1712 = vmatprep.subr.bf16.mxu0 0
        %1713 = vmatpush1.bf16.msra.mxu0 0
        %1714 = vmatprep.subr.bf16.mxu0 0
        %1715 = vmatpush1.bf16.msra.mxu0 0
        %1716 = vmatprep.subr.bf16.mxu0 0
        %1717 = vmatpush1.bf16.msra.mxu0 0
        %1718 = vmatprep.subr.bf16.mxu0 0
        %1719 = vmatpush1.bf16.msra.mxu0 0
        %1720 = vmatprep.subr.bf16.mxu0 0
        %1721 = vmatpush1.bf16.msra.mxu0 0
        %1722 = vmatprep.subr.bf16.mxu0 0
        %1723 = vmatpush1.bf16.msra.mxu0 0
        %1724 = vmatprep.mubr.bf16.mxu0 0
        %1725 = vmatmul.mubr.bf16.gmra.mrb[0].mxu0 %v1690
        %v1726 = vpop.f32.mrb[0].mxu0
        %v1727 = vadd.f32 0.0, %v1726
        %v1728 = vpop.f32.mrb[0].mxu0
        %v1729 = vpop.f32.mrb[0].mxu0
        %v1730 = vadd.f32 0.0, %v1729
        %v1731 = vpop.f32.mrb[0].mxu0
        %1732 = vdwg.mxu0
        %1733 = vrot.lane.b32.xlu0 %v1241, 64
        %v1734 = vpop.permute.xlu0 %1733
        %1735 = vrot.lane.b32.xlu0 %v1243, 64
        %v1736 = vpop.permute.xlu0 %1735
        %v1738 = vsel %vm1245, %v1734, 0
        %v1741 = vsel %vm1245, %v1736, 0
        %1743 = vmatprep.subr.bf16.mxu0 0
        %1744 = vmatpush1.bf16.xpose.msra.mxu0 %v1741
        %1745 = vmatprep.subr.bf16.mxu0 0
        %1746 = vmatpush1.bf16.xpose.msra.mxu0 0
        %1747 = vmatprep.subr.bf16.mxu0 0
        %1748 = vmatpush1.bf16.xpose.msra.mxu0 0
        %1749 = vmatprep.subr.bf16.mxu0 0
        %1750 = vmatpush1.bf16.xpose.msra.mxu0 0
        %1751 = vmatprep.subr.bf16.mxu0 0
        %1752 = vmatpush1.bf16.xpose.msra.mxu0 0
        %1753 = vmatprep.subr.bf16.mxu0 0
        %1754 = vmatpush1.bf16.xpose.msra.mxu0 0
        %1755 = vmatprep.subr.bf16.mxu0 0
        %1756 = vmatpush1.bf16.xpose.msra.mxu0 0
        %1757 = vmatprep.subr.bf16.mxu0 0
        %1758 = vmatpush1.bf16.xpose.msra.mxu0 0
        %1759 = vmatprep.subr.bf16.mxu0 0
        %1760 = vmatpush1.bf16.xpose.msra.mxu0 0
        %1761 = vmatprep.subr.bf16.mxu0 0
        %1762 = vmatpush1.bf16.xpose.msra.mxu0 0
        %1763 = vmatprep.subr.bf16.mxu0 0
        %1764 = vmatpush1.bf16.xpose.msra.mxu0 0
        %1765 = vmatprep.subr.bf16.mxu0 0
        %1766 = vmatpush1.bf16.xpose.msra.mxu0 0
        %1767 = vmatprep.subr.bf16.mxu0 0
        %1768 = vmatpush1.bf16.xpose.msra.mxu0 0
        %1769 = vmatprep.subr.bf16.mxu0 0
        %1770 = vmatpush1.bf16.xpose.msra.mxu0 0
        %1771 = vmatprep.subr.bf16.mxu0 0
        %1772 = vmatpush1.bf16.xpose.msra.mxu0 0
        %1773 = vmatprep.subr.bf16.mxu0 0
        %1774 = vmatpush1.bf16.xpose.msra.mxu0 0
        %1775 = vmatprep.mubr.bf16.mxu0 0
        %1776 = vmatmul.mubr.bf16.gmra.mrb[0].mxu0 %v1738
        %v1777 = vpop.f32.mrb[0].mxu0
        %v1778 = vadd.f32 0.0, %v1777
        %v1779 = vpop.f32.mrb[0].mxu0
        %v1780 = vpop.f32.mrb[0].mxu0
        %v1781 = vadd.f32 0.0, %v1780
        %v1782 = vpop.f32.mrb[0].mxu0
        %1783 = vdwg.mxu0
        %1784 = vrot.lane.b32.xlu0 %v1242, 64
        %v1785 = vpop.permute.xlu0 %1784
        %1786 = vrot.lane.b32.xlu0 %v1244, 64
        %v1787 = vpop.permute.xlu0 %1786
        %v1789 = vsel %vm1245, %v1785, 0
        %v1792 = vsel %vm1245, %v1787, 0
        %1794 = vmatprep.subr.bf16.mxu0 0
        %1795 = vmatpush1.bf16.xpose.msra.mxu0 %v1792
        %1796 = vmatprep.subr.bf16.mxu0 0
        %1797 = vmatpush1.bf16.xpose.msra.mxu0 0
        %1798 = vmatprep.subr.bf16.mxu0 0
        %1799 = vmatpush1.bf16.xpose.msra.mxu0 0
        %1800 = vmatprep.subr.bf16.mxu0 0
        %1801 = vmatpush1.bf16.xpose.msra.mxu0 0
        %1802 = vmatprep.subr.bf16.mxu0 0
        %1803 = vmatpush1.bf16.xpose.msra.mxu0 0
        %1804 = vmatprep.subr.bf16.mxu0 0
        %1805 = vmatpush1.bf16.xpose.msra.mxu0 0
        %1806 = vmatprep.subr.bf16.mxu0 0
        %1807 = vmatpush1.bf16.xpose.msra.mxu0 0
        %1808 = vmatprep.subr.bf16.mxu0 0
        %1809 = vmatpush1.bf16.xpose.msra.mxu0 0
        %1810 = vmatprep.subr.bf16.mxu0 0
        %1811 = vmatpush1.bf16.xpose.msra.mxu0 0
        %1812 = vmatprep.subr.bf16.mxu0 0
        %1813 = vmatpush1.bf16.xpose.msra.mxu0 0
        %1814 = vmatprep.subr.bf16.mxu0 0
        %1815 = vmatpush1.bf16.xpose.msra.mxu0 0
        %1816 = vmatprep.subr.bf16.mxu0 0
        %1817 = vmatpush1.bf16.xpose.msra.mxu0 0
        %1818 = vmatprep.subr.bf16.mxu0 0
        %1819 = vmatpush1.bf16.xpose.msra.mxu0 0
        %1820 = vmatprep.subr.bf16.mxu0 0
        %1821 = vmatpush1.bf16.xpose.msra.mxu0 0
        %1822 = vmatprep.subr.bf16.mxu0 0
        %1823 = vmatpush1.bf16.xpose.msra.mxu0 0
        %1824 = vmatprep.subr.bf16.mxu0 0
        %1825 = vmatpush1.bf16.xpose.msra.mxu0 0
        %1826 = vmatprep.mubr.bf16.mxu0 0
        %1827 = vmatmul.mubr.bf16.gmra.mrb[0].mxu0 %v1789
        %v1828 = vpop.f32.mrb[0].mxu0
        %v1829 = vadd.f32 0.0, %v1828
        %v1830 = vpop.f32.mrb[0].mxu0
        %v1831 = vpop.f32.mrb[0].mxu0
        %v1832 = vadd.f32 0.0, %v1831
        %v1833 = vpop.f32.mrb[0].mxu0
        %1834 = vdwg.mxu0
        %v1835 = vmul.f32 %v1778, 0.17677669
        %v1836 = vmul.f32 %v1781, 0.17677669
        %v1837 = vmul.f32 %v1829, 0.17677669
        %v1838 = vmul.f32 %v1832, 0.17677669
        %v1839 = vsel %vm1344, %v1835, -inf
        %1840 = vmax.xlane.f32.xlu0 %v1839
        %v1841 = vpop.xlane.xlu0 %1840
        %v1842 = vsel %vm1344, %v1836, -inf
        %1843 = vmax.xlane.f32.xlu0 %v1842
        %v1844 = vpop.xlane.xlu0 %1843
        %v1845 = vsel %vm1344, %v1837, -inf
        %1846 = vmax.xlane.f32.xlu0 %v1845
        %v1847 = vpop.xlane.xlu0 %1846
        %v1848 = vsel %vm1344, %v1838, -inf
        %1849 = vmax.xlane.f32.xlu0 %v1848
        %v1850 = vpop.xlane.xlu0 %1849
        %v1851 = vsub.f32 %v1835, %v1841
        %v1852 = vsub.f32 %v1836, %v1844
        %v1853 = vsub.f32 %v1837, %v1847
        %v1854 = vsub.f32 %v1838, %v1850
        %v1855 = vmul.f32 %v1851, 1.442695
        %v1856 = vpow.pop %v1855
        %v1857 = vmul.f32 %v1852, 1.442695
        %v1858 = vpow.pop %v1857
        %v1859 = vmul.f32 %v1853, 1.442695
        %v1860 = vpow.pop %v1859
        %v1861 = vmul.f32 %v1854, 1.442695
        %v1862 = vpow.pop %v1861
        %v1863 = vsel %vm1344, %v1856, 0.0
        %1864 = vadd.xlane.f32.xlu0 %v1863
        %v1865 = vpop.xlane.xlu0 %1864
        %v1866 = vsel %vm1344, %v1858, 0.0
        %1867 = vadd.xlane.f32.xlu0 %v1866
        %v1868 = vpop.xlane.xlu0 %1867
        %v1869 = vsel %vm1344, %v1860, 0.0
        %1870 = vadd.xlane.f32.xlu0 %v1869
        %v1871 = vpop.xlane.xlu0 %1870
        %v1872 = vsel %vm1344, %v1862, 0.0
        %1873 = vadd.xlane.f32.xlu0 %v1872
        %v1874 = vpop.xlane.xlu0 %1873
        %v1875 = vrcp.pop %v1865
        %v1876 = vrcp.pop %v1868
        %v1877 = vrcp.pop %v1871
        %v1878 = vrcp.pop %v1874
        %v1879 = vmul.f32 %v1856, %v1875
        %v1880 = vmul.f32 %v1858, %v1876
        %v1881 = vmul.f32 %v1860, %v1877
        %v1882 = vmul.f32 %v1862, %v1878
        %v1883 = vpack.c.bf16 %v1880, %v1879
        %v1884 = vpack.c.bf16 %v1882, %v1881
        %1885 = vrot.lane.b32.xlu0 %v1391, 64
        %v1886 = vpop.permute.xlu0 %1885
        %v1889 = vsel %vm1344, %v1883, 0
        %1891 = vmatprep.subr.bf16.mxu0 0
        %1892 = vmatpush1.bf16.msra.mxu0 %v1886
        %1893 = vmatprep.subr.bf16.mxu0 0
        %1894 = vmatpush1.bf16.msra.mxu0 0
        %1895 = vmatprep.subr.bf16.mxu0 0
        %1896 = vmatpush1.bf16.msra.mxu0 0
        %1897 = vmatprep.subr.bf16.mxu0 0
        %1898 = vmatpush1.bf16.msra.mxu0 0
        %1899 = vmatprep.subr.bf16.mxu0 0
        %1900 = vmatpush1.bf16.msra.mxu0 0
        %1901 = vmatprep.subr.bf16.mxu0 0
        %1902 = vmatpush1.bf16.msra.mxu0 0
        %1903 = vmatprep.subr.bf16.mxu0 0
        %1904 = vmatpush1.bf16.msra.mxu0 0
        %1905 = vmatprep.subr.bf16.mxu0 0
        %1906 = vmatpush1.bf16.msra.mxu0 0
        %1907 = vmatprep.subr.bf16.mxu0 0
        %1908 = vmatpush1.bf16.msra.mxu0 0
        %1909 = vmatprep.subr.bf16.mxu0 0
        %1910 = vmatpush1.bf16.msra.mxu0 0
        %1911 = vmatprep.subr.bf16.mxu0 0
        %1912 = vmatpush1.bf16.msra.mxu0 0
        %1913 = vmatprep.subr.bf16.mxu0 0
        %1914 = vmatpush1.bf16.msra.mxu0 0
        %1915 = vmatprep.subr.bf16.mxu0 0
        %1916 = vmatpush1.bf16.msra.mxu0 0
        %1917 = vmatprep.subr.bf16.mxu0 0
        %1918 = vmatpush1.bf16.msra.mxu0 0
        %1919 = vmatprep.subr.bf16.mxu0 0
        %1920 = vmatpush1.bf16.msra.mxu0 0
        %1921 = vmatprep.subr.bf16.mxu0 0
        %1922 = vmatpush1.bf16.msra.mxu0 0
        %1923 = vmatprep.mubr.bf16.mxu0 0
        %1924 = vmatmul.mubr.bf16.gmra.mrb[0].mxu0 %v1889
        %v1925 = vpop.f32.mrb[0].mxu0
        %v1926 = vadd.f32 0.0, %v1925
        %v1927 = vpop.f32.mrb[0].mxu0
        %v1928 = vpop.f32.mrb[0].mxu0
        %v1929 = vadd.f32 0.0, %v1928
        %v1930 = vpop.f32.mrb[0].mxu0
        %1931 = vdwg.mxu0
        %1932 = vrot.lane.b32.xlu0 %v1392, 64
        %v1933 = vpop.permute.xlu0 %1932
        %v1936 = vsel %vm1344, %v1884, 0
        %1938 = vmatprep.subr.bf16.mxu0 0
        %1939 = vmatpush1.bf16.msra.mxu0 %v1933
        %1940 = vmatprep.subr.bf16.mxu0 0
        %1941 = vmatpush1.bf16.msra.mxu0 0
        %1942 = vmatprep.subr.bf16.mxu0 0
        %1943 = vmatpush1.bf16.msra.mxu0 0
        %1944 = vmatprep.subr.bf16.mxu0 0
        %1945 = vmatpush1.bf16.msra.mxu0 0
        %1946 = vmatprep.subr.bf16.mxu0 0
        %1947 = vmatpush1.bf16.msra.mxu0 0
        %1948 = vmatprep.subr.bf16.mxu0 0
        %1949 = vmatpush1.bf16.msra.mxu0 0
        %1950 = vmatprep.subr.bf16.mxu0 0
        %1951 = vmatpush1.bf16.msra.mxu0 0
        %1952 = vmatprep.subr.bf16.mxu0 0
        %1953 = vmatpush1.bf16.msra.mxu0 0
        %1954 = vmatprep.subr.bf16.mxu0 0
        %1955 = vmatpush1.bf16.msra.mxu0 0
        %1956 = vmatprep.subr.bf16.mxu0 0
        %1957 = vmatpush1.bf16.msra.mxu0 0
        %1958 = vmatprep.subr.bf16.mxu0 0
        %1959 = vmatpush1.bf16.msra.mxu0 0
        %1960 = vmatprep.subr.bf16.mxu0 0
        %1961 = vmatpush1.bf16.msra.mxu0 0
        %1962 = vmatprep.subr.bf16.mxu0 0
        %1963 = vmatpush1.bf16.msra.mxu0 0
        %1964 = vmatprep.subr.bf16.mxu0 0
        %1965 = vmatpush1.bf16.msra.mxu0 0
        %1966 = vmatprep.subr.bf16.mxu0 0
        %1967 = vmatpush1.bf16.msra.mxu0 0
        %1968 = vmatprep.subr.bf16.mxu0 0
        %1969 = vmatpush1.bf16.msra.mxu0 0
        %1970 = vmatprep.mubr.bf16.mxu0 0
        %1971 = vmatmul.mubr.bf16.gmra.mrb[0].mxu0 %v1936
        %v1972 = vpop.f32.mrb[0].mxu0
        %v1973 = vadd.f32 0.0, %v1972
        %v1974 = vpop.f32.mrb[0].mxu0
        %v1975 = vpop.f32.mrb[0].mxu0
        %v1976 = vadd.f32 0.0, %v1975
        %v1977 = vpop.f32.mrb[0].mxu0
        %1978 = vdwg.mxu0
        %1979 = vrot.lane.b32.xlu0 %v1241, 32
        %v1980 = vpop.permute.xlu0 %1979
        %1981 = vrot.lane.b32.xlu0 %v1243, 32
        %v1982 = vpop.permute.xlu0 %1981
        %v1984 = vsel %vm1245, %v1980, 0
        %v1987 = vsel %vm1245, %v1982, 0
        %1989 = vmatprep.subr.bf16.mxu0 0
        %1990 = vmatpush1.bf16.xpose.msra.mxu0 %v1987
        %1991 = vmatprep.subr.bf16.mxu0 0
        %1992 = vmatpush1.bf16.xpose.msra.mxu0 0
        %1993 = vmatprep.subr.bf16.mxu0 0
        %1994 = vmatpush1.bf16.xpose.msra.mxu0 0
        %1995 = vmatprep.subr.bf16.mxu0 0
        %1996 = vmatpush1.bf16.xpose.msra.mxu0 0
        %1997 = vmatprep.subr.bf16.mxu0 0
        %1998 = vmatpush1.bf16.xpose.msra.mxu0 0
        %1999 = vmatprep.subr.bf16.mxu0 0
        %2000 = vmatpush1.bf16.xpose.msra.mxu0 0
        %2001 = vmatprep.subr.bf16.mxu0 0
        %2002 = vmatpush1.bf16.xpose.msra.mxu0 0
        %2003 = vmatprep.subr.bf16.mxu0 0
        %2004 = vmatpush1.bf16.xpose.msra.mxu0 0
        %2005 = vmatprep.subr.bf16.mxu0 0
        %2006 = vmatpush1.bf16.xpose.msra.mxu0 0
        %2007 = vmatprep.subr.bf16.mxu0 0
        %2008 = vmatpush1.bf16.xpose.msra.mxu0 0
        %2009 = vmatprep.subr.bf16.mxu0 0
        %2010 = vmatpush1.bf16.xpose.msra.mxu0 0
        %2011 = vmatprep.subr.bf16.mxu0 0
        %2012 = vmatpush1.bf16.xpose.msra.mxu0 0
        %2013 = vmatprep.subr.bf16.mxu0 0
        %2014 = vmatpush1.bf16.xpose.msra.mxu0 0
        %2015 = vmatprep.subr.bf16.mxu0 0
        %2016 = vmatpush1.bf16.xpose.msra.mxu0 0
        %2017 = vmatprep.subr.bf16.mxu0 0
        %2018 = vmatpush1.bf16.xpose.msra.mxu0 0
        %2019 = vmatprep.subr.bf16.mxu0 0
        %2020 = vmatpush1.bf16.xpose.msra.mxu0 0
        %2021 = vmatprep.mubr.bf16.mxu0 0
        %2022 = vmatmul.mubr.bf16.gmra.mrb[0].mxu0 %v1984
        %v2023 = vpop.f32.mrb[0].mxu0
        %v2024 = vadd.f32 0.0, %v2023
        %v2025 = vpop.f32.mrb[0].mxu0
        %v2026 = vpop.f32.mrb[0].mxu0
        %v2027 = vadd.f32 0.0, %v2026
        %v2028 = vpop.f32.mrb[0].mxu0
        %2029 = vdwg.mxu0
        %2030 = vrot.lane.b32.xlu0 %v1242, 32
        %v2031 = vpop.permute.xlu0 %2030
        %2032 = vrot.lane.b32.xlu0 %v1244, 32
        %v2033 = vpop.permute.xlu0 %2032
        %v2035 = vsel %vm1245, %v2031, 0
        %v2038 = vsel %vm1245, %v2033, 0
        %2040 = vmatprep.subr.bf16.mxu0 0
        %2041 = vmatpush1.bf16.xpose.msra.mxu0 %v2038
        %2042 = vmatprep.subr.bf16.mxu0 0
        %2043 = vmatpush1.bf16.xpose.msra.mxu0 0
        %2044 = vmatprep.subr.bf16.mxu0 0
        %2045 = vmatpush1.bf16.xpose.msra.mxu0 0
        %2046 = vmatprep.subr.bf16.mxu0 0
        %2047 = vmatpush1.bf16.xpose.msra.mxu0 0
        %2048 = vmatprep.subr.bf16.mxu0 0
        %2049 = vmatpush1.bf16.xpose.msra.mxu0 0
        %2050 = vmatprep.subr.bf16.mxu0 0
        %2051 = vmatpush1.bf16.xpose.msra.mxu0 0
        %2052 = vmatprep.subr.bf16.mxu0 0
        %2053 = vmatpush1.bf16.xpose.msra.mxu0 0
        %2054 = vmatprep.subr.bf16.mxu0 0
        %2055 = vmatpush1.bf16.xpose.msra.mxu0 0
        %2056 = vmatprep.subr.bf16.mxu0 0
        %2057 = vmatpush1.bf16.xpose.msra.mxu0 0
        %2058 = vmatprep.subr.bf16.mxu0 0
        %2059 = vmatpush1.bf16.xpose.msra.mxu0 0
        %2060 = vmatprep.subr.bf16.mxu0 0
        %2061 = vmatpush1.bf16.xpose.msra.mxu0 0
        %2062 = vmatprep.subr.bf16.mxu0 0
        %2063 = vmatpush1.bf16.xpose.msra.mxu0 0
        %2064 = vmatprep.subr.bf16.mxu0 0
        %2065 = vmatpush1.bf16.xpose.msra.mxu0 0
        %2066 = vmatprep.subr.bf16.mxu0 0
        %2067 = vmatpush1.bf16.xpose.msra.mxu0 0
        %2068 = vmatprep.subr.bf16.mxu0 0
        %2069 = vmatpush1.bf16.xpose.msra.mxu0 0
        %2070 = vmatprep.subr.bf16.mxu0 0
        %2071 = vmatpush1.bf16.xpose.msra.mxu0 0
        %2072 = vmatprep.mubr.bf16.mxu0 0
        %2073 = vmatmul.mubr.bf16.gmra.mrb[0].mxu0 %v2035
        %v2074 = vpop.f32.mrb[0].mxu0
        %v2075 = vadd.f32 0.0, %v2074
        %v2076 = vpop.f32.mrb[0].mxu0
        %v2077 = vpop.f32.mrb[0].mxu0
        %v2078 = vadd.f32 0.0, %v2077
        %v2079 = vpop.f32.mrb[0].mxu0
        %2080 = vdwg.mxu0
        %v2081 = vmul.f32 %v2024, 0.17677669
        %v2082 = vmul.f32 %v2027, 0.17677669
        %v2083 = vmul.f32 %v2075, 0.17677669
        %v2084 = vmul.f32 %v2078, 0.17677669
        %v2085 = vsel %vm1344, %v2081, -inf
        %2086 = vmax.xlane.f32.xlu0 %v2085
        %v2087 = vpop.xlane.xlu0 %2086
        %v2088 = vsel %vm1344, %v2082, -inf
        %2089 = vmax.xlane.f32.xlu0 %v2088
        %v2090 = vpop.xlane.xlu0 %2089
        %v2091 = vsel %vm1344, %v2083, -inf
        %2092 = vmax.xlane.f32.xlu0 %v2091
        %v2093 = vpop.xlane.xlu0 %2092
        %v2094 = vsel %vm1344, %v2084, -inf
        %2095 = vmax.xlane.f32.xlu0 %v2094
        %v2096 = vpop.xlane.xlu0 %2095
        %v2097 = vsub.f32 %v2081, %v2087
        %v2098 = vsub.f32 %v2082, %v2090
        %v2099 = vsub.f32 %v2083, %v2093
        %v2100 = vsub.f32 %v2084, %v2096
        %v2101 = vmul.f32 %v2097, 1.442695
        %v2102 = vpow.pop %v2101
        %v2103 = vmul.f32 %v2098, 1.442695
        %v2104 = vpow.pop %v2103
        %v2105 = vmul.f32 %v2099, 1.442695
        %v2106 = vpow.pop %v2105
        %v2107 = vmul.f32 %v2100, 1.442695
        %v2108 = vpow.pop %v2107
        %v2109 = vsel %vm1344, %v2102, 0.0
        %2110 = vadd.xlane.f32.xlu0 %v2109
        %v2111 = vpop.xlane.xlu0 %2110
        %v2112 = vsel %vm1344, %v2104, 0.0
        %2113 = vadd.xlane.f32.xlu0 %v2112
        %v2114 = vpop.xlane.xlu0 %2113
        %v2115 = vsel %vm1344, %v2106, 0.0
        %2116 = vadd.xlane.f32.xlu0 %v2115
        %v2117 = vpop.xlane.xlu0 %2116
        %v2118 = vsel %vm1344, %v2108, 0.0
        %2119 = vadd.xlane.f32.xlu0 %v2118
        %v2120 = vpop.xlane.xlu0 %2119
        %v2121 = vrcp.pop %v2111
        %v2122 = vrcp.pop %v2114
        %v2123 = vrcp.pop %v2117
        %v2124 = vrcp.pop %v2120
        %v2125 = vmul.f32 %v2102, %v2121
        %v2126 = vmul.f32 %v2104, %v2122
        %v2127 = vmul.f32 %v2106, %v2123
        %v2128 = vmul.f32 %v2108, %v2124
        %v2129 = vpack.c.bf16 %v2126, %v2125
        %v2130 = vpack.c.bf16 %v2128, %v2127
        %2131 = vrot.lane.b32.xlu0 %v1391, 32
        %v2132 = vpop.permute.xlu0 %2131
        %v2135 = vsel %vm1344, %v2129, 0
        %2137 = vmatprep.subr.bf16.mxu0 0
        %2138 = vmatpush1.bf16.msra.mxu0 %v2132
        %2139 = vmatprep.subr.bf16.mxu0 0
        %2140 = vmatpush1.bf16.msra.mxu0 0
        %2141 = vmatprep.subr.bf16.mxu0 0
        %2142 = vmatpush1.bf16.msra.mxu0 0
        %2143 = vmatprep.subr.bf16.mxu0 0
        %2144 = vmatpush1.bf16.msra.mxu0 0
        %2145 = vmatprep.subr.bf16.mxu0 0
        %2146 = vmatpush1.bf16.msra.mxu0 0
        %2147 = vmatprep.subr.bf16.mxu0 0
        %2148 = vmatpush1.bf16.msra.mxu0 0
        %2149 = vmatprep.subr.bf16.mxu0 0
        %2150 = vmatpush1.bf16.msra.mxu0 0
        %2151 = vmatprep.subr.bf16.mxu0 0
        %2152 = vmatpush1.bf16.msra.mxu0 0
        %2153 = vmatprep.subr.bf16.mxu0 0
        %2154 = vmatpush1.bf16.msra.mxu0 0
        %2155 = vmatprep.subr.bf16.mxu0 0
        %2156 = vmatpush1.bf16.msra.mxu0 0
        %2157 = vmatprep.subr.bf16.mxu0 0
        %2158 = vmatpush1.bf16.msra.mxu0 0
        %2159 = vmatprep.subr.bf16.mxu0 0
        %2160 = vmatpush1.bf16.msra.mxu0 0
        %2161 = vmatprep.subr.bf16.mxu0 0
        %2162 = vmatpush1.bf16.msra.mxu0 0
        %2163 = vmatprep.subr.bf16.mxu0 0
        %2164 = vmatpush1.bf16.msra.mxu0 0
        %2165 = vmatprep.subr.bf16.mxu0 0
        %2166 = vmatpush1.bf16.msra.mxu0 0
        %2167 = vmatprep.subr.bf16.mxu0 0
        %2168 = vmatpush1.bf16.msra.mxu0 0
        %2169 = vmatprep.mubr.bf16.mxu0 0
        %2170 = vmatmul.mubr.bf16.gmra.mrb[0].mxu0 %v2135
        %v2171 = vpop.f32.mrb[0].mxu0
        %v2172 = vadd.f32 0.0, %v2171
        %v2173 = vpop.f32.mrb[0].mxu0
        %v2174 = vpop.f32.mrb[0].mxu0
        %v2175 = vadd.f32 0.0, %v2174
        %v2176 = vpop.f32.mrb[0].mxu0
        %2177 = vdwg.mxu0
        %2178 = vrot.lane.b32.xlu0 %v1392, 32
        %v2179 = vpop.permute.xlu0 %2178
        %v2182 = vsel %vm1344, %v2130, 0
        %2184 = vmatprep.subr.bf16.mxu0 0
        %2185 = vmatpush1.bf16.msra.mxu0 %v2179
        %2186 = vmatprep.subr.bf16.mxu0 0
        %2187 = vmatpush1.bf16.msra.mxu0 0
        %2188 = vmatprep.subr.bf16.mxu0 0
        %2189 = vmatpush1.bf16.msra.mxu0 0
        %2190 = vmatprep.subr.bf16.mxu0 0
        %2191 = vmatpush1.bf16.msra.mxu0 0
        %2192 = vmatprep.subr.bf16.mxu0 0
        %2193 = vmatpush1.bf16.msra.mxu0 0
        %2194 = vmatprep.subr.bf16.mxu0 0
        %2195 = vmatpush1.bf16.msra.mxu0 0
        %2196 = vmatprep.subr.bf16.mxu0 0
        %2197 = vmatpush1.bf16.msra.mxu0 0
        %2198 = vmatprep.subr.bf16.mxu0 0
        %2199 = vmatpush1.bf16.msra.mxu0 0
        %2200 = vmatprep.subr.bf16.mxu0 0
        %2201 = vmatpush1.bf16.msra.mxu0 0
        %2202 = vmatprep.subr.bf16.mxu0 0
        %2203 = vmatpush1.bf16.msra.mxu0 0
        %2204 = vmatprep.subr.bf16.mxu0 0
        %2205 = vmatpush1.bf16.msra.mxu0 0
        %2206 = vmatprep.subr.bf16.mxu0 0
        %2207 = vmatpush1.bf16.msra.mxu0 0
        %2208 = vmatprep.subr.bf16.mxu0 0
        %2209 = vmatpush1.bf16.msra.mxu0 0
        %2210 = vmatprep.subr.bf16.mxu0 0
        %2211 = vmatpush1.bf16.msra.mxu0 0
        %2212 = vmatprep.subr.bf16.mxu0 0
        %2213 = vmatpush1.bf16.msra.mxu0 0
        %2214 = vmatprep.subr.bf16.mxu0 0
        %2215 = vmatpush1.bf16.msra.mxu0 0
        %2216 = vmatprep.mubr.bf16.mxu0 0
        %2217 = vmatmul.mubr.bf16.gmra.mrb[0].mxu0 %v2182
        %v2218 = vpop.f32.mrb[0].mxu0
        %v2219 = vadd.f32 0.0, %v2218
        %v2220 = vpop.f32.mrb[0].mxu0
        %v2221 = vpop.f32.mrb[0].mxu0
        %v2222 = vadd.f32 0.0, %v2221
        %v2223 = vpop.f32.mrb[0].mxu0
        %2224 = vdwg.mxu0
        %2229 = vrot.lane.b32.xlu0 %v1679, 32
        %v2230 = vpop.permute.xlu0 %2229
        %2231 = vrot.lane.b32.xlu0 %v1682, 32
        %v2232 = vpop.permute.xlu0 %2231
        %2233 = vrot.lane.b32.xlu0 %v1727, 32
        %v2234 = vpop.permute.xlu0 %2233
        %2235 = vrot.lane.b32.xlu0 %v1730, 32
        %v2236 = vpop.permute.xlu0 %2235
        %2245 = vrot.lane.b32.xlu0 %v1926, 64
        %v2246 = vpop.permute.xlu0 %2245
        %2247 = vrot.lane.b32.xlu0 %v1929, 64
        %v2248 = vpop.permute.xlu0 %2247
        %2249 = vrot.lane.b32.xlu0 %v1973, 64
        %v2250 = vpop.permute.xlu0 %2249
        %2251 = vrot.lane.b32.xlu0 %v1976, 64
        %v2252 = vpop.permute.xlu0 %2251
        %2261 = vrot.lane.b32.xlu0 %v2172, 96
        %v2262 = vpop.permute.xlu0 %2261
        %2263 = vrot.lane.b32.xlu0 %v2175, 96
        %v2264 = vpop.permute.xlu0 %2263
        %2265 = vrot.lane.b32.xlu0 %v2219, 96
        %v2266 = vpop.permute.xlu0 %2265
        %2267 = vrot.lane.b32.xlu0 %v2222, 96
        %v2268 = vpop.permute.xlu0 %2267
        %v2273 = vsel %vm1245, %v1431, %v2230
        %v2274 = vsel %vm1245, %v1434, %v2232
        %v2275 = vsel %vm1245, %v1475, %v2234
        %v2276 = vsel %vm1245, %v1478, %v2236
        %vm2277 = vcmask 523264
        %v2278 = vsel %vm2277, %v2273, %v2246
        %v2279 = vsel %vm2277, %v2274, %v2248
        %v2280 = vsel %vm2277, %v2275, %v2250
        %v2281 = vsel %vm2277, %v2276, %v2252
        %vm2282 = vcmask 785408
        %v2283 = vsel %vm2282, %v2278, %v2262
        %v2284 = vsel %vm2282, %v2279, %v2264
        %v2285 = vsel %vm2282, %v2280, %v2266
        %v2286 = vsel %vm2282, %v2281, %v2268
        %v2287 = vld [vmem:[%s733] sm:$0xf]
        %v2288 = vld [vmem:[%s733 + $0x4] sm:$0xf]
        %v2289 = vld [vmem:[%s733 + $0x8] sm:$0xf]
        %v2290 = vld [vmem:[%s733 + $0xc] sm:$0xf]
        %v2291 = vld [vmem:[%s733 + $0x10] sm:$0xf]
        %v2292 = vld [vmem:[%s733 + $0x14] sm:$0xf]
        %v2293 = vld [vmem:[%s733 + $0x18] sm:$0xf]
        %v2294 = vld [vmem:[%s733 + $0x1c] sm:$0xf]
        %v2295 = vld [vmem:[%s733 + $0x20] sm:$0xf]
        %v2296 = vld [vmem:[%s733 + $0x24] sm:$0xf]
        %v2297 = vld [vmem:[%s733 + $0x28] sm:$0xf]
        %v2298 = vld [vmem:[%s733 + $0x2c] sm:$0xf]
        %v2299 = vld [vmem:[%s733 + $0x30] sm:$0xf]
        %v2300 = vld [vmem:[%s733 + $0x34] sm:$0xf]
        %v2301 = vld [vmem:[%s733 + $0x38] sm:$0xf]
        %v2302 = vld [vmem:[%s733 + $0x3c] sm:$0xf]
        %v2303 = vpack.c.bf16 %v2284, %v2283
        %v2304 = vpack.c.bf16 %v2286, %v2285
        %v2321 = vunpack.c.l.b16 %v2287
        %v2322 = vunpack.c.l.b16 %v2288
        %v2323 = vunpack.c.l.b16 %v2289
        %v2324 = vunpack.c.l.b16 %v2290
        %v2325 = vunpack.c.l.b16 %v2291
        %v2326 = vunpack.c.l.b16 %v2292
        %v2327 = vunpack.c.l.b16 %v2293
        %v2328 = vunpack.c.l.b16 %v2294
        %v2329 = vunpack.c.l.b16 %v2295
        %v2330 = vunpack.c.l.b16 %v2296
        %v2331 = vunpack.c.l.b16 %v2297
        %v2332 = vunpack.c.l.b16 %v2298
        %v2333 = vunpack.c.l.b16 %v2299
        %v2334 = vunpack.c.l.b16 %v2300
        %v2335 = vunpack.c.l.b16 %v2301
        %v2336 = vunpack.c.l.b16 %v2302
        %v2337 = vpack.c.b16 %v2322, %v2321
        %v2338 = vpack.c.b16 %v2324, %v2323
        %v2339 = vpack.c.b16 %v2326, %v2325
        %v2340 = vpack.c.b16 %v2328, %v2327
        %v2341 = vpack.c.b16 %v2330, %v2329
        %v2342 = vpack.c.b16 %v2332, %v2331
        %v2343 = vpack.c.b16 %v2334, %v2333
        %v2344 = vpack.c.b16 %v2336, %v2335
        %2353 = vmatprep.subr.bf16.mxu0 0
        %2354 = vmatpush1.bf16.msra.mxu0 %v2337
        %2355 = vmatprep.subr.bf16.mxu0 0
        %2356 = vmatpush1.bf16.msra.mxu0 %v2338
        %2357 = vmatprep.subr.bf16.mxu0 0
        %2358 = vmatpush1.bf16.msra.mxu0 %v2339
        %2359 = vmatprep.subr.bf16.mxu0 0
        %2360 = vmatpush1.bf16.msra.mxu0 %v2340
        %2361 = vmatprep.subr.bf16.mxu0 0
        %2362 = vmatpush1.bf16.msra.mxu0 %v2341
        %2363 = vmatprep.subr.bf16.mxu0 0
        %2364 = vmatpush1.bf16.msra.mxu0 %v2342
        %2365 = vmatprep.subr.bf16.mxu0 0
        %2366 = vmatpush1.bf16.msra.mxu0 %v2343
        %2367 = vmatprep.subr.bf16.mxu0 0
        %2368 = vmatpush1.bf16.msra.mxu0 %v2344
        %2369 = vmatprep.subr.bf16.mxu0 0
        %2370 = vmatpush1.bf16.msra.mxu0 0
        %2371 = vmatprep.subr.bf16.mxu0 0
        %2372 = vmatpush1.bf16.msra.mxu0 0
        %2373 = vmatprep.subr.bf16.mxu0 0
        %2374 = vmatpush1.bf16.msra.mxu0 0
        %2375 = vmatprep.subr.bf16.mxu0 0
        %2376 = vmatpush1.bf16.msra.mxu0 0
        %2377 = vmatprep.subr.bf16.mxu0 0
        %2378 = vmatpush1.bf16.msra.mxu0 0
        %2379 = vmatprep.subr.bf16.mxu0 0
        %2380 = vmatpush1.bf16.msra.mxu0 0
        %2381 = vmatprep.subr.bf16.mxu0 0
        %2382 = vmatpush1.bf16.msra.mxu0 0
        %2383 = vmatprep.subr.bf16.mxu0 0
        %2384 = vmatpush1.bf16.msra.mxu0 0
        %2385 = vmatprep.mubr.bf16.mxu0 0
        %2386 = vmatmul.mubr.bf16.gmra.mrb[0].mxu0 %v2303
        %v2387 = vpop.f32.mrb[0].mxu0
        %v2388 = vadd.f32 0.0, %v2387
        %v2389 = vpop.f32.mrb[0].mxu0
        %v2390 = vpop.f32.mrb[0].mxu0
        %v2391 = vadd.f32 0.0, %v2390
        %v2392 = vpop.f32.mrb[0].mxu0
        %2393 = vmatprep.mubr.bf16.mxu0 0
        %2394 = vmatmul.mubr.bf16.gmra.mrb[0].mxu0 %v2304
        %v2395 = vpop.f32.mrb[0].mxu0
        %v2396 = vadd.f32 0.0, %v2395
        %v2397 = vpop.f32.mrb[0].mxu0
        %v2398 = vpop.f32.mrb[0].mxu0
        %v2399 = vadd.f32 0.0, %v2398
        %v2400 = vpop.f32.mrb[0].mxu0
        %2401 = vdwg.mxu0
        %v2402 = vadd.f32 %v889, %v2388
        %v2403 = vadd.f32 %v890, %v2391
        %v2404 = vadd.f32 %v891, %v2396
        %v2405 = vadd.f32 %v892, %v2399
        %v2406 = vld [vmem:[%s855] sm:$0x1]
        %v2408 = vlaneseq
        %v2409 = vshrl.u32 %v2408, 7
        %v2410 = vsub.s32 0, %v2409
        %v2411 = vrot.slane %v2406, %v2410
        %v2413 = vadd.f32 %v2402, %v2411
        %v2414 = vadd.f32 %v2403, %v2411
        %v2415 = vadd.f32 %v2404, %v2411
        %v2416 = vadd.f32 %v2405, %v2411
        %v2417 = vld [vmem:[%s858] sm:$0x1]
        %v2418 = vld [vmem:[%s861] sm:$0x1]
        %2419 = vadd.xlane.f32.xlu0 %v2413
        %v2420 = vpop.xlane.xlu0 %2419
        %2421 = vadd.xlane.f32.xlu0 %v2414
        %v2422 = vpop.xlane.xlu0 %2421
        %2423 = vadd.xlane.f32.xlu0 %v2415
        %v2424 = vpop.xlane.xlu0 %2423
        %2425 = vadd.xlane.f32.xlu0 %v2416
        %v2426 = vpop.xlane.xlu0 %2425
        %v2427 = vmul.f32 %v2420, %v903
        %v2428 = vmul.f32 %v2422, %v903
        %v2429 = vmul.f32 %v2424, %v903
        %v2430 = vmul.f32 %v2426, %v903
        %v2431 = vsub.f32 %v2413, %v2427
        %v2432 = vsub.f32 %v2414, %v2428
        %v2433 = vsub.f32 %v2415, %v2429
        %v2434 = vsub.f32 %v2416, %v2430
        %v2435 = vmul.f32 %v2431, %v2431
        %v2436 = vmul.f32 %v2432, %v2432
        %v2437 = vmul.f32 %v2433, %v2433
        %v2438 = vmul.f32 %v2434, %v2434
        %2439 = vadd.xlane.f32.xlu0 %v2435
        %v2440 = vpop.xlane.xlu0 %2439
        %2441 = vadd.xlane.f32.xlu0 %v2436
        %v2442 = vpop.xlane.xlu0 %2441
        %2443 = vadd.xlane.f32.xlu0 %v2437
        %v2444 = vpop.xlane.xlu0 %2443
        %2445 = vadd.xlane.f32.xlu0 %v2438
        %v2446 = vpop.xlane.xlu0 %2445
        %v2447 = vmul.f32 %v2440, %v903
        %v2448 = vmul.f32 %v2442, %v903
        %v2449 = vmul.f32 %v2444, %v903
        %v2450 = vmul.f32 %v2446, %v903
        %v2451 = vadd.f32 %v2447, 1e-05
        %v2452 = vadd.f32 %v2448, 1e-05
        %v2453 = vadd.f32 %v2449, 1e-05
        %v2454 = vadd.f32 %v2450, 1e-05
        %v2455 = vrsqrt.pop %v2451
        %v2456 = vrsqrt.pop %v2452
        %v2457 = vrsqrt.pop %v2453
        %v2458 = vrsqrt.pop %v2454
        %v2459 = vmul.f32 %v2431, %v2455
        %v2460 = vmul.f32 %v2432, %v2456
        %v2461 = vmul.f32 %v2433, %v2457
        %v2462 = vmul.f32 %v2434, %v2458
        %v2464 = vlaneseq
        %v2465 = vshrl.u32 %v2464, 7
        %v2466 = vsub.s32 0, %v2465
        %v2467 = vrot.slane %v2417, %v2466
        %v2469 = vmul.f32 %v2459, %v2467
        %v2470 = vmul.f32 %v2460, %v2467
        %v2471 = vmul.f32 %v2461, %v2467
        %v2472 = vmul.f32 %v2462, %v2467
        %v2474 = vlaneseq
        %v2475 = vshrl.u32 %v2474, 7
        %v2476 = vsub.s32 0, %v2475
        %v2477 = vrot.slane %v2418, %v2476
        %v2479 = vadd.f32 %v2469, %v2477
        %v2480 = vadd.f32 %v2470, %v2477
        %v2481 = vadd.f32 %v2471, %v2477
        %v2482 = vadd.f32 %v2472, %v2477
        %v2483 = vld [vmem:[%s742] sm:$0xff]
        %v2484 = vld [vmem:[%s742 + $0x8] sm:$0xff]
        %v2485 = vld [vmem:[%s742 + $0x10] sm:$0xff]
        %v2486 = vld [vmem:[%s742 + $0x18] sm:$0xff]
        %v2487 = vld [vmem:[%s742 + $0x20] sm:$0xff]
        %v2488 = vld [vmem:[%s742 + $0x28] sm:$0xff]
        %v2489 = vld [vmem:[%s742 + $0x30] sm:$0xff]
        %v2490 = vld [vmem:[%s742 + $0x38] sm:$0xff]
        %v2491 = vld [vmem:[%s742 + $0x40] sm:$0xff]
        %v2492 = vld [vmem:[%s742 + $0x48] sm:$0xff]
        %v2493 = vld [vmem:[%s742 + $0x50] sm:$0xff]
        %v2494 = vld [vmem:[%s742 + $0x58] sm:$0xff]
        %v2495 = vld [vmem:[%s742 + $0x60] sm:$0xff]
        %v2496 = vld [vmem:[%s742 + $0x68] sm:$0xff]
        %v2497 = vld [vmem:[%s742 + $0x70] sm:$0xff]
        %v2498 = vld [vmem:[%s742 + $0x78] sm:$0xff]
        %v2499 = vpack.c.bf16 %v2480, %v2479
        %v2500 = vpack.c.bf16 %v2482, %v2481
        %v2501 = vld [vmem:[%s865] sm:$0x3]
        %v2503 = vlaneseq
        %v2504 = vshrl.u32 %v2503, 7
        %v2505 = vsub.s32 0, %v2504
        %v2506 = vrot.slane %v2501, %v2505
        %v2507 = vlaneseq
        %v2508 = vshrl.u32 %v2507, 7
        %v2509 = vsub.s32 1, %v2508
        %v2510 = vrot.slane %v2501, %v2509
        %v2529 = vunpack.c.l.b16 %v2483
        %v2530 = vunpack.c.h.b16 %v2483
        %v2531 = vunpack.c.l.b16 %v2484
        %v2532 = vunpack.c.h.b16 %v2484
        %v2533 = vunpack.c.l.b16 %v2485
        %v2534 = vunpack.c.h.b16 %v2485
        %v2535 = vunpack.c.l.b16 %v2486
        %v2536 = vunpack.c.h.b16 %v2486
        %v2537 = vunpack.c.l.b16 %v2487
        %v2538 = vunpack.c.h.b16 %v2487
        %v2539 = vunpack.c.l.b16 %v2488
        %v2540 = vunpack.c.h.b16 %v2488
        %v2541 = vunpack.c.l.b16 %v2489
        %v2542 = vunpack.c.h.b16 %v2489
        %v2543 = vunpack.c.l.b16 %v2490
        %v2544 = vunpack.c.h.b16 %v2490
        %v2545 = vunpack.c.l.b16 %v2491
        %v2546 = vunpack.c.h.b16 %v2491
        %v2547 = vunpack.c.l.b16 %v2492
        %v2548 = vunpack.c.h.b16 %v2492
        %v2549 = vunpack.c.l.b16 %v2493
        %v2550 = vunpack.c.h.b16 %v2493
        %v2551 = vunpack.c.l.b16 %v2494
        %v2552 = vunpack.c.h.b16 %v2494
        %v2553 = vunpack.c.l.b16 %v2495
        %v2554 = vunpack.c.h.b16 %v2495
        %v2555 = vunpack.c.l.b16 %v2496
        %v2556 = vunpack.c.h.b16 %v2496
        %v2557 = vunpack.c.l.b16 %v2497
        %v2558 = vunpack.c.h.b16 %v2497
        %v2559 = vunpack.c.l.b16 %v2498
        %v2560 = vunpack.c.h.b16 %v2498
        %v2561 = vpack.c.b16 %v2531, %v2529
        %v2562 = vpack.c.b16 %v2532, %v2530
        %v2563 = vpack.c.b16 %v2535, %v2533
        %v2564 = vpack.c.b16 %v2536, %v2534
        %v2565 = vpack.c.b16 %v2539, %v2537
        %v2566 = vpack.c.b16 %v2540, %v2538
        %v2567 = vpack.c.b16 %v2543, %v2541
        %v2568 = vpack.c.b16 %v2544, %v2542
        %v2569 = vpack.c.b16 %v2547, %v2545
        %v2570 = vpack.c.b16 %v2548, %v2546
        %v2571 = vpack.c.b16 %v2551, %v2549
        %v2572 = vpack.c.b16 %v2552, %v2550
        %v2573 = vpack.c.b16 %v2555, %v2553
        %v2574 = vpack.c.b16 %v2556, %v2554
        %v2575 = vpack.c.b16 %v2559, %v2557
        %v2576 = vpack.c.b16 %v2560, %v2558
        %2593 = vmatprep.subr.bf16.mxu0 %v2562
        %2594 = vmatpush1.bf16.msra.mxu0 %v2561
        %2595 = vmatprep.subr.bf16.mxu0 %v2564
        %2596 = vmatpush1.bf16.msra.mxu0 %v2563
        %2597 = vmatprep.subr.bf16.mxu0 %v2566
        %2598 = vmatpush1.bf16.msra.mxu0 %v2565
        %2599 = vmatprep.subr.bf16.mxu0 %v2568
        %2600 = vmatpush1.bf16.msra.mxu0 %v2567
        %2601 = vmatprep.subr.bf16.mxu0 %v2570
        %2602 = vmatpush1.bf16.msra.mxu0 %v2569
        %2603 = vmatprep.subr.bf16.mxu0 %v2572
        %2604 = vmatpush1.bf16.msra.mxu0 %v2571
        %2605 = vmatprep.subr.bf16.mxu0 %v2574
        %2606 = vmatpush1.bf16.msra.mxu0 %v2573
        %2607 = vmatprep.subr.bf16.mxu0 %v2576
        %2608 = vmatpush1.bf16.msra.mxu0 %v2575
        %2609 = vmatprep.subr.bf16.mxu0 0
        %2610 = vmatpush1.bf16.msra.mxu0 0
        %2611 = vmatprep.subr.bf16.mxu0 0
        %2612 = vmatpush1.bf16.msra.mxu0 0
        %2613 = vmatprep.subr.bf16.mxu0 0
        %2614 = vmatpush1.bf16.msra.mxu0 0
        %2615 = vmatprep.subr.bf16.mxu0 0
        %2616 = vmatpush1.bf16.msra.mxu0 0
        %2617 = vmatprep.subr.bf16.mxu0 0
        %2618 = vmatpush1.bf16.msra.mxu0 0
        %2619 = vmatprep.subr.bf16.mxu0 0
        %2620 = vmatpush1.bf16.msra.mxu0 0
        %2621 = vmatprep.subr.bf16.mxu0 0
        %2622 = vmatpush1.bf16.msra.mxu0 0
        %2623 = vmatprep.subr.bf16.mxu0 0
        %2624 = vmatpush1.bf16.msra.mxu0 0
        %2625 = vmatprep.mubr.bf16.mxu0 0
        %2626 = vmatmul.mubr.bf16.gmra.mrb[0].mxu0 %v2499
        %v2627 = vpop.f32.mrb[0].mxu0
        %v2628 = vadd.f32 %v2506, %v2627
        %v2629 = vpop.f32.mrb[0].mxu0
        %v2630 = vadd.f32 %v2510, %v2629
        %v2631 = vpop.f32.mrb[0].mxu0
        %v2632 = vadd.f32 %v2506, %v2631
        %v2633 = vpop.f32.mrb[0].mxu0
        %v2634 = vadd.f32 %v2510, %v2633
        %2635 = vmatprep.mubr.bf16.mxu0 0
        %2636 = vmatmul.mubr.bf16.gmra.mrb[0].mxu0 %v2500
        %v2637 = vpop.f32.mrb[0].mxu0
        %v2638 = vadd.f32 %v2506, %v2637
        %v2639 = vpop.f32.mrb[0].mxu0
        %v2640 = vadd.f32 %v2510, %v2639
        %v2641 = vpop.f32.mrb[0].mxu0
        %v2642 = vadd.f32 %v2506, %v2641
        %v2643 = vpop.f32.mrb[0].mxu0
        %v2644 = vadd.f32 %v2510, %v2643
        %2645 = vdwg.mxu0
        %v2646 = vmul.f32 %v2628, 0.5
        %v2647 = vmul.f32 %v2630, 0.5
        %v2648 = vmul.f32 %v2632, 0.5
        %v2649 = vmul.f32 %v2634, 0.5
        %v2650 = vmul.f32 %v2638, 0.5
        %v2651 = vmul.f32 %v2640, 0.5
        %v2652 = vmul.f32 %v2642, 0.5
        %v2653 = vmul.f32 %v2644, 0.5
        %v2654 = vmul.f32 %v2628, 0.70710677
        %v2655 = vmul.f32 %v2630, 0.70710677
        %v2656 = vmul.f32 %v2632, 0.70710677
        %v2657 = vmul.f32 %v2634, 0.70710677
        %v2658 = vmul.f32 %v2638, 0.70710677
        %v2659 = vmul.f32 %v2640, 0.70710677
        %v2660 = vmul.f32 %v2642, 0.70710677
        %v2661 = vmul.f32 %v2644, 0.70710677
        %v2662 = verf.f32.pop %v2654
        %v2663 = verf.f32.pop %v2655
        %v2664 = verf.f32.pop %v2656
        %v2665 = verf.f32.pop %v2657
        %v2666 = verf.f32.pop %v2658
        %v2667 = verf.f32.pop %v2659
        %v2668 = verf.f32.pop %v2660
        %v2669 = verf.f32.pop %v2661
        %v2670 = vadd.f32 %v2662, 1.0
        %v2671 = vadd.f32 %v2663, 1.0
        %v2672 = vadd.f32 %v2664, 1.0
        %v2673 = vadd.f32 %v2665, 1.0
        %v2674 = vadd.f32 %v2666, 1.0
        %v2675 = vadd.f32 %v2667, 1.0
        %v2676 = vadd.f32 %v2668, 1.0
        %v2677 = vadd.f32 %v2669, 1.0
        %v2678 = vmul.f32 %v2646, %v2670
        %v2679 = vmul.f32 %v2647, %v2671
        %v2680 = vmul.f32 %v2648, %v2672
        %v2681 = vmul.f32 %v2649, %v2673
        %v2682 = vmul.f32 %v2650, %v2674
        %v2683 = vmul.f32 %v2651, %v2675
        %v2684 = vmul.f32 %v2652, %v2676
        %v2685 = vmul.f32 %v2653, %v2677
        %v2686 = vld [vmem:[%s751] sm:$0xf]
        %v2687 = vld [vmem:[%s751 + $0x4] sm:$0xf]
        %v2688 = vld [vmem:[%s751 + $0x8] sm:$0xf]
        %v2689 = vld [vmem:[%s751 + $0xc] sm:$0xf]
        %v2690 = vld [vmem:[%s751 + $0x10] sm:$0xf]
        %v2691 = vld [vmem:[%s751 + $0x14] sm:$0xf]
        %v2692 = vld [vmem:[%s751 + $0x18] sm:$0xf]
        %v2693 = vld [vmem:[%s751 + $0x1c] sm:$0xf]
        %v2694 = vld [vmem:[%s751 + $0x20] sm:$0xf]
        %v2695 = vld [vmem:[%s751 + $0x24] sm:$0xf]
        %v2696 = vld [vmem:[%s751 + $0x28] sm:$0xf]
        %v2697 = vld [vmem:[%s751 + $0x2c] sm:$0xf]
        %v2698 = vld [vmem:[%s751 + $0x30] sm:$0xf]
        %v2699 = vld [vmem:[%s751 + $0x34] sm:$0xf]
        %v2700 = vld [vmem:[%s751 + $0x38] sm:$0xf]
        %v2701 = vld [vmem:[%s751 + $0x3c] sm:$0xf]
        %v2702 = vld [vmem:[%s751 + $0x40] sm:$0xf]
        %v2703 = vld [vmem:[%s751 + $0x44] sm:$0xf]
        %v2704 = vld [vmem:[%s751 + $0x48] sm:$0xf]
        %v2705 = vld [vmem:[%s751 + $0x4c] sm:$0xf]
        %v2706 = vld [vmem:[%s751 + $0x50] sm:$0xf]
        %v2707 = vld [vmem:[%s751 + $0x54] sm:$0xf]
        %v2708 = vld [vmem:[%s751 + $0x58] sm:$0xf]
        %v2709 = vld [vmem:[%s751 + $0x5c] sm:$0xf]
        %v2710 = vld [vmem:[%s751 + $0x60] sm:$0xf]
        %v2711 = vld [vmem:[%s751 + $0x64] sm:$0xf]
        %v2712 = vld [vmem:[%s751 + $0x68] sm:$0xf]
        %v2713 = vld [vmem:[%s751 + $0x6c] sm:$0xf]
        %v2714 = vld [vmem:[%s751 + $0x70] sm:$0xf]
        %v2715 = vld [vmem:[%s751 + $0x74] sm:$0xf]
        %v2716 = vld [vmem:[%s751 + $0x78] sm:$0xf]
        %v2717 = vld [vmem:[%s751 + $0x7c] sm:$0xf]
        %v2718 = vpack.c.bf16 %v2680, %v2678
        %v2719 = vpack.c.bf16 %v2681, %v2679
        %v2720 = vpack.c.bf16 %v2684, %v2682
        %v2721 = vpack.c.bf16 %v2685, %v2683
        %v2722 = vld [vmem:[%s868] sm:$0x1]
        %v2724 = vlaneseq
        %v2725 = vshrl.u32 %v2724, 7
        %v2726 = vsub.s32 0, %v2725
        %v2727 = vrot.slane %v2722, %v2726
        %v2761 = vunpack.c.l.b16 %v2686
        %v2762 = vunpack.c.l.b16 %v2687
        %v2763 = vunpack.c.l.b16 %v2688
        %v2764 = vunpack.c.l.b16 %v2689
        %v2765 = vunpack.c.l.b16 %v2690
        %v2766 = vunpack.c.l.b16 %v2691
        %v2767 = vunpack.c.l.b16 %v2692
        %v2768 = vunpack.c.l.b16 %v2693
        %v2769 = vunpack.c.l.b16 %v2694
        %v2770 = vunpack.c.l.b16 %v2695
        %v2771 = vunpack.c.l.b16 %v2696
        %v2772 = vunpack.c.l.b16 %v2697
        %v2773 = vunpack.c.l.b16 %v2698
        %v2774 = vunpack.c.l.b16 %v2699
        %v2775 = vunpack.c.l.b16 %v2700
        %v2776 = vunpack.c.l.b16 %v2701
        %v2777 = vunpack.c.l.b16 %v2702
        %v2778 = vunpack.c.l.b16 %v2703
        %v2779 = vunpack.c.l.b16 %v2704
        %v2780 = vunpack.c.l.b16 %v2705
        %v2781 = vunpack.c.l.b16 %v2706
        %v2782 = vunpack.c.l.b16 %v2707
        %v2783 = vunpack.c.l.b16 %v2708
        %v2784 = vunpack.c.l.b16 %v2709
        %v2785 = vunpack.c.l.b16 %v2710
        %v2786 = vunpack.c.l.b16 %v2711
        %v2787 = vunpack.c.l.b16 %v2712
        %v2788 = vunpack.c.l.b16 %v2713
        %v2789 = vunpack.c.l.b16 %v2714
        %v2790 = vunpack.c.l.b16 %v2715
        %v2791 = vunpack.c.l.b16 %v2716
        %v2792 = vunpack.c.l.b16 %v2717
        %v2793 = vpack.c.b16 %v2762, %v2761
        %v2794 = vpack.c.b16 %v2764, %v2763
        %v2795 = vpack.c.b16 %v2766, %v2765
        %v2796 = vpack.c.b16 %v2768, %v2767
        %v2797 = vpack.c.b16 %v2770, %v2769
        %v2798 = vpack.c.b16 %v2772, %v2771
        %v2799 = vpack.c.b16 %v2774, %v2773
        %v2800 = vpack.c.b16 %v2776, %v2775
        %v2801 = vpack.c.b16 %v2778, %v2777
        %v2802 = vpack.c.b16 %v2780, %v2779
        %v2803 = vpack.c.b16 %v2782, %v2781
        %v2804 = vpack.c.b16 %v2784, %v2783
        %v2805 = vpack.c.b16 %v2786, %v2785
        %v2806 = vpack.c.b16 %v2788, %v2787
        %v2807 = vpack.c.b16 %v2790, %v2789
        %v2808 = vpack.c.b16 %v2792, %v2791
        %2825 = vmatprep.subr.bf16.mxu0 0
        %2826 = vmatpush1.bf16.msra.mxu0 %v2793
        %2827 = vmatprep.subr.bf16.mxu0 0
        %2828 = vmatpush1.bf16.msra.mxu0 %v2794
        %2829 = vmatprep.subr.bf16.mxu0 0
        %2830 = vmatpush1.bf16.msra.mxu0 %v2795
        %2831 = vmatprep.subr.bf16.mxu0 0
        %2832 = vmatpush1.bf16.msra.mxu0 %v2796
        %2833 = vmatprep.subr.bf16.mxu0 0
        %2834 = vmatpush1.bf16.msra.mxu0 %v2797
        %2835 = vmatprep.subr.bf16.mxu0 0
        %2836 = vmatpush1.bf16.msra.mxu0 %v2798
        %2837 = vmatprep.subr.bf16.mxu0 0
        %2838 = vmatpush1.bf16.msra.mxu0 %v2799
        %2839 = vmatprep.subr.bf16.mxu0 0
        %2840 = vmatpush1.bf16.msra.mxu0 %v2800
        %2841 = vmatprep.subr.bf16.mxu0 0
        %2842 = vmatpush1.bf16.msra.mxu0 %v2801
        %2843 = vmatprep.subr.bf16.mxu0 0
        %2844 = vmatpush1.bf16.msra.mxu0 %v2802
        %2845 = vmatprep.subr.bf16.mxu0 0
        %2846 = vmatpush1.bf16.msra.mxu0 %v2803
        %2847 = vmatprep.subr.bf16.mxu0 0
        %2848 = vmatpush1.bf16.msra.mxu0 %v2804
        %2849 = vmatprep.subr.bf16.mxu0 0
        %2850 = vmatpush1.bf16.msra.mxu0 %v2805
        %2851 = vmatprep.subr.bf16.mxu0 0
        %2852 = vmatpush1.bf16.msra.mxu0 %v2806
        %2853 = vmatprep.subr.bf16.mxu0 0
        %2854 = vmatpush1.bf16.msra.mxu0 %v2807
        %2855 = vmatprep.subr.bf16.mxu0 0
        %2856 = vmatpush1.bf16.msra.mxu0 %v2808
        %2857 = vmatprep.mubr.bf16.mxu0 %v2719
        %2858 = vmatmul.mubr.bf16.gmra.mrb[0].mxu0 %v2718
        %v2859 = vpop.f32.mrb[0].mxu0
        %v2860 = vadd.f32 %v2727, %v2859
        %v2861 = vpop.f32.mrb[0].mxu0
        %v2862 = vpop.f32.mrb[0].mxu0
        %v2863 = vadd.f32 %v2727, %v2862
        %v2864 = vpop.f32.mrb[0].mxu0
        %2865 = vmatprep.mubr.bf16.mxu0 %v2721
        %2866 = vmatmul.mubr.bf16.gmra.mrb[0].mxu0 %v2720
        %v2867 = vpop.f32.mrb[0].mxu0
        %v2868 = vadd.f32 %v2727, %v2867
        %v2869 = vpop.f32.mrb[0].mxu0
        %v2870 = vpop.f32.mrb[0].mxu0
        %v2871 = vadd.f32 %v2727, %v2870
        %v2872 = vpop.f32.mrb[0].mxu0
        %2873 = vdwg.mxu0
        %v2874 = vadd.f32 %v2413, %v2860
        %v2875 = vadd.f32 %v2414, %v2863
        %v2876 = vadd.f32 %v2415, %v2868
        %v2877 = vadd.f32 %v2416, %v2871
        %2878 = vst [vmem:[#allocation2] sm:$0xff] %v2874
        %2879 = vst [vmem:[#allocation2 + $0x8] sm:$0xff] %v2875
        %2880 = vst [vmem:[#allocation2 + $0x10] sm:$0xff] %v2876
        %2881 = vst [vmem:[#allocation2 + $0x18] sm:$0xff] %v2877
        %p2882 = scmp.eq.s32.totalorder %s39, 1
        // Predicated region
        $region121: #{tpu_custom_call.1} parent=83 // pred_check
          %p2883 = pneg %p2882
        $region122: #{tpu_custom_call.1} parent=83 // pred_check_branch
          %2885 = sbr.rel (%p2883) target = $region124
        $region123: #{tpu_custom_call.1} parent=83 // pred_region
          %v2886 = vld [vmem:[%s14] sm:$0x1]
          %v2887 = vld [vmem:[%s15] sm:$0x1]
          %2888 = vadd.xlane.f32.xlu0 %v2874
          %v2889 = vpop.xlane.xlu0 %2888
          %2890 = vadd.xlane.f32.xlu0 %v2875
          %v2891 = vpop.xlane.xlu0 %2890
          %2892 = vadd.xlane.f32.xlu0 %v2876
          %v2893 = vpop.xlane.xlu0 %2892
          %2894 = vadd.xlane.f32.xlu0 %v2877
          %v2895 = vpop.xlane.xlu0 %2894
          %v2896 = vmul.f32 %v2889, %v903
          %v2897 = vmul.f32 %v2891, %v903
          %v2898 = vmul.f32 %v2893, %v903
          %v2899 = vmul.f32 %v2895, %v903
          %v2900 = vsub.f32 %v2874, %v2896
          %v2901 = vsub.f32 %v2875, %v2897
          %v2902 = vsub.f32 %v2876, %v2898
          %v2903 = vsub.f32 %v2877, %v2899
          %v2904 = vmul.f32 %v2900, %v2900
          %v2905 = vmul.f32 %v2901, %v2901
          %v2906 = vmul.f32 %v2902, %v2902
          %v2907 = vmul.f32 %v2903, %v2903
          %2908 = vadd.xlane.f32.xlu0 %v2904
          %v2909 = vpop.xlane.xlu0 %2908
          %2910 = vadd.xlane.f32.xlu0 %v2905
          %v2911 = vpop.xlane.xlu0 %2910
          %2912 = vadd.xlane.f32.xlu0 %v2906
          %v2913 = vpop.xlane.xlu0 %2912
          %2914 = vadd.xlane.f32.xlu0 %v2907
          %v2915 = vpop.xlane.xlu0 %2914
          %v2916 = vmul.f32 %v2909, %v903
          %v2917 = vmul.f32 %v2911, %v903
          %v2918 = vmul.f32 %v2913, %v903
          %v2919 = vmul.f32 %v2915, %v903
          %v2920 = vadd.f32 %v2916, 1e-05
          %v2921 = vadd.f32 %v2917, 1e-05
          %v2922 = vadd.f32 %v2918, 1e-05
          %v2923 = vadd.f32 %v2919, 1e-05
          %v2924 = vrsqrt.pop %v2920
          %v2925 = vrsqrt.pop %v2921
          %v2926 = vrsqrt.pop %v2922
          %v2927 = vrsqrt.pop %v2923
          %v2928 = vmul.f32 %v2900, %v2924
          %v2929 = vmul.f32 %v2901, %v2925
          %v2930 = vmul.f32 %v2902, %v2926
          %v2931 = vmul.f32 %v2903, %v2927
          %v2933 = vlaneseq
          %v2934 = vshrl.u32 %v2933, 7
          %v2935 = vsub.s32 0, %v2934
          %v2936 = vrot.slane %v2886, %v2935
          %v2938 = vmul.f32 %v2928, %v2936
          %v2939 = vmul.f32 %v2929, %v2936
          %v2940 = vmul.f32 %v2930, %v2936
          %v2941 = vmul.f32 %v2931, %v2936
          %v2943 = vlaneseq
          %v2944 = vshrl.u32 %v2943, 7
          %v2945 = vsub.s32 0, %v2944
          %v2946 = vrot.slane %v2887, %v2945
          %v2948 = vadd.f32 %v2938, %v2946
          %v2949 = vadd.f32 %v2939, %v2946
          %v2950 = vadd.f32 %v2940, %v2946
          %v2951 = vadd.f32 %v2941, %v2946
          %2952 = vst [vmem:[%s847] sm:$0xff] %v2948
          %2953 = vst [vmem:[%s847 + $0x8] sm:$0xff] %v2949
          %2954 = vst [vmem:[%s847 + $0x10] sm:$0xff] %v2950
          %2955 = vst [vmem:[%s847 + $0x18] sm:$0xff] %v2951
        $region124: #{tpu_custom_call.1} parent=83 // pred_fallthru
          _
        %s2956 = sand.u32 %s455, 1
        %s2957 = scalar_lea.sflag [#allocation5], %s2956
        %s2958 = sand.u32 %s455, 1
        %s2959 = smul.addr %s2958, 32
        %s2960 = scalar_lea.vmem [#allocation14], %s2959
        // Predicated region
        $region125: #{tpu_custom_call.1} parent=83 // pred_check
          %p2961 = pneg %p465
        $region126: #{tpu_custom_call.1} parent=83 // pred_check_branch
          %2963 = sbr.rel (%p2961) target = $region128
        $region127: #{tpu_custom_call.1} parent=83 // pred_region
          %s2964 = smul.u32 2, %s38
          %s2966 = ssub.s32 512, 512
          %2967 = vsyncadd %s2957, %s2966
          %s2968 = smul.addr %s2964, 2
          %s2969 = smul.addr %s2968, 128
          %s2970 = scalar_lea.hbm %s16, %s2969
          %s2971 = sshll.u32 %s2960, 4
          %s2972 = int_to_ptr.vmem [resolvable:$true] %s2971
          %2977 = dma.vmem_to_hbm [thread:$0]  %s2972, 512, %s2970, %s2957, 128, 128, 8
        $region128: #{tpu_custom_call.1} parent=83 // pred_fallthru
          _
      $region84: #{tpu_custom_call.1} parent=5 // pred_fallthru
        _
      %p2978 = scmp.le.s32.totalorder 2, %s29
      // Predicated region
      $region129: #{tpu_custom_call.1} parent=5 // pred_check
        %p2979 = pneg %p2978
      $region130: #{tpu_custom_call.1} parent=5 // pred_check_branch
        %2981 = sbr.rel (%p2979) target = $region132
      $region131: #{tpu_custom_call.1} parent=5 // pred_region
        %s2982 = ssub.s32 %s29, 2
        // Predicated region
        $region133: #{tpu_custom_call.1} parent=131 // pred_check
          %p2983 = pneg %p471
        $region134: #{tpu_custom_call.1} parent=131 // pred_check_branch
          %2985 = sbr.rel (%p2983) target = $region136
        $region135: #{tpu_custom_call.1} parent=131 // pred_region
          %s2986 = sand.u32 %s456, 1
          %s2987 = scalar_lea.sflag [#allocation5], %s2986
          %s2988 = sand.u32 %s456, 1
          %s2989 = smul.addr %s2988, 32
          %s2990 = scalar_lea.vmem [#allocation14], %s2989
          %2991 = dma.done %s2987, 512
        $region136: #{tpu_custom_call.1} parent=131 // pred_fallthru
          _
      $region132: #{tpu_custom_call.1} parent=5 // pred_fallthru
        _
    $region6: #{tpu_custom_call.1} parent=1 // loop_footer
      %s33 = sadd.s32 1, %s29
    $region7: #{tpu_custom_call.1} parent=1 // loop_footer_branch
      %28 = sbr.rel target = $region3
    $region8: #{tpu_custom_call.1} parent=1 // loop_exit
      _
    %2992 = vsyncpa [#allocation4], 1
    %s2993 = scalar_lea.sflag [#allocation4], 1
    %2994 = vsyncpa %s2993, 1
    %2995 = vsyncpa [#allocation7], 1
    %2996 = vsyncpa [#allocation5], 1
    %s2997 = scalar_lea.sflag [#allocation5], 1
    %2998 = vsyncpa %s2997, 1

</llo_original>
